<compile_context>
chip_gen: v6e
topology: v6e:2x2x1
jax: 0.10.0
libtpu: 0.0.40
codegen_flags: <defaults>
</compile_context>

<pallas_src>
import functools
import math

import numpy as np
import jax
import jax.numpy as jnp
from jax import lax
from jax.experimental import pallas as pl
from jax.experimental.pallas import tpu as pltpu

LN_EPS = 1e-5  # torch.nn.LayerNorm default eps


# ----------------------------------------------------------------------------
# Generation-aware VMEM budget + single-buffer-weights capability probe
# ----------------------------------------------------------------------------
def _compute_vmem_limit():
    """~75% of physical VMEM: ~96 MiB on v5e/v6e (128 MiB), ~48 MiB on v7x."""
    try:
        cap = int(pltpu.get_tpu_info().vmem_capacity_bytes)
    except Exception:
        cap = 64 * 1024 * 1024
    return max(32 * 1024 * 1024, min((cap * 3) // 4, 112 * 1024 * 1024))


_VMEM_LIMIT = _compute_vmem_limit()


def _probe_weight_pipeline():
    """Return pl.Buffered(1) if single-buffered constant blocks compile+run."""
    try:
        mode = pl.Buffered(1)

        def _k(x_ref, o_ref):
            o_ref[...] = x_ref[...] + 1.0

        y = pl.pallas_call(
            _k,
            out_shape=jax.ShapeDtypeStruct((8, 128), jnp.float32),
            grid=(1,),
            in_specs=[pl.BlockSpec((8, 128), lambda i: (0, 0),
                                   pipeline_mode=mode)],
            out_specs=pl.BlockSpec((8, 128), lambda i: (0, 0)),
        )(jnp.zeros((8, 128), jnp.float32))
        jax.block_until_ready(y)
        return mode
    except Exception:
        return None


_WEIGHT_PIPELINE = _probe_weight_pipeline()


def _const_spec(shape):
    """BlockSpec for a weight that is identical for every grid step."""
    zeros = (0,) * len(shape)
    index_map = lambda i: zeros
    if _WEIGHT_PIPELINE is not None:
        # Single-buffer: the block index never changes, so double-buffering
        # only wastes VMEM (critical inside v7x's 64 MiB/TC budget).
        return pl.BlockSpec(shape, index_map, pipeline_mode=_WEIGHT_PIPELINE)
    return pl.BlockSpec(shape, index_map)


def _largest_divisor_leq(n, cap):
    best = 1
    for c in range(1, min(n, cap) + 1):
        if n % c == 0:
            best = c
    return best


def _pick_block_batch(B, N, D, Dh, max_bt=8):
    """Images per grid step, sized so weights + activations fit the VMEM budget."""
    weight_bytes = 2 * (4 * D * D + 2 * D * Dh)          # bf16 block weights
    if _WEIGHT_PIPELINE is None:
        weight_bytes *= 2                                 # double-buffered
    # Coarse per-image activation footprint (f32 residual + intermediates).
    per_img = 4 * N * (10 * D + 3 * Dh) + 16 * N * N
    budget = int(0.7 * _VMEM_LIMIT) - weight_bytes
    cap = max(1, min(max_bt, budget // max(per_img, 1)))
    return _largest_divisor_leq(B, cap)


# ----------------------------------------------------------------------------
# In-kernel helpers
# ----------------------------------------------------------------------------
def _ln(x, g, b):
    """LayerNorm in f32 (biased variance, matching torch)."""
    m = jnp.mean(x, axis=-1, keepdims=True)
    v = jnp.mean((x - m) ** 2, axis=-1, keepdims=True)
    return (x - m) * lax.rsqrt(v + LN_EPS) * g + b


def _gelu_tanh(x):
    # TODO(synk): torch nn.GELU defaults to exact erf; the tanh form keeps the
    # transcendental on the (otherwise idle) EUP slot. |err| ~ 3e-4.
    c = math.sqrt(2.0 / math.pi)
    return 0.5 * x * (1.0 + jnp.tanh(c * (x + 0.044715 * x * x * x)))


# ----------------------------------------------------------------------------
# Pallas kernels
# ----------------------------------------------------------------------------
def _patch_embed_kernel(x_ref, w_ref, b_ref, pos_ref, o_ref):
    """Patch embedding (Conv2d k=p,s=p == per-patch linear) + pos add, Bt images."""
    Bt, N, Cpp = x_ref.shape
    De = w_ref.shape[1]
    x = x_ref[...].reshape(Bt * N, Cpp).astype(jnp.bfloat16)
    y = jnp.dot(x, w_ref[...], preferred_element_type=jnp.float32) + b_ref[...]
    o_ref[...] = (y.reshape(Bt, N, De) + pos_ref[...][None]).astype(o_ref.dtype)


def patch_embed_pallas(patches, w, b, pos):
    """patches: (B, N, C*p*p) f32, w: (C*p*p, De) bf16, b: (1, De), pos: (N, De)."""
    B, N, Cpp = patches.shape
    De = w.shape[1]
    Bt = _largest_divisor_leq(B, 8)
    return pl.pallas_call(
        _patch_embed_kernel,
        out_shape=jax.ShapeDtypeStruct((B, N, De), jnp.float32),
        grid=(B // Bt,),
        in_specs=[pl.BlockSpec((Bt, N, Cpp), lambda i: (i, 0, 0)),
                  _const_spec((Cpp, De)),
                  _const_spec((1, De)),
                  _const_spec((N, De))],
        out_specs=pl.BlockSpec((Bt, N, De), lambda i: (i, 0, 0)),
        compiler_params=pltpu.CompilerParams(
            dimension_semantics=("parallel",),
            vmem_limit_bytes=_VMEM_LIMIT),
    )(patches, w, b, pos)


def _ln_linear_kernel(x_ref, g_ref, bln_ref, w_ref, b_ref, o_ref):
    """Fused LayerNorm (f32 stats) + linear (bf16 MXU, f32 accumulate + bias)."""
    h = _ln(x_ref[...], g_ref[...], bln_ref[...]).astype(jnp.bfloat16)
    y = jnp.dot(h, w_ref[...], preferred_element_type=jnp.float32)
    o_ref[...] = (y + b_ref[...]).astype(o_ref.dtype)


def ln_linear_pallas(x2d, gamma, beta, w, b, block_m=512):
    """y = LayerNorm(x2d) @ w + b.  x2d: (M, K), w: (K, N) bf16, b: (1, N).

    M-row tiled with a "parallel" grid; keep M a multiple of 8 (edge tiles with
    padded rows are row-wise harmless, their writes are dropped)."""
    M, K = x2d.shape
    N = w.shape[1]
    tm = M if M <= block_m else block_m
    grid_m = pl.cdiv(M, tm)
    return pl.pallas_call(
        _ln_linear_kernel,
        out_shape=jax.ShapeDtypeStruct((M, N), x2d.dtype),
        grid=(grid_m,),
        in_specs=[pl.BlockSpec((tm, K), lambda i: (i, 0)),
                  _const_spec((1, K)),
                  _const_spec((1, K)),
                  _const_spec((K, N)),
                  _const_spec((1, N))],
        out_specs=pl.BlockSpec((tm, N), lambda i: (i, 0)),
        compiler_params=pltpu.CompilerParams(
            dimension_semantics=("parallel",),
            vmem_limit_bytes=_VMEM_LIMIT),
    )(x2d, gamma, beta, w, b)


def _vit_block_kernel(num_heads, x_ref, ln1g, ln1b, wqkv, bqkv, projw, projb,
                      ln2g, ln2b, fc1w, fc1b, fc2w, fc2b, o_ref):
    """One pre-norm ViT block for a block of Bt images (eval mode, dropout == id).

    QKV and the output projection are single wide bf16 matmuls over Bt*N rows;
    per-head scores/context use image-batched (leading batch dim) einsums and
    are lane-concatenated back to (Bt*N, D) before the projection.
    """
    Bt, N, D = x_ref.shape
    H = num_heads
    hd = D // H

    x = x_ref[...]                                   # (Bt, N, D) f32 residual
    xf = x.reshape(Bt * N, D)

    # --- attention branch (pre-norm) ---
    h16 = _ln(xf, ln1g[...], ln1b[...]).astype(jnp.bfloat16)
    qkv = jnp.dot(h16, wqkv[...], preferred_element_type=jnp.float32) + bqkv[...]
    # Q columns already carry the 1/sqrt(hd) softmax scale (folded at prep time).
    q = qkv[:, 0:D].astype(jnp.bfloat16).reshape(Bt, N, D)
    k = qkv[:, D:2 * D].astype(jnp.bfloat16).reshape(Bt, N, D)
    v = qkv[:, 2 * D:3 * D].astype(jnp.bfloat16).reshape(Bt, N, D)

    ctx_heads = []
    for h in range(H):                               # static unroll over heads
        lo, hi = h * hd, (h + 1) * hd
        qh, kh, vh = q[:, :, lo:hi], k[:, :, lo:hi], v[:, :, lo:hi]
        s = jnp.einsum('bqd,bkd->bqk', qh, kh,
                       preferred_element_type=jnp.float32)       # (Bt, N, N)
        s = s - jnp.max(s, axis=-1, keepdims=True)
        p = jnp.exp(s)
        p = p * pl.reciprocal(jnp.sum(p, axis=-1, keepdims=True), approx=True)
        ctx_heads.append(
            jnp.einsum('bqk,bkd->bqd', p.astype(jnp.bfloat16), vh,
                       preferred_element_type=jnp.float32).astype(jnp.bfloat16))
    ctx16 = jnp.concatenate(ctx_heads, axis=-1).reshape(Bt * N, D)   # (Bt*N, D)
    attn = jnp.dot(ctx16, projw[...], preferred_element_type=jnp.float32) + projb[...]
    xf = xf + attn                                   # dropout -> identity (eval)

    # --- MLP branch (pre-norm) ---
    # TODO(synk): for ViT-Large-class dims on v7x, tile the hidden dim Dh
    # (extra grid axis over ~1024-wide chunks) instead of holding fc1/fc2 whole.
    h2 = _ln(xf, ln2g[...], ln2b[...]).astype(jnp.bfloat16)
    h2 = jnp.dot(h2, fc1w[...], preferred_element_type=jnp.float32) + fc1b[...]
    h2 = _gelu_tanh(h2)                              # f32 elementwise, tanh on EUP
    h2 = jnp.dot(h2.astype(jnp.bfloat16), fc2w[...],
                 preferred_element_type=jnp.float32) + fc2b[...]
    o_ref[...] = (xf + h2).reshape(Bt, N, D).astype(o_ref.dtype)


def vit_block_pallas(x, bp, num_heads):
    B, N, D = x.shape
    Dh = bp['fc1_w'].shape[1]
    Bt = _pick_block_batch(B, N, D, Dh)
    # TODO(synk): if B/Bt < 2 on v7x, consider CORE_PARALLEL / core_map over a
    # leading size-2 axis so both TensorCores are guaranteed work.
    tok = pl.BlockSpec((Bt, N, D), lambda i: (i, 0, 0))
    kern = functools.partial(_vit_block_kernel, num_heads)
    return pl.pallas_call(
        kern,
        out_shape=jax.ShapeDtypeStruct((B, N, D), x.dtype),
        grid=(B // Bt,),
        in_specs=[tok,
                  _const_spec((1, D)), _const_spec((1, D)),
                  _const_spec((D, 3 * D)), _const_spec((1, 3 * D)),
                  _const_spec((D, D)), _const_spec((1, D)),
                  _const_spec((1, D)), _const_spec((1, D)),
                  _const_spec((D, Dh)), _const_spec((1, Dh)),
                  _const_spec((Dh, D)), _const_spec((1, D))],
        out_specs=tok,
        compiler_params=pltpu.CompilerParams(
            dimension_semantics=("parallel",),
            vmem_limit_bytes=_VMEM_LIMIT),
    )(x, bp['ln1_g'], bp['ln1_b'], bp['wqkv'], bp['bqkv'],
      bp['proj_w'], bp['proj_b'], bp['ln2_g'], bp['ln2_b'],
      bp['fc1_w'], bp['fc1_b'], bp['fc2_w'], bp['fc2_b'])


# ----------------------------------------------------------------------------
# Parameter construction (deterministic, synthetic) + one-time kernel prep
# ----------------------------------------------------------------------------
def get_posembed(embed_dim, grid_size, temperature=10000.0):
    # Same math as MaeEncoder/MaeDecoder.get_posembed (sincos, non-trainable).
    scale = 2.0 * math.pi
    num_pos_feats = embed_dim // 2
    y_embed, x_embed = np.meshgrid(np.arange(grid_size, dtype=np.float32),
                                   np.arange(grid_size, dtype=np.float32),
                                   indexing='ij')
    y_embed = y_embed / (grid_size + 1e-6) * scale
    x_embed = x_embed / (grid_size + 1e-6) * scale
    dim_t = np.arange(num_pos_feats, dtype=np.float32)
    dim_t_ = np.floor(dim_t / 2.0) / num_pos_feats
    dim_t = temperature ** (2.0 * dim_t_)
    pos_x = x_embed[..., None] / dim_t
    pos_y = y_embed[..., None] / dim_t
    pos_x = np.stack((np.sin(pos_x[..., 0::2]), np.cos(pos_x[..., 1::2])),
                     axis=-1).reshape(grid_size, grid_size, -1)
    pos_y = np.stack((np.sin(pos_y[..., 0::2]), np.cos(pos_y[..., 1::2])),
                     axis=-1).reshape(grid_size, grid_size, -1)
    pos = np.concatenate((pos_y, pos_x), axis=-1).reshape(-1, embed_dim)
    return jnp.asarray(pos[None], dtype=jnp.float32)


def xavier_uniform(key, fan_in, fan_out):
    bound = math.sqrt(6.0 / (fan_in + fan_out))
    return jax.random.uniform(key, (fan_in, fan_out), jnp.float32, -bound, bound)


def init_block_params(key, dim, mlp_ratio):
    hidden = int(dim * mlp_ratio)
    k = jax.random.split(key, 4)
    return dict(
        ln1_g=jnp.ones((dim,), jnp.float32), ln1_b=jnp.zeros((dim,), jnp.float32),
        qkv_w=xavier_uniform(k[0], dim, 3 * dim),        # columns ordered [q|k|v]
        qkv_b=jnp.zeros((3 * dim,), jnp.float32),
        proj_w=xavier_uniform(k[1], dim, dim),
        proj_b=jnp.zeros((dim,), jnp.float32),
        ln2_g=jnp.ones((dim,), jnp.float32), ln2_b=jnp.zeros((dim,), jnp.float32),
        fc1_w=xavier_uniform(k[2], dim, hidden),
        fc1_b=jnp.zeros((hidden,), jnp.float32),
        fc2_w=xavier_uniform(k[3], hidden, dim),
        fc2_b=jnp.zeros((dim,), jnp.float32),
    )


def init_params(key, cfg):
    p = cfg['patch_size']
    C = cfg['in_chans']
    De = cfg['patch_embed_dim']
    Dd = cfg['de_emb_dim']
    N = (cfg['img_size'] // p) ** 2
    keys = jax.random.split(key, 4 + cfg['en_depth'] + cfg['de_depth'])
    params = {}
    # PatchEmbed Conv2d(k=p, s=p): weight (De, C, p, p) flattened as (C*p*p, De).
    params['patch_w'] = xavier_uniform(keys[0], C * p * p, De)
    params['patch_b'] = jnp.zeros((De,), jnp.float32)
    params['enc_pos'] = get_posembed(De, int(math.sqrt(N)))
    params['enc_blocks'] = [init_block_params(keys[1 + i], De, cfg['mlp_ratio'])
                            for i in range(cfg['en_depth'])]
    params['enc_ln_g'] = jnp.ones((De,), jnp.float32)
    params['enc_ln_b'] = jnp.zeros((De,), jnp.float32)
    o = 1 + cfg['en_depth']
    params['dec_embed_w'] = xavier_uniform(keys[o], De, Dd)
    params['dec_embed_b'] = jnp.zeros((Dd,), jnp.float32)
    params['mask_token'] = 0.02 * jax.random.normal(keys[o + 1], (1, 1, Dd), jnp.float32)
    params['dec_pos'] = get_posembed(Dd, int(math.sqrt(N)))
    params['dec_blocks'] = [init_block_params(keys[o + 2 + i], Dd, cfg['mlp_ratio'])
                            for i in range(cfg['de_depth'])]
    params['dec_ln_g'] = jnp.ones((Dd,), jnp.float32)
    params['dec_ln_b'] = jnp.zeros((Dd,), jnp.float32)
    params['dec_pred_w'] = xavier_uniform(keys[o + 2 + cfg['de_depth']], Dd, cfg['pred_dim'])
    params['dec_pred_b'] = jnp.zeros((cfg['pred_dim'],), jnp.float32)
    return params


def prepare_block_params(bp, num_heads):
    """One-time (outside jit): fuse QKV, fold softmax scale, cast weights to bf16."""
    D = bp['ln1_g'].shape[0]
    Dh = bp['fc1_w'].shape[1]
    hd = D // num_heads
    scale = 1.0 / math.sqrt(hd)
    wqkv = jnp.concatenate([bp['qkv_w'][:, :D] * scale, bp['qkv_w'][:, D:]], axis=1)
    bqkv = jnp.concatenate([bp['qkv_b'][:D] * scale, bp['qkv_b'][D:]], axis=0)
    return dict(
        ln1_g=bp['ln1_g'].reshape(1, D), ln1_b=bp['ln1_b'].reshape(1, D),
        wqkv=wqkv.astype(jnp.bfloat16), bqkv=bqkv.reshape(1, 3 * D),
        proj_w=bp['proj_w'].astype(jnp.bfloat16), proj_b=bp['proj_b'].reshape(1, D),
        ln2_g=bp['ln2_g'].reshape(1, D), ln2_b=bp['ln2_b'].reshape(1, D),
        fc1_w=bp['fc1_w'].astype(jnp.bfloat16), fc1_b=bp['fc1_b'].reshape(1, Dh),
        fc2_w=bp['fc2_w'].astype(jnp.bfloat16), fc2_b=bp['fc2_b'].reshape(1, D),
    )


def prepare_params(raw, cfg):
    """Call ONCE outside jit: all weight casts / reshapes / padding happen here."""
    De, Dd = cfg['patch_embed_dim'], cfg['de_emb_dim']
    pred = cfg['pred_dim']
    pred_pad = max(128, ((pred + 127) // 128) * 128)   # lane-dense final store
    pw, pb = raw['dec_pred_w'], raw['dec_pred_b']
    if pred_pad != pred:
        pw = jnp.pad(pw, ((0, 0), (0, pred_pad - pred)))
        pb = jnp.pad(pb, (0, pred_pad - pred))
    return dict(
        patch_w=raw['patch_w'].astype(jnp.bfloat16),
        patch_b=raw['patch_b'].reshape(1, De),
        enc_pos=raw['enc_pos'][0],                     # (N, De) f32
        enc_blocks=[prepare_block_params(b, cfg['en_heads']) for b in raw['enc_blocks']],
        enc_ln_g=raw['enc_ln_g'].reshape(1, De),
        enc_ln_b=raw['enc_ln_b'].reshape(1, De),
        dec_embed_w=raw['dec_embed_w'].astype(jnp.bfloat16),
        dec_embed_b=raw['dec_embed_b'].reshape(1, Dd),
        mask_token=raw['mask_token'],
        dec_pos=raw['dec_pos'],                        # (1, N, Dd) f32
        dec_blocks=[prepare_block_params(b, cfg['de_heads']) for b in raw['dec_blocks']],
        dec_ln_g=raw['dec_ln_g'].reshape(1, Dd),
        dec_ln_b=raw['dec_ln_b'].reshape(1, Dd),
        dec_pred_w=pw.astype(jnp.bfloat16),
        dec_pred_b=pb.reshape(1, pred_pad),
    )


# ----------------------------------------------------------------------------
# Forward pass (ViTforMaskedAutoEncoder.forward, eval mode)
# ----------------------------------------------------------------------------
def mae_forward(imgs, params, cfg, mask_key):
    B, C, H, W = imgs.shape
    p = cfg['patch_size']
    h = w = H // p
    N = h * w
    De = cfg['patch_embed_dim']
    Dd = cfg['de_emb_dim']

    # --- encoder: patch embed (Conv2d k=p,s=p == per-patch linear) + pos add ---
    patches = imgs.reshape(B, C, h, p, w, p).transpose(0, 2, 4, 1, 3, 5) \
                  .reshape(B, N, C * p * p)
    x = patch_embed_pallas(patches, params['patch_w'], params['patch_b'],
                           params['enc_pos'])                          # (B, N, De)

    # --- random masking (plain JAX: tiny argsort/gather, no clean Pallas path) ---
    len_keep = int(N * (1 - cfg['mask_ratio']))
    noise = jax.random.uniform(mask_key, (B, N))
    ids_shuffle = jnp.argsort(noise, axis=1)
    ids_restore = jnp.argsort(ids_shuffle, axis=1)
    ids_keep = ids_shuffle[:, :len_keep]
    x = jnp.take_along_axis(x, ids_keep[..., None], axis=1)
    mask = jnp.ones((B, N), jnp.float32).at[:, :len_keep].set(0.0)
    mask = jnp.take_along_axis(mask, ids_restore, axis=1)

    # --- encoder blocks ---
    for bp in params['enc_blocks']:
        x = vit_block_pallas(x, bp, cfg['en_heads'])

    # --- fused encoder-final LayerNorm + decoder_embed ---
    x = ln_linear_pallas(x.reshape(B * len_keep, De),
                         params['enc_ln_g'], params['enc_ln_b'],
                         params['dec_embed_w'], params['dec_embed_b']
                         ).reshape(B, len_keep, Dd)

    # --- decoder ---
    # NOTE: reference MaeDecoder.forward has no `return` statement; we return
    # the intended prediction x_out.
    mask_tokens = jnp.broadcast_to(params['mask_token'], (B, N - len_keep, Dd))
    x_all = jnp.concatenate([x, mask_tokens], axis=1)
    x_all = jnp.take_along_axis(x_all, ids_restore[..., None], axis=1)
    x_all = x_all + params['dec_pos']
    for bp in params['dec_blocks']:
        x_all = vit_block_pallas(x_all, bp, cfg['de_heads'])

    # --- fused decoder-final LayerNorm + decoder_pred (lane-padded output) ---
    pred = ln_linear_pallas(x_all.reshape(B * N, Dd),
                            params['dec_ln_g'], params['dec_ln_b'],
                            params['dec_pred_w'], params['dec_pred_b'])
    pred = pred[:, :cfg['pred_dim']].reshape(B, N, cfg['pred_dim'])

    return {'x_pred': pred, 'mask': mask}


if __name__ == "__main__":
    cfg = dict(
        img_size=16, patch_size=4, in_chans=3,
        patch_embed_dim=128, en_depth=2, en_heads=4,
        mlp_ratio=4.0, mask_ratio=0.75,
        de_emb_dim=128, de_depth=2, de_heads=4,
    )
    cfg['pred_dim'] = cfg['patch_size'] ** 2 * cfg['in_chans']  # 48

    key = jax.random.PRNGKey(0)
    k_img, k_mask, k_param = jax.random.split(key, 3)

    raw_params = init_params(k_param, cfg)
    params = prepare_params(raw_params, cfg)   # one-time weight prep, outside jit

    imgs = jax.random.normal(k_img, (2, 3, 16, 16), jnp.float32)

    fwd = jax.jit(lambda imgs_, params_, key_: mae_forward(imgs_, params_, cfg, key_))
    out = fwd(imgs, params, k_mask)
    out = jax.block_until_ready(out)

    assert out['x_pred'].shape == (2, 16, 48)
    assert out['mask'].shape == (2, 16)
    assert bool(jnp.all(jnp.isfinite(out['x_pred'])))
    print("KERNEL_OK")
</pallas_src>

<mosaic_0001>
module attributes {stable_mosaic.version = 11 : i64} {
  func.func @_k(%arg0: i32, %arg1: memref<8x128xf32, #tpu.memory_space<vmem>>, %arg2: memref<8x128xf32, #tpu.memory_space<vmem>>) attributes {dimension_semantics = [#tpu.dimension_semantics<arbitrary>], iteration_bounds = array<i64: 1>, scalar_prefetch = 0 : i64, scratch_operands = 0 : i64, tpu.core_type = #tpu.core_type<tc>, window_params = [{pipeline_mode = #tpu.pipeline_mode<synchronous>, transform_indices = @transform_0, window_bounds = array<i64: 8, 128>}, {pipeline_mode = #tpu.pipeline_mode<synchronous>, transform_indices = @transform_1, window_bounds = array<i64: 8, 128>}]} {
    %c0 = arith.constant 0 : index
    %c0_0 = arith.constant 0 : index
    %0 = vector.load %arg1[%c0, %c0_0] : memref<8x128xf32, #tpu.memory_space<vmem>>, vector<8x128xf32>
    %cst = arith.constant 1.000000e+00 : f32
    %1 = vector.broadcast %cst : f32 to vector<8x128xf32>
    %2 = arith.addf %0, %1 : vector<8x128xf32>
    %c0_1 = arith.constant 0 : index
    %c0_2 = arith.constant 0 : index
    %3 = vector.load %arg2[%c0_1, %c0_2] : memref<8x128xf32, #tpu.memory_space<vmem>>, vector<8x128xf32>
    tpu.vector_store %arg2[%c0_1, %c0_2], %2 {strides = array<i32>} : memref<8x128xf32, #tpu.memory_space<vmem>>, vector<8x128xf32>,
    return
  }
  func.func @transform_0(%arg0: i32) -> (i32, i32) {
    %c0_i32 = arith.constant 0 : i32
    %c0_i32_0 = arith.constant 0 : i32
    %c0_i32_1 = arith.constant 0 : i32
    return %c0_i32, %c0_i32_0 : i32, i32
  }
  func.func @transform_1(%arg0: i32) -> (i32, i32) {
    %c0_i32 = arith.constant 0 : i32
    %c0_i32_0 = arith.constant 0 : i32
    %c0_i32_1 = arith.constant 0 : i32
    return %c0_i32, %c0_i32_0 : i32, i32
  }
}

module attributes {stable_mosaic.version = 11 : i64} {
  func.func @_patch_embed_kernel(%arg0: i32, %arg1: memref<2x16x48xf32, #tpu.memory_space<vmem>>, %arg2: memref<48x128xbf16, #tpu.memory_space<vmem>>, %arg3: memref<1x128xf32, #tpu.memory_space<vmem>>, %arg4: memref<16x128xf32, #tpu.memory_space<vmem>>, %arg5: memref<2x16x128xf32, #tpu.memory_space<vmem>>) attributes {dimension_semantics = [#tpu.dimension_semantics<parallel>], iteration_bounds = array<i64: 1>, scalar_prefetch = 0 : i64, scratch_operands = 0 : i64, tpu.core_type = #tpu.core_type<tc>, window_params = [{transform_indices = @transform_0, window_bounds = array<i64: 2, 16, 48>}, {pipeline_mode = #tpu.pipeline_mode<synchronous>, transform_indices = @transform_1, window_bounds = array<i64: 48, 128>}, {pipeline_mode = #tpu.pipeline_mode<synchronous>, transform_indices = @transform_2, window_bounds = array<i64: 1, 128>}, {pipeline_mode = #tpu.pipeline_mode<synchronous>, transform_indices = @transform_3, window_bounds = array<i64: 16, 128>}, {transform_indices = @transform_4, window_bounds = array<i64: 2, 16, 128>}]} {
    %c0 = arith.constant 0 : index
    %c0_0 = arith.constant 0 : index
    %c0_1 = arith.constant 0 : index
    %0 = vector.load %arg1[%c0, %c0_0, %c0_1] : memref<2x16x48xf32, #tpu.memory_space<vmem>>, vector<2x16x48xf32>
    %1 = vector.shape_cast %0 : vector<2x16x48xf32> to vector<32x48xf32>
    %2 = arith.truncf %1 : vector<32x48xf32> to vector<32x48xbf16>
    %c0_2 = arith.constant 0 : index
    %c0_3 = arith.constant 0 : index
    %3 = vector.load %arg2[%c0_2, %c0_3] : memref<48x128xbf16, #tpu.memory_space<vmem>>, vector<48x128xbf16>
    %cst = arith.constant dense<0.000000e+00> : vector<32x128xf32>
    %4 = tpu.matmul %2, %3, %cst {dimension_numbers = #tpu.dot_dimension_numbers<[1], [0], [0], [1], [0, 0, 1, 1], [], []>} : vector<32x48xbf16>, vector<48x128xbf16>, vector<32x128xf32> -> vector<32x128xf32>
    %c0_4 = arith.constant 0 : index
    %c0_5 = arith.constant 0 : index
    %5 = vector.load %arg3[%c0_4, %c0_5] : memref<1x128xf32, #tpu.memory_space<vmem>>, vector<1x128xf32>
    %6 = vector.broadcast %5 : vector<1x128xf32> to vector<32x128xf32>
    %7 = arith.addf %4, %6 : vector<32x128xf32>
    %8 = vector.shape_cast %7 : vector<32x128xf32> to vector<2x16x128xf32>
    %c0_6 = arith.constant 0 : index
    %c0_7 = arith.constant 0 : index
    %9 = vector.load %arg4[%c0_6, %c0_7] : memref<16x128xf32, #tpu.memory_space<vmem>>, vector<16x128xf32>
    %10 = vector.shape_cast %9 : vector<16x128xf32> to vector<1x16x128xf32>
    %11 = vector.broadcast %10 : vector<1x16x128xf32> to vector<2x16x128xf32>
    %12 = arith.addf %8, %11 : vector<2x16x128xf32>
    %c0_8 = arith.constant 0 : index
    %c0_9 = arith.constant 0 : index
    %c0_10 = arith.constant 0 : index
    %13 = vector.load %arg5[%c0_8, %c0_9, %c0_10] : memref<2x16x128xf32, #tpu.memory_space<vmem>>, vector<2x16x128xf32>
    tpu.vector_store %arg5[%c0_8, %c0_9, %c0_10], %12 {strides = array<i32>} : memref<2x16x128xf32, #tpu.memory_space<vmem>>, vector<2x16x128xf32>,
    return
  }
  func.func @transform_0(%arg0: i32) -> (i32, i32, i32) {
    %c0_i32 = arith.constant 0 : i32
    %c0_i32_0 = arith.constant 0 : i32
    %c0_i32_1 = arith.constant 0 : i32
    return %arg0, %c0_i32, %c0_i32_0 : i32, i32, i32
  }
  func.func @transform_1(%arg0: i32) -> (i32, i32) {
    %c0_i32 = arith.constant 0 : i32
    %c0_i32_0 = arith.constant 0 : i32
    %c0_i32_1 = arith.constant 0 : i32
    return %c0_i32, %c0_i32_0 : i32, i32
  }
  func.func @transform_2(%arg0: i32) -> (i32, i32) {
    %c0_i32 = arith.constant 0 : i32
    %c0_i32_0 = arith.constant 0 : i32
    %c0_i32_1 = arith.constant 0 : i32
    return %c0_i32, %c0_i32_0 : i32, i32
  }
  func.func @transform_3(%arg0: i32) -> (i32, i32) {
    %c0_i32 = arith.constant 0 : i32
    %c0_i32_0 = arith.constant 0 : i32
    %c0_i32_1 = arith.constant 0 : i32
    return %c0_i32, %c0_i32_0 : i32, i32
  }
  func.func @transform_4(%arg0: i32) -> (i32, i32, i32) {
    %c0_i32 = arith.constant 0 : i32
    %c0_i32_0 = arith.constant 0 : i32
    %c0_i32_1 = arith.constant 0 : i32
    return %arg0, %c0_i32, %c0_i32_0 : i32, i32, i32
  }
}

module attributes {stable_mosaic.version = 11 : i64} {
  func.func @_ln_linear_kernel(%arg0: i32, %arg1: memref<8x128xf32, #tpu.memory_space<vmem>>, %arg2: memref<1x128xf32, #tpu.memory_space<vmem>>, %arg3: memref<1x128xf32, #tpu.memory_space<vmem>>, %arg4: memref<128x128xbf16, #tpu.memory_space<vmem>>, %arg5: memref<1x128xf32, #tpu.memory_space<vmem>>, %arg6: memref<8x128xf32, #tpu.memory_space<vmem>>) attributes {dimension_semantics = [#tpu.dimension_semantics<parallel>], iteration_bounds = array<i64: 1>, scalar_prefetch = 0 : i64, scratch_operands = 0 : i64, tpu.core_type = #tpu.core_type<tc>, window_params = [{transform_indices = @transform_0, window_bounds = array<i64: 8, 128>}, {pipeline_mode = #tpu.pipeline_mode<synchronous>, transform_indices = @transform_1, window_bounds = array<i64: 1, 128>}, {pipeline_mode = #tpu.pipeline_mode<synchronous>, transform_indices = @transform_2, window_bounds = array<i64: 1, 128>}, {pipeline_mode = #tpu.pipeline_mode<synchronous>, transform_indices = @transform_3, window_bounds = array<i64: 128, 128>}, {pipeline_mode = #tpu.pipeline_mode<synchronous>, transform_indices = @transform_4, window_bounds = array<i64: 1, 128>}, {transform_indices = @transform_5, window_bounds = array<i64: 8, 128>}]} {
    %c0 = arith.constant 0 : index
    %c0_0 = arith.constant 0 : index
    %0 = vector.load %arg1[%c0, %c0_0] : memref<8x128xf32, #tpu.memory_space<vmem>>, vector<8x128xf32>
    %c0_1 = arith.constant 0 : index
    %c0_2 = arith.constant 0 : index
    %1 = vector.load %arg2[%c0_1, %c0_2] : memref<1x128xf32, #tpu.memory_space<vmem>>, vector<1x128xf32>
    %c0_3 = arith.constant 0 : index
    %c0_4 = arith.constant 0 : index
    %2 = vector.load %arg3[%c0_3, %c0_4] : memref<1x128xf32, #tpu.memory_space<vmem>>, vector<1x128xf32>
    %cst = arith.constant dense<0.000000e+00> : vector<8xf32>
    %3 = vector.multi_reduction <add>, %0, %cst [1] : vector<8x128xf32> to vector<8xf32>
    %4 = vector.shape_cast %3 : vector<8xf32> to vector<8x1xf32>
    %cst_5 = arith.constant 1.280000e+02 : f32
    %5 = vector.broadcast %cst_5 : f32 to vector<8x1xf32>
    %6 = arith.divf %4, %5 : vector<8x1xf32>
    %7 = vector.broadcast %6 : vector<8x1xf32> to vector<8x128xf32>
    %8 = arith.subf %0, %7 : vector<8x128xf32>
    %9 = arith.mulf %8, %8 : vector<8x128xf32>
    %cst_6 = arith.constant dense<0.000000e+00> : vector<8xf32>
    %10 = vector.multi_reduction <add>, %9, %cst_6 [1] : vector<8x128xf32> to vector<8xf32>
    %11 = vector.shape_cast %10 : vector<8xf32> to vector<8x1xf32>
    %cst_7 = arith.constant 1.280000e+02 : f32
    %12 = vector.broadcast %cst_7 : f32 to vector<8x1xf32>
    %13 = arith.divf %11, %12 : vector<8x1xf32>
    %14 = vector.broadcast %6 : vector<8x1xf32> to vector<8x128xf32>
    %15 = arith.subf %0, %14 : vector<8x128xf32>
    %cst_8 = arith.constant 9.99999974E-6 : f32
    %16 = vector.broadcast %cst_8 : f32 to vector<8x1xf32>
    %17 = arith.addf %13, %16 : vector<8x1xf32>
    %18 = math.rsqrt %17 : vector<8x1xf32>
    %19 = vector.broadcast %18 : vector<8x1xf32> to vector<8x128xf32>
    %20 = arith.mulf %15, %19 : vector<8x128xf32>
    %21 = vector.broadcast %1 : vector<1x128xf32> to vector<8x128xf32>
    %22 = arith.mulf %20, %21 : vector<8x128xf32>
    %23 = vector.broadcast %2 : vector<1x128xf32> to vector<8x128xf32>
    %24 = arith.addf %22, %23 : vector<8x128xf32>
    %25 = arith.truncf %24 : vector<8x128xf32> to vector<8x128xbf16>
    %c0_9 = arith.constant 0 : index
    %c0_10 = arith.constant 0 : index
    %26 = vector.load %arg4[%c0_9, %c0_10] : memref<128x128xbf16, #tpu.memory_space<vmem>>, vector<128x128xbf16>
    %cst_11 = arith.constant dense<0.000000e+00> : vector<8x128xf32>
    %27 = tpu.matmul %25, %26, %cst_11 {dimension_numbers = #tpu.dot_dimension_numbers<[1], [0], [0], [1], [0, 0, 1, 1], [], []>} : vector<8x128xbf16>, vector<128x128xbf16>, vector<8x128xf32> -> vector<8x128xf32>
    %c0_12 = arith.constant 0 : index
    %c0_13 = arith.constant 0 : index
    %28 = vector.load %arg5[%c0_12, %c0_13] : memref<1x128xf32, #tpu.memory_space<vmem>>, vector<1x128xf32>
    %29 = vector.broadcast %28 : vector<1x128xf32> to vector<8x128xf32>
    %30 = arith.addf %27, %29 : vector<8x128xf32>
    %c0_14 = arith.constant 0 : index
    %c0_15 = arith.constant 0 : index
    %31 = vector.load %arg6[%c0_14, %c0_15] : memref<8x128xf32, #tpu.memory_space<vmem>>, vector<8x128xf32>
    tpu.vector_store %arg6[%c0_14, %c0_15], %30 {strides = array<i32>} : memref<8x128xf32, #tpu.memory_space<vmem>>, vector<8x128xf32>,
    return
  }
  func.func @transform_0(%arg0: i32) -> (i32, i32) {
    %c0_i32 = arith.constant 0 : i32
    %c0_i32_0 = arith.constant 0 : i32
    return %arg0, %c0_i32 : i32, i32
  }
  func.func @transform_1(%arg0: i32) -> (i32, i32) {
    %c0_i32 = arith.constant 0 : i32
    %c0_i32_0 = arith.constant 0 : i32
    %c0_i32_1 = arith.constant 0 : i32
    return %c0_i32, %c0_i32_0 : i32, i32
  }
  func.func @transform_2(%arg0: i32) -> (i32, i32) {
    %c0_i32 = arith.constant 0 : i32
    %c0_i32_0 = arith.constant 0 : i32
    %c0_i32_1 = arith.constant 0 : i32
    return %c0_i32, %c0_i32_0 : i32, i32
  }
  func.func @transform_3(%arg0: i32) -> (i32, i32) {
    %c0_i32 = arith.constant 0 : i32
    %c0_i32_0 = arith.constant 0 : i32
    %c0_i32_1 = arith.constant 0 : i32
    return %c0_i32, %c0_i32_0 : i32, i32
  }
  func.func @transform_4(%arg0: i32) -> (i32, i32) {
    %c0_i32 = arith.constant 0 : i32
    %c0_i32_0 = arith.constant 0 : i32
    %c0_i32_1 = arith.constant 0 : i32
    return %c0_i32, %c0_i32_0 : i32, i32
  }
  func.func @transform_5(%arg0: i32) -> (i32, i32) {
    %c0_i32 = arith.constant 0 : i32
    %c0_i32_0 = arith.constant 0 : i32
    return %arg0, %c0_i32 : i32, i32
  }
}

module attributes {stable_mosaic.version = 11 : i64} {
  func.func @_vit_block_kernel(%arg0: i32, %arg1: memref<2x4x128xf32, #tpu.memory_space<vmem>>, %arg2: memref<1x128xf32, #tpu.memory_space<vmem>>, %arg3: memref<1x128xf32, #tpu.memory_space<vmem>>, %arg4: memref<128x384xbf16, #tpu.memory_space<vmem>>, %arg5: memref<1x384xf32, #tpu.memory_space<vmem>>, %arg6: memref<128x128xbf16, #tpu.memory_space<vmem>>, %arg7: memref<1x128xf32, #tpu.memory_space<vmem>>, %arg8: memref<1x128xf32, #tpu.memory_space<vmem>>, %arg9: memref<1x128xf32, #tpu.memory_space<vmem>>, %arg10: memref<128x512xbf16, #tpu.memory_space<vmem>>, %arg11: memref<1x512xf32, #tpu.memory_space<vmem>>, %arg12: memref<512x128xbf16, #tpu.memory_space<vmem>>, %arg13: memref<1x128xf32, #tpu.memory_space<vmem>>, %arg14: memref<2x4x128xf32, #tpu.memory_space<vmem>>) attributes {dimension_semantics = [#tpu.dimension_semantics<parallel>], iteration_bounds = array<i64: 1>, scalar_prefetch = 0 : i64, scratch_operands = 0 : i64, tpu.core_type = #tpu.core_type<tc>, window_params = [{transform_indices = @transform_0, window_bounds = array<i64: 2, 4, 128>}, {pipeline_mode = #tpu.pipeline_mode<synchronous>, transform_indices = @transform_1, window_bounds = array<i64: 1, 128>}, {pipeline_mode = #tpu.pipeline_mode<synchronous>, transform_indices = @transform_2, window_bounds = array<i64: 1, 128>}, {pipeline_mode = #tpu.pipeline_mode<synchronous>, transform_indices = @transform_3, window_bounds = array<i64: 128, 384>}, {pipeline_mode = #tpu.pipeline_mode<synchronous>, transform_indices = @transform_4, window_bounds = array<i64: 1, 384>}, {pipeline_mode = #tpu.pipeline_mode<synchronous>, transform_indices = @transform_5, window_bounds = array<i64: 128, 128>}, {pipeline_mode = #tpu.pipeline_mode<synchronous>, transform_indices = @transform_6, window_bounds = array<i64: 1, 128>}, {pipeline_mode = #tpu.pipeline_mode<synchronous>, transform_indices = @transform_7, window_bounds = array<i64: 1, 128>}, {pipeline_mode = #tpu.pipeline_mode<synchronous>, transform_indices = @transform_8, window_bounds = array<i64: 1, 128>}, {pipeline_mode = #tpu.pipeline_mode<synchronous>, transform_indices = @transform_9, window_bounds = array<i64: 128, 512>}, {pipeline_mode = #tpu.pipeline_mode<synchronous>, transform_indices = @transform_10, window_bounds = array<i64: 1, 512>}, {pipeline_mode = #tpu.pipeline_mode<synchronous>, transform_indices = @transform_11, window_bounds = array<i64: 512, 128>}, {pipeline_mode = #tpu.pipeline_mode<synchronous>, transform_indices = @transform_12, window_bounds = array<i64: 1, 128>}, {transform_indices = @transform_13, window_bounds = array<i64: 2, 4, 128>}]} {
    %c0 = arith.constant 0 : index
    %c0_0 = arith.constant 0 : index
    %c0_1 = arith.constant 0 : index
    %0 = vector.load %arg1[%c0, %c0_0, %c0_1] : memref<2x4x128xf32, #tpu.memory_space<vmem>>, vector<2x4x128xf32>
    %1 = vector.shape_cast %0 : vector<2x4x128xf32> to vector<8x128xf32>
    %c0_2 = arith.constant 0 : index
    %c0_3 = arith.constant 0 : index
    %2 = vector.load %arg2[%c0_2, %c0_3] : memref<1x128xf32, #tpu.memory_space<vmem>>, vector<1x128xf32>
    %c0_4 = arith.constant 0 : index
    %c0_5 = arith.constant 0 : index
    %3 = vector.load %arg3[%c0_4, %c0_5] : memref<1x128xf32, #tpu.memory_space<vmem>>, vector<1x128xf32>
    %cst = arith.constant dense<0.000000e+00> : vector<8xf32>
    %4 = vector.multi_reduction <add>, %1, %cst [1] : vector<8x128xf32> to vector<8xf32>
    %5 = vector.shape_cast %4 : vector<8xf32> to vector<8x1xf32>
    %cst_6 = arith.constant 1.280000e+02 : f32
    %6 = vector.broadcast %cst_6 : f32 to vector<8x1xf32>
    %7 = arith.divf %5, %6 : vector<8x1xf32>
    %8 = vector.broadcast %7 : vector<8x1xf32> to vector<8x128xf32>
    %9 = arith.subf %1, %8 : vector<8x128xf32>
    %10 = arith.mulf %9, %9 : vector<8x128xf32>
    %cst_7 = arith.constant dense<0.000000e+00> : vector<8xf32>
    %11 = vector.multi_reduction <add>, %10, %cst_7 [1] : vector<8x128xf32> to vector<8xf32>
    %12 = vector.shape_cast %11 : vector<8xf32> to vector<8x1xf32>
    %cst_8 = arith.constant 1.280000e+02 : f32
    %13 = vector.broadcast %cst_8 : f32 to vector<8x1xf32>
    %14 = arith.divf %12, %13 : vector<8x1xf32>
    %15 = vector.broadcast %7 : vector<8x1xf32> to vector<8x128xf32>
    %16 = arith.subf %1, %15 : vector<8x128xf32>
    %cst_9 = arith.constant 9.99999974E-6 : f32
    %17 = vector.broadcast %cst_9 : f32 to vector<8x1xf32>
    %18 = arith.addf %14, %17 : vector<8x1xf32>
    %19 = math.rsqrt %18 : vector<8x1xf32>
    %20 = vector.broadcast %19 : vector<8x1xf32> to vector<8x128xf32>
    %21 = arith.mulf %16, %20 : vector<8x128xf32>
    %22 = vector.broadcast %2 : vector<1x128xf32> to vector<8x128xf32>
    %23 = arith.mulf %21, %22 : vector<8x128xf32>
    %24 = vector.broadcast %3 : vector<1x128xf32> to vector<8x128xf32>
    %25 = arith.addf %23, %24 : vector<8x128xf32>
    %26 = arith.truncf %25 : vector<8x128xf32> to vector<8x128xbf16>
    %c0_10 = arith.constant 0 : index
    %c0_11 = arith.constant 0 : index
    %27 = vector.load %arg4[%c0_10, %c0_11] : memref<128x384xbf16, #tpu.memory_space<vmem>>, vector<128x384xbf16>
    %cst_12 = arith.constant dense<0.000000e+00> : vector<8x384xf32>
    %28 = tpu.matmul %26, %27, %cst_12 {dimension_numbers = #tpu.dot_dimension_numbers<[1], [0], [0], [1], [0, 0, 1, 1], [], []>} : vector<8x128xbf16>, vector<128x384xbf16>, vector<8x384xf32> -> vector<8x384xf32>
    %c0_13 = arith.constant 0 : index
    %c0_14 = arith.constant 0 : index
    %29 = vector.load %arg5[%c0_13, %c0_14] : memref<1x384xf32, #tpu.memory_space<vmem>>, vector<1x384xf32>
    %30 = vector.broadcast %29 : vector<1x384xf32> to vector<8x384xf32>
    %31 = arith.addf %28, %30 : vector<8x384xf32>
    %32 = vector.extract_strided_slice %31 {offsets = [0, 0], sizes = [8, 128], strides = [1, 1]} : vector<8x384xf32> to vector<8x128xf32>
    %33 = arith.truncf %32 : vector<8x128xf32> to vector<8x128xbf16>
    %34 = vector.shape_cast %33 : vector<8x128xbf16> to vector<2x4x128xbf16>
    %35 = vector.extract_strided_slice %31 {offsets = [0, 128], sizes = [8, 128], strides = [1, 1]} : vector<8x384xf32> to vector<8x128xf32>
    %36 = arith.truncf %35 : vector<8x128xf32> to vector<8x128xbf16>
    %37 = vector.shape_cast %36 : vector<8x128xbf16> to vector<2x4x128xbf16>
    %38 = vector.extract_strided_slice %31 {offsets = [0, 256], sizes = [8, 128], strides = [1, 1]} : vector<8x384xf32> to vector<8x128xf32>
    %39 = arith.truncf %38 : vector<8x128xf32> to vector<8x128xbf16>
    %40 = vector.shape_cast %39 : vector<8x128xbf16> to vector<2x4x128xbf16>
    %41 = vector.extract_strided_slice %34 {offsets = [0, 0, 0], sizes = [2, 4, 32], strides = [1, 1, 1]} : vector<2x4x128xbf16> to vector<2x4x32xbf16>
    %42 = vector.extract_strided_slice %37 {offsets = [0, 0, 0], sizes = [2, 4, 32], strides = [1, 1, 1]} : vector<2x4x128xbf16> to vector<2x4x32xbf16>
    %43 = vector.extract_strided_slice %40 {offsets = [0, 0, 0], sizes = [2, 4, 32], strides = [1, 1, 1]} : vector<2x4x128xbf16> to vector<2x4x32xbf16>
    "tpu.trace_start"() <{level = 10 : i32, message = "bqd,bkd->bqk"}> : () -> ()
    %cst_15 = arith.constant dense<0.000000e+00> : vector<2x4x4xf32>
    %44 = tpu.matmul %41, %42, %cst_15 {dimension_numbers = #tpu.dot_dimension_numbers<[2], [2], [1], [1], [0, 0, 0, 1, 1, 1], [0], [0]>} : vector<2x4x32xbf16>, vector<2x4x32xbf16>, vector<2x4x4xf32> -> vector<2x4x4xf32>
    "tpu.trace_stop"() : () -> ()
    %cst_16 = arith.constant dense<0xFF800000> : vector<2x4xf32>
    %45 = vector.multi_reduction <maximumf>, %44, %cst_16 [2] : vector<2x4x4xf32> to vector<2x4xf32>
    %46 = vector.shape_cast %45 : vector<2x4xf32> to vector<2x4x1xf32>
    %47 = vector.broadcast %46 : vector<2x4x1xf32> to vector<2x4x4xf32>
    %48 = arith.subf %44, %47 : vector<2x4x4xf32>
    %49 = math.exp %48 : vector<2x4x4xf32>
    %cst_17 = arith.constant dense<0.000000e+00> : vector<2x4xf32>
    %50 = vector.multi_reduction <add>, %49, %cst_17 [2] : vector<2x4x4xf32> to vector<2x4xf32>
    %51 = vector.shape_cast %50 : vector<2x4xf32> to vector<2x4x1xf32>
    %52 = tpu.reciprocal %51 {approx = true} : vector<2x4x1xf32> -> vector<2x4x1xf32>
    %53 = vector.broadcast %52 : vector<2x4x1xf32> to vector<2x4x4xf32>
    %54 = arith.mulf %49, %53 : vector<2x4x4xf32>
    %55 = arith.truncf %54 : vector<2x4x4xf32> to vector<2x4x4xbf16>
    "tpu.trace_start"() <{level = 10 : i32, message = "bqk,bkd->bqd"}> : () -> ()
    %cst_18 = arith.constant dense<0.000000e+00> : vector<2x4x32xf32>
    %56 = tpu.matmul %55, %43, %cst_18 {dimension_numbers = #tpu.dot_dimension_numbers<[2], [1], [1], [2], [0, 0, 0, 1, 1, 2], [0], [0]>} : vector<2x4x4xbf16>, vector<2x4x32xbf16>, vector<2x4x32xf32> -> vector<2x4x32xf32>
    "tpu.trace_stop"() : () -> ()
    %57 = arith.truncf %56 : vector<2x4x32xf32> to vector<2x4x32xbf16>
    %58 = vector.extract_strided_slice %34 {offsets = [0, 0, 32], sizes = [2, 4, 32], strides = [1, 1, 1]} : vector<2x4x128xbf16> to vector<2x4x32xbf16>
    %59 = vector.extract_strided_slice %37 {offsets = [0, 0, 32], sizes = [2, 4, 32], strides = [1, 1, 1]} : vector<2x4x128xbf16> to vector<2x4x32xbf16>
    %60 = vector.extract_strided_slice %40 {offsets = [0, 0, 32], sizes = [2, 4, 32], strides = [1, 1, 1]} : vector<2x4x128xbf16> to vector<2x4x32xbf16>
    "tpu.trace_start"() <{level = 10 : i32, message = "bqd,bkd->bqk"}> : () -> ()
    %cst_19 = arith.constant dense<0.000000e+00> : vector<2x4x4xf32>
    %61 = tpu.matmul %58, %59, %cst_19 {dimension_numbers = #tpu.dot_dimension_numbers<[2], [2], [1], [1], [0, 0, 0, 1, 1, 1], [0], [0]>} : vector<2x4x32xbf16>, vector<2x4x32xbf16>, vector<2x4x4xf32> -> vector<2x4x4xf32>
    "tpu.trace_stop"() : () -> ()
    %cst_20 = arith.constant dense<0xFF800000> : vector<2x4xf32>
    %62 = vector.multi_reduction <maximumf>, %61, %cst_20 [2] : vector<2x4x4xf32> to vector<2x4xf32>
    %63 = vector.shape_cast %62 : vector<2x4xf32> to vector<2x4x1xf32>
    %64 = vector.broadcast %63 : vector<2x4x1xf32> to vector<2x4x4xf32>
    %65 = arith.subf %61, %64 : vector<2x4x4xf32>
    %66 = math.exp %65 : vector<2x4x4xf32>
    %cst_21 = arith.constant dense<0.000000e+00> : vector<2x4xf32>
    %67 = vector.multi_reduction <add>, %66, %cst_21 [2] : vector<2x4x4xf32> to vector<2x4xf32>
    %68 = vector.shape_cast %67 : vector<2x4xf32> to vector<2x4x1xf32>
    %69 = tpu.reciprocal %68 {approx = true} : vector<2x4x1xf32> -> vector<2x4x1xf32>
    %70 = vector.broadcast %69 : vector<2x4x1xf32> to vector<2x4x4xf32>
    %71 = arith.mulf %66, %70 : vector<2x4x4xf32>
    %72 = arith.truncf %71 : vector<2x4x4xf32> to vector<2x4x4xbf16>
    "tpu.trace_start"() <{level = 10 : i32, message = "bqk,bkd->bqd"}> : () -> ()
    %cst_22 = arith.constant dense<0.000000e+00> : vector<2x4x32xf32>
    %73 = tpu.matmul %72, %60, %cst_22 {dimension_numbers = #tpu.dot_dimension_numbers<[2], [1], [1], [2], [0, 0, 0, 1, 1, 2], [0], [0]>} : vector<2x4x4xbf16>, vector<2x4x32xbf16>, vector<2x4x32xf32> -> vector<2x4x32xf32>
    "tpu.trace_stop"() : () -> ()
    %74 = arith.truncf %73 : vector<2x4x32xf32> to vector<2x4x32xbf16>
    %75 = vector.extract_strided_slice %34 {offsets = [0, 0, 64], sizes = [2, 4, 32], strides = [1, 1, 1]} : vector<2x4x128xbf16> to vector<2x4x32xbf16>
    %76 = vector.extract_strided_slice %37 {offsets = [0, 0, 64], sizes = [2, 4, 32], strides = [1, 1, 1]} : vector<2x4x128xbf16> to vector<2x4x32xbf16>
    %77 = vector.extract_strided_slice %40 {offsets = [0, 0, 64], sizes = [2, 4, 32], strides = [1, 1, 1]} : vector<2x4x128xbf16> to vector<2x4x32xbf16>
    "tpu.trace_start"() <{level = 10 : i32, message = "bqd,bkd->bqk"}> : () -> ()
    %cst_23 = arith.constant dense<0.000000e+00> : vector<2x4x4xf32>
    %78 = tpu.matmul %75, %76, %cst_23 {dimension_numbers = #tpu.dot_dimension_numbers<[2], [2], [1], [1], [0, 0, 0, 1, 1, 1], [0], [0]>} : vector<2x4x32xbf16>, vector<2x4x32xbf16>, vector<2x4x4xf32> -> vector<2x4x4xf32>
    "tpu.trace_stop"() : () -> ()
    %cst_24 = arith.constant dense<0xFF800000> : vector<2x4xf32>
    %79 = vector.multi_reduction <maximumf>, %78, %cst_24 [2] : vector<2x4x4xf32> to vector<2x4xf32>
    %80 = vector.shape_cast %79 : vector<2x4xf32> to vector<2x4x1xf32>
    %81 = vector.broadcast %80 : vector<2x4x1xf32> to vector<2x4x4xf32>
    %82 = arith.subf %78, %81 : vector<2x4x4xf32>
    %83 = math.exp %82 : vector<2x4x4xf32>
    %cst_25 = arith.constant dense<0.000000e+00> : vector<2x4xf32>
    %84 = vector.multi_reduction <add>, %83, %cst_25 [2] : vector<2x4x4xf32> to vector<2x4xf32>
    %85 = vector.shape_cast %84 : vector<2x4xf32> to vector<2x4x1xf32>
    %86 = tpu.reciprocal %85 {approx = true} : vector<2x4x1xf32> -> vector<2x4x1xf32>
    %87 = vector.broadcast %86 : vector<2x4x1xf32> to vector<2x4x4xf32>
    %88 = arith.mulf %83, %87 : vector<2x4x4xf32>
    %89 = arith.truncf %88 : vector<2x4x4xf32> to vector<2x4x4xbf16>
    "tpu.trace_start"() <{level = 10 : i32, message = "bqk,bkd->bqd"}> : () -> ()
    %cst_26 = arith.constant dense<0.000000e+00> : vector<2x4x32xf32>
    %90 = tpu.matmul %89, %77, %cst_26 {dimension_numbers = #tpu.dot_dimension_numbers<[2], [1], [1], [2], [0, 0, 0, 1, 1, 2], [0], [0]>} : vector<2x4x4xbf16>, vector<2x4x32xbf16>, vector<2x4x32xf32> -> vector<2x4x32xf32>
    "tpu.trace_stop"() : () -> ()
    %91 = arith.truncf %90 : vector<2x4x32xf32> to vector<2x4x32xbf16>
    %92 = vector.extract_strided_slice %34 {offsets = [0, 0, 96], sizes = [2, 4, 32], strides = [1, 1, 1]} : vector<2x4x128xbf16> to vector<2x4x32xbf16>
    %93 = vector.extract_strided_slice %37 {offsets = [0, 0, 96], sizes = [2, 4, 32], strides = [1, 1, 1]} : vector<2x4x128xbf16> to vector<2x4x32xbf16>
    %94 = vector.extract_strided_slice %40 {offsets = [0, 0, 96], sizes = [2, 4, 32], strides = [1, 1, 1]} : vector<2x4x128xbf16> to vector<2x4x32xbf16>
    "tpu.trace_start"() <{level = 10 : i32, message = "bqd,bkd->bqk"}> : () -> ()
    %cst_27 = arith.constant dense<0.000000e+00> : vector<2x4x4xf32>
    %95 = tpu.matmul %92, %93, %cst_27 {dimension_numbers = #tpu.dot_dimension_numbers<[2], [2], [1], [1], [0, 0, 0, 1, 1, 1], [0], [0]>} : vector<2x4x32xbf16>, vector<2x4x32xbf16>, vector<2x4x4xf32> -> vector<2x4x4xf32>
    "tpu.trace_stop"() : () -> ()
    %cst_28 = arith.constant dense<0xFF800000> : vector<2x4xf32>
    %96 = vector.multi_reduction <maximumf>, %95, %cst_28 [2] : vector<2x4x4xf32> to vector<2x4xf32>
    %97 = vector.shape_cast %96 : vector<2x4xf32> to vector<2x4x1xf32>
    %98 = vector.broadcast %97 : vector<2x4x1xf32> to vector<2x4x4xf32>
    %99 = arith.subf %95, %98 : vector<2x4x4xf32>
    %100 = math.exp %99 : vector<2x4x4xf32>
    %cst_29 = arith.constant dense<0.000000e+00> : vector<2x4xf32>
    %101 = vector.multi_reduction <add>, %100, %cst_29 [2] : vector<2x4x4xf32> to vector<2x4xf32>
    %102 = vector.shape_cast %101 : vector<2x4xf32> to vector<2x4x1xf32>
    %103 = tpu.reciprocal %102 {approx = true} : vector<2x4x1xf32> -> vector<2x4x1xf32>
    %104 = vector.broadcast %103 : vector<2x4x1xf32> to vector<2x4x4xf32>
    %105 = arith.mulf %100, %104 : vector<2x4x4xf32>
    %106 = arith.truncf %105 : vector<2x4x4xf32> to vector<2x4x4xbf16>
    "tpu.trace_start"() <{level = 10 : i32, message = "bqk,bkd->bqd"}> : () -> ()
    %cst_30 = arith.constant dense<0.000000e+00> : vector<2x4x32xf32>
    %107 = tpu.matmul %106, %94, %cst_30 {dimension_numbers = #tpu.dot_dimension_numbers<[2], [1], [1], [2], [0, 0, 0, 1, 1, 2], [0], [0]>} : vector<2x4x4xbf16>, vector<2x4x32xbf16>, vector<2x4x32xf32> -> vector<2x4x32xf32>
    "tpu.trace_stop"() : () -> ()
    %108 = arith.truncf %107 : vector<2x4x32xf32> to vector<2x4x32xbf16>
    %109 = tpu.concatenate %57, %74, %91, %108 in 2 : vector<2x4x32xbf16>, vector<2x4x32xbf16>, vector<2x4x32xbf16>, vector<2x4x32xbf16> -> vector<2x4x128xbf16>
    %110 = vector.shape_cast %109 : vector<2x4x128xbf16> to vector<8x128xbf16>
    %c0_31 = arith.constant 0 : index
    %c0_32 = arith.constant 0 : index
    %111 = vector.load %arg6[%c0_31, %c0_32] : memref<128x128xbf16, #tpu.memory_space<vmem>>, vector<128x128xbf16>
    %cst_33 = arith.constant dense<0.000000e+00> : vector<8x128xf32>
    %112 = tpu.matmul %110, %111, %cst_33 {dimension_numbers = #tpu.dot_dimension_numbers<[1], [0], [0], [1], [0, 0, 1, 1], [], []>} : vector<8x128xbf16>, vector<128x128xbf16>, vector<8x128xf32> -> vector<8x128xf32>
    %c0_34 = arith.constant 0 : index
    %c0_35 = arith.constant 0 : index
    %113 = vector.load %arg7[%c0_34, %c0_35] : memref<1x128xf32, #tpu.memory_space<vmem>>, vector<1x128xf32>
    %114 = vector.broadcast %113 : vector<1x128xf32> to vector<8x128xf32>
    %115 = arith.addf %112, %114 : vector<8x128xf32>
    %116 = arith.addf %1, %115 : vector<8x128xf32>
    %c0_36 = arith.constant 0 : index
    %c0_37 = arith.constant 0 : index
    %117 = vector.load %arg8[%c0_36, %c0_37] : memref<1x128xf32, #tpu.memory_space<vmem>>, vector<1x128xf32>
    %c0_38 = arith.constant 0 : index
    %c0_39 = arith.constant 0 : index
    %118 = vector.load %arg9[%c0_38, %c0_39] : memref<1x128xf32, #tpu.memory_space<vmem>>, vector<1x128xf32>
    %cst_40 = arith.constant dense<0.000000e+00> : vector<8xf32>
    %119 = vector.multi_reduction <add>, %116, %cst_40 [1] : vector<8x128xf32> to vector<8xf32>
    %120 = vector.shape_cast %119 : vector<8xf32> to vector<8x1xf32>
    %cst_41 = arith.constant 1.280000e+02 : f32
    %121 = vector.broadcast %cst_41 : f32 to vector<8x1xf32>
    %122 = arith.divf %120, %121 : vector<8x1xf32>
    %123 = vector.broadcast %122 : vector<8x1xf32> to vector<8x128xf32>
    %124 = arith.subf %116, %123 : vector<8x128xf32>
    %125 = arith.mulf %124, %124 : vector<8x128xf32>
    %cst_42 = arith.constant dense<0.000000e+00> : vector<8xf32>
    %126 = vector.multi_reduction <add>, %125, %cst_42 [1] : vector<8x128xf32> to vector<8xf32>
    %127 = vector.shape_cast %126 : vector<8xf32> to vector<8x1xf32>
    %cst_43 = arith.constant 1.280000e+02 : f32
    %128 = vector.broadcast %cst_43 : f32 to vector<8x1xf32>
    %129 = arith.divf %127, %128 : vector<8x1xf32>
    %130 = vector.broadcast %122 : vector<8x1xf32> to vector<8x128xf32>
    %131 = arith.subf %116, %130 : vector<8x128xf32>
    %cst_44 = arith.constant 9.99999974E-6 : f32
    %132 = vector.broadcast %cst_44 : f32 to vector<8x1xf32>
    %133 = arith.addf %129, %132 : vector<8x1xf32>
    %134 = math.rsqrt %133 : vector<8x1xf32>
    %135 = vector.broadcast %134 : vector<8x1xf32> to vector<8x128xf32>
    %136 = arith.mulf %131, %135 : vector<8x128xf32>
    %137 = vector.broadcast %117 : vector<1x128xf32> to vector<8x128xf32>
    %138 = arith.mulf %136, %137 : vector<8x128xf32>
    %139 = vector.broadcast %118 : vector<1x128xf32> to vector<8x128xf32>
    %140 = arith.addf %138, %139 : vector<8x128xf32>
    %141 = arith.truncf %140 : vector<8x128xf32> to vector<8x128xbf16>
    %c0_45 = arith.constant 0 : index
    %c0_46 = arith.constant 0 : index
    %142 = vector.load %arg10[%c0_45, %c0_46] : memref<128x512xbf16, #tpu.memory_space<vmem>>, vector<128x512xbf16>
    %cst_47 = arith.constant dense<0.000000e+00> : vector<8x512xf32>
    %143 = tpu.matmul %141, %142, %cst_47 {dimension_numbers = #tpu.dot_dimension_numbers<[1], [0], [0], [1], [0, 0, 1, 1], [], []>} : vector<8x128xbf16>, vector<128x512xbf16>, vector<8x512xf32> -> vector<8x512xf32>
    %c0_48 = arith.constant 0 : index
    %c0_49 = arith.constant 0 : index
    %144 = vector.load %arg11[%c0_48, %c0_49] : memref<1x512xf32, #tpu.memory_space<vmem>>, vector<1x512xf32>
    %145 = vector.broadcast %144 : vector<1x512xf32> to vector<8x512xf32>
    %146 = arith.addf %143, %145 : vector<8x512xf32>
    %cst_50 = arith.constant 5.000000e-01 : f32
    %147 = vector.broadcast %cst_50 : f32 to vector<8x512xf32>
    %148 = arith.mulf %147, %146 : vector<8x512xf32>
    %cst_51 = arith.constant 4.471500e-02 : f32
    %149 = vector.broadcast %cst_51 : f32 to vector<8x512xf32>
    %150 = arith.mulf %149, %146 : vector<8x512xf32>
    %151 = arith.mulf %150, %146 : vector<8x512xf32>
    %152 = arith.mulf %151, %146 : vector<8x512xf32>
    %153 = arith.addf %146, %152 : vector<8x512xf32>
    %cst_52 = arith.constant 0.797884583 : f32
    %154 = vector.broadcast %cst_52 : f32 to vector<8x512xf32>
    %155 = arith.mulf %154, %153 : vector<8x512xf32>
    %156 = math.tanh %155 : vector<8x512xf32>
    %cst_53 = arith.constant 1.000000e+00 : f32
    %157 = vector.broadcast %cst_53 : f32 to vector<8x512xf32>
    %158 = arith.addf %157, %156 : vector<8x512xf32>
    %159 = arith.mulf %148, %158 : vector<8x512xf32>
    %160 = arith.truncf %159 : vector<8x512xf32> to vector<8x512xbf16>
    %c0_54 = arith.constant 0 : index
    %c0_55 = arith.constant 0 : index
    %161 = vector.load %arg12[%c0_54, %c0_55] : memref<512x128xbf16, #tpu.memory_space<vmem>>, vector<512x128xbf16>
    %cst_56 = arith.constant dense<0.000000e+00> : vector<8x128xf32>
    %162 = tpu.matmul %160, %161, %cst_56 {dimension_numbers = #tpu.dot_dimension_numbers<[1], [0], [0], [1], [0, 0, 1, 1], [], []>} : vector<8x512xbf16>, vector<512x128xbf16>, vector<8x128xf32> -> vector<8x128xf32>
    %c0_57 = arith.constant 0 : index
    %c0_58 = arith.constant 0 : index
    %163 = vector.load %arg13[%c0_57, %c0_58] : memref<1x128xf32, #tpu.memory_space<vmem>>, vector<1x128xf32>
    %164 = vector.broadcast %163 : vector<1x128xf32> to vector<8x128xf32>
    %165 = arith.addf %162, %164 : vector<8x128xf32>
    %166 = arith.addf %116, %165 : vector<8x128xf32>
    %167 = vector.shape_cast %166 : vector<8x128xf32> to vector<2x4x128xf32>
    %c0_59 = arith.constant 0 : index
    %c0_60 = arith.constant 0 : index
    %c0_61 = arith.constant 0 : index
    %168 = vector.load %arg14[%c0_59, %c0_60, %c0_61] : memref<2x4x128xf32, #tpu.memory_space<vmem>>, vector<2x4x128xf32>
    tpu.vector_store %arg14[%c0_59, %c0_60, %c0_61], %167 {strides = array<i32>} : memref<2x4x128xf32, #tpu.memory_space<vmem>>, vector<2x4x128xf32>,
    return
  }
  func.func @transform_0(%arg0: i32) -> (i32, i32, i32) {
    %c0_i32 = arith.constant 0 : i32
    %c0_i32_0 = arith.constant 0 : i32
    %c0_i32_1 = arith.constant 0 : i32
    return %arg0, %c0_i32, %c0_i32_0 : i32, i32, i32
  }
  func.func @transform_1(%arg0: i32) -> (i32, i32) {
    %c0_i32 = arith.constant 0 : i32
    %c0_i32_0 = arith.constant 0 : i32
    %c0_i32_1 = arith.constant 0 : i32
    return %c0_i32, %c0_i32_0 : i32, i32
  }
  func.func @transform_2(%arg0: i32) -> (i32, i32) {
    %c0_i32 = arith.constant 0 : i32
    %c0_i32_0 = arith.constant 0 : i32
    %c0_i32_1 = arith.constant 0 : i32
    return %c0_i32, %c0_i32_0 : i32, i32
  }
  func.func @transform_3(%arg0: i32) -> (i32, i32) {
    %c0_i32 = arith.constant 0 : i32
    %c0_i32_0 = arith.constant 0 : i32
    %c0_i32_1 = arith.constant 0 : i32
    return %c0_i32, %c0_i32_0 : i32, i32
  }
  func.func @transform_4(%arg0: i32) -> (i32, i32) {
    %c0_i32 = arith.constant 0 : i32
    %c0_i32_0 = arith.constant 0 : i32
    %c0_i32_1 = arith.constant 0 : i32
    return %c0_i32, %c0_i32_0 : i32, i32
  }
  func.func @transform_5(%arg0: i32) -> (i32, i32) {
    %c0_i32 = arith.constant 0 : i32
    %c0_i32_0 = arith.constant 0 : i32
    %c0_i32_1 = arith.constant 0 : i32
    return %c0_i32, %c0_i32_0 : i32, i32
  }
  func.func @transform_6(%arg0: i32) -> (i32, i32) {
    %c0_i32 = arith.constant 0 : i32
    %c0_i32_0 = arith.constant 0 : i32
    %c0_i32_1 = arith.constant 0 : i32
    return %c0_i32, %c0_i32_0 : i32, i32
  }
  func.func @transform_7(%arg0: i32) -> (i32, i32) {
    %c0_i32 = arith.constant 0 : i32
    %c0_i32_0 = arith.constant 0 : i32
    %c0_i32_1 = arith.constant 0 : i32
    return %c0_i32, %c0_i32_0 : i32, i32
  }
  func.func @transform_8(%arg0: i32) -> (i32, i32) {
    %c0_i32 = arith.constant 0 : i32
    %c0_i32_0 = arith.constant 0 : i32
    %c0_i32_1 = arith.constant 0 : i32
    return %c0_i32, %c0_i32_0 : i32, i32
  }
  func.func @transform_9(%arg0: i32) -> (i32, i32) {
    %c0_i32 = arith.constant 0 : i32
    %c0_i32_0 = arith.constant 0 : i32
    %c0_i32_1 = arith.constant 0 : i32
    return %c0_i32, %c0_i32_0 : i32, i32
  }
  func.func @transform_10(%arg0: i32) -> (i32, i32) {
    %c0_i32 = arith.constant 0 : i32
    %c0_i32_0 = arith.constant 0 : i32
    %c0_i32_1 = arith.constant 0 : i32
    return %c0_i32, %c0_i32_0 : i32, i32
  }
  func.func @transform_11(%arg0: i32) -> (i32, i32) {
    %c0_i32 = arith.constant 0 : i32
    %c0_i32_0 = arith.constant 0 : i32
    %c0_i32_1 = arith.constant 0 : i32
    return %c0_i32, %c0_i32_0 : i32, i32
  }
  func.func @transform_12(%arg0: i32) -> (i32, i32) {
    %c0_i32 = arith.constant 0 : i32
    %c0_i32_0 = arith.constant 0 : i32
    %c0_i32_1 = arith.constant 0 : i32
    return %c0_i32, %c0_i32_0 : i32, i32
  }
  func.func @transform_13(%arg0: i32) -> (i32, i32, i32) {
    %c0_i32 = arith.constant 0 : i32
    %c0_i32_0 = arith.constant 0 : i32
    %c0_i32_1 = arith.constant 0 : i32
    return %arg0, %c0_i32, %c0_i32_0 : i32, i32, i32
  }
}

module attributes {stable_mosaic.version = 11 : i64} {
  func.func @_vit_block_kernel(%arg0: i32, %arg1: memref<2x16x128xf32, #tpu.memory_space<vmem>>, %arg2: memref<1x128xf32, #tpu.memory_space<vmem>>, %arg3: memref<1x128xf32, #tpu.memory_space<vmem>>, %arg4: memref<128x384xbf16, #tpu.memory_space<vmem>>, %arg5: memref<1x384xf32, #tpu.memory_space<vmem>>, %arg6: memref<128x128xbf16, #tpu.memory_space<vmem>>, %arg7: memref<1x128xf32, #tpu.memory_space<vmem>>, %arg8: memref<1x128xf32, #tpu.memory_space<vmem>>, %arg9: memref<1x128xf32, #tpu.memory_space<vmem>>, %arg10: memref<128x512xbf16, #tpu.memory_space<vmem>>, %arg11: memref<1x512xf32, #tpu.memory_space<vmem>>, %arg12: memref<512x128xbf16, #tpu.memory_space<vmem>>, %arg13: memref<1x128xf32, #tpu.memory_space<vmem>>, %arg14: memref<2x16x128xf32, #tpu.memory_space<vmem>>) attributes {dimension_semantics = [#tpu.dimension_semantics<parallel>], iteration_bounds = array<i64: 1>, scalar_prefetch = 0 : i64, scratch_operands = 0 : i64, tpu.core_type = #tpu.core_type<tc>, window_params = [{transform_indices = @transform_0, window_bounds = array<i64: 2, 16, 128>}, {pipeline_mode = #tpu.pipeline_mode<synchronous>, transform_indices = @transform_1, window_bounds = array<i64: 1, 128>}, {pipeline_mode = #tpu.pipeline_mode<synchronous>, transform_indices = @transform_2, window_bounds = array<i64: 1, 128>}, {pipeline_mode = #tpu.pipeline_mode<synchronous>, transform_indices = @transform_3, window_bounds = array<i64: 128, 384>}, {pipeline_mode = #tpu.pipeline_mode<synchronous>, transform_indices = @transform_4, window_bounds = array<i64: 1, 384>}, {pipeline_mode = #tpu.pipeline_mode<synchronous>, transform_indices = @transform_5, window_bounds = array<i64: 128, 128>}, {pipeline_mode = #tpu.pipeline_mode<synchronous>, transform_indices = @transform_6, window_bounds = array<i64: 1, 128>}, {pipeline_mode = #tpu.pipeline_mode<synchronous>, transform_indices = @transform_7, window_bounds = array<i64: 1, 128>}, {pipeline_mode = #tpu.pipeline_mode<synchronous>, transform_indices = @transform_8, window_bounds = array<i64: 1, 128>}, {pipeline_mode = #tpu.pipeline_mode<synchronous>, transform_indices = @transform_9, window_bounds = array<i64: 128, 512>}, {pipeline_mode = #tpu.pipeline_mode<synchronous>, transform_indices = @transform_10, window_bounds = array<i64: 1, 512>}, {pipeline_mode = #tpu.pipeline_mode<synchronous>, transform_indices = @transform_11, window_bounds = array<i64: 512, 128>}, {pipeline_mode = #tpu.pipeline_mode<synchronous>, transform_indices = @transform_12, window_bounds = array<i64: 1, 128>}, {transform_indices = @transform_13, window_bounds = array<i64: 2, 16, 128>}]} {
    %c0 = arith.constant 0 : index
    %c0_0 = arith.constant 0 : index
    %c0_1 = arith.constant 0 : index
    %0 = vector.load %arg1[%c0, %c0_0, %c0_1] : memref<2x16x128xf32, #tpu.memory_space<vmem>>, vector<2x16x128xf32>
    %1 = vector.shape_cast %0 : vector<2x16x128xf32> to vector<32x128xf32>
    %c0_2 = arith.constant 0 : index
    %c0_3 = arith.constant 0 : index
    %2 = vector.load %arg2[%c0_2, %c0_3] : memref<1x128xf32, #tpu.memory_space<vmem>>, vector<1x128xf32>
    %c0_4 = arith.constant 0 : index
    %c0_5 = arith.constant 0 : index
    %3 = vector.load %arg3[%c0_4, %c0_5] : memref<1x128xf32, #tpu.memory_space<vmem>>, vector<1x128xf32>
    %cst = arith.constant dense<0.000000e+00> : vector<32xf32>
    %4 = vector.multi_reduction <add>, %1, %cst [1] : vector<32x128xf32> to vector<32xf32>
    %5 = vector.shape_cast %4 : vector<32xf32> to vector<32x1xf32>
    %cst_6 = arith.constant 1.280000e+02 : f32
    %6 = vector.broadcast %cst_6 : f32 to vector<32x1xf32>
    %7 = arith.divf %5, %6 : vector<32x1xf32>
    %8 = vector.broadcast %7 : vector<32x1xf32> to vector<32x128xf32>
    %9 = arith.subf %1, %8 : vector<32x128xf32>
    %10 = arith.mulf %9, %9 : vector<32x128xf32>
    %cst_7 = arith.constant dense<0.000000e+00> : vector<32xf32>
    %11 = vector.multi_reduction <add>, %10, %cst_7 [1] : vector<32x128xf32> to vector<32xf32>
    %12 = vector.shape_cast %11 : vector<32xf32> to vector<32x1xf32>
    %cst_8 = arith.constant 1.280000e+02 : f32
    %13 = vector.broadcast %cst_8 : f32 to vector<32x1xf32>
    %14 = arith.divf %12, %13 : vector<32x1xf32>
    %15 = vector.broadcast %7 : vector<32x1xf32> to vector<32x128xf32>
    %16 = arith.subf %1, %15 : vector<32x128xf32>
    %cst_9 = arith.constant 9.99999974E-6 : f32
    %17 = vector.broadcast %cst_9 : f32 to vector<32x1xf32>
    %18 = arith.addf %14, %17 : vector<32x1xf32>
    %19 = math.rsqrt %18 : vector<32x1xf32>
    %20 = vector.broadcast %19 : vector<32x1xf32> to vector<32x128xf32>
    %21 = arith.mulf %16, %20 : vector<32x128xf32>
    %22 = vector.broadcast %2 : vector<1x128xf32> to vector<32x128xf32>
    %23 = arith.mulf %21, %22 : vector<32x128xf32>
    %24 = vector.broadcast %3 : vector<1x128xf32> to vector<32x128xf32>
    %25 = arith.addf %23, %24 : vector<32x128xf32>
    %26 = arith.truncf %25 : vector<32x128xf32> to vector<32x128xbf16>
    %c0_10 = arith.constant 0 : index
    %c0_11 = arith.constant 0 : index
    %27 = vector.load %arg4[%c0_10, %c0_11] : memref<128x384xbf16, #tpu.memory_space<vmem>>, vector<128x384xbf16>
    %cst_12 = arith.constant dense<0.000000e+00> : vector<32x384xf32>
    %28 = tpu.matmul %26, %27, %cst_12 {dimension_numbers = #tpu.dot_dimension_numbers<[1], [0], [0], [1], [0, 0, 1, 1], [], []>} : vector<32x128xbf16>, vector<128x384xbf16>, vector<32x384xf32> -> vector<32x384xf32>
    %c0_13 = arith.constant 0 : index
    %c0_14 = arith.constant 0 : index
    %29 = vector.load %arg5[%c0_13, %c0_14] : memref<1x384xf32, #tpu.memory_space<vmem>>, vector<1x384xf32>
    %30 = vector.broadcast %29 : vector<1x384xf32> to vector<32x384xf32>
    %31 = arith.addf %28, %30 : vector<32x384xf32>
    %32 = vector.extract_strided_slice %31 {offsets = [0, 0], sizes = [32, 128], strides = [1, 1]} : vector<32x384xf32> to vector<32x128xf32>
    %33 = arith.truncf %32 : vector<32x128xf32> to vector<32x128xbf16>
    %34 = vector.shape_cast %33 : vector<32x128xbf16> to vector<2x16x128xbf16>
    %35 = vector.extract_strided_slice %31 {offsets = [0, 128], sizes = [32, 128], strides = [1, 1]} : vector<32x384xf32> to vector<32x128xf32>
    %36 = arith.truncf %35 : vector<32x128xf32> to vector<32x128xbf16>
    %37 = vector.shape_cast %36 : vector<32x128xbf16> to vector<2x16x128xbf16>
    %38 = vector.extract_strided_slice %31 {offsets = [0, 256], sizes = [32, 128], strides = [1, 1]} : vector<32x384xf32> to vector<32x128xf32>
    %39 = arith.truncf %38 : vector<32x128xf32> to vector<32x128xbf16>
    %40 = vector.shape_cast %39 : vector<32x128xbf16> to vector<2x16x128xbf16>
    %41 = vector.extract_strided_slice %34 {offsets = [0, 0, 0], sizes = [2, 16, 32], strides = [1, 1, 1]} : vector<2x16x128xbf16> to vector<2x16x32xbf16>
    %42 = vector.extract_strided_slice %37 {offsets = [0, 0, 0], sizes = [2, 16, 32], strides = [1, 1, 1]} : vector<2x16x128xbf16> to vector<2x16x32xbf16>
    %43 = vector.extract_strided_slice %40 {offsets = [0, 0, 0], sizes = [2, 16, 32], strides = [1, 1, 1]} : vector<2x16x128xbf16> to vector<2x16x32xbf16>
    "tpu.trace_start"() <{level = 10 : i32, message = "bqd,bkd->bqk"}> : () -> ()
    %cst_15 = arith.constant dense<0.000000e+00> : vector<2x16x16xf32>
    %44 = tpu.matmul %41, %42, %cst_15 {dimension_numbers = #tpu.dot_dimension_numbers<[2], [2], [1], [1], [0, 0, 0, 1, 1, 1], [0], [0]>} : vector<2x16x32xbf16>, vector<2x16x32xbf16>, vector<2x16x16xf32> -> vector<2x16x16xf32>
    "tpu.trace_stop"() : () -> ()
    %cst_16 = arith.constant dense<0xFF800000> : vector<2x16xf32>
    %45 = vector.multi_reduction <maximumf>, %44, %cst_16 [2] : vector<2x16x16xf32> to vector<2x16xf32>
    %46 = vector.shape_cast %45 : vector<2x16xf32> to vector<2x16x1xf32>
    %47 = vector.broadcast %46 : vector<2x16x1xf32> to vector<2x16x16xf32>
    %48 = arith.subf %44, %47 : vector<2x16x16xf32>
    %49 = math.exp %48 : vector<2x16x16xf32>
    %cst_17 = arith.constant dense<0.000000e+00> : vector<2x16xf32>
    %50 = vector.multi_reduction <add>, %49, %cst_17 [2] : vector<2x16x16xf32> to vector<2x16xf32>
    %51 = vector.shape_cast %50 : vector<2x16xf32> to vector<2x16x1xf32>
    %52 = tpu.reciprocal %51 {approx = true} : vector<2x16x1xf32> -> vector<2x16x1xf32>
    %53 = vector.broadcast %52 : vector<2x16x1xf32> to vector<2x16x16xf32>
    %54 = arith.mulf %49, %53 : vector<2x16x16xf32>
    %55 = arith.truncf %54 : vector<2x16x16xf32> to vector<2x16x16xbf16>
    "tpu.trace_start"() <{level = 10 : i32, message = "bqk,bkd->bqd"}> : () -> ()
    %cst_18 = arith.constant dense<0.000000e+00> : vector<2x16x32xf32>
    %56 = tpu.matmul %55, %43, %cst_18 {dimension_numbers = #tpu.dot_dimension_numbers<[2], [1], [1], [2], [0, 0, 0, 1, 1, 2], [0], [0]>} : vector<2x16x16xbf16>, vector<2x16x32xbf16>, vector<2x16x32xf32> -> vector<2x16x32xf32>
    "tpu.trace_stop"() : () -> ()
    %57 = arith.truncf %56 : vector<2x16x32xf32> to vector<2x16x32xbf16>
    %58 = vector.extract_strided_slice %34 {offsets = [0, 0, 32], sizes = [2, 16, 32], strides = [1, 1, 1]} : vector<2x16x128xbf16> to vector<2x16x32xbf16>
    %59 = vector.extract_strided_slice %37 {offsets = [0, 0, 32], sizes = [2, 16, 32], strides = [1, 1, 1]} : vector<2x16x128xbf16> to vector<2x16x32xbf16>
    %60 = vector.extract_strided_slice %40 {offsets = [0, 0, 32], sizes = [2, 16, 32], strides = [1, 1, 1]} : vector<2x16x128xbf16> to vector<2x16x32xbf16>
    "tpu.trace_start"() <{level = 10 : i32, message = "bqd,bkd->bqk"}> : () -> ()
    %cst_19 = arith.constant dense<0.000000e+00> : vector<2x16x16xf32>
    %61 = tpu.matmul %58, %59, %cst_19 {dimension_numbers = #tpu.dot_dimension_numbers<[2], [2], [1], [1], [0, 0, 0, 1, 1, 1], [0], [0]>} : vector<2x16x32xbf16>, vector<2x16x32xbf16>, vector<2x16x16xf32> -> vector<2x16x16xf32>
    "tpu.trace_stop"() : () -> ()
    %cst_20 = arith.constant dense<0xFF800000> : vector<2x16xf32>
    %62 = vector.multi_reduction <maximumf>, %61, %cst_20 [2] : vector<2x16x16xf32> to vector<2x16xf32>
    %63 = vector.shape_cast %62 : vector<2x16xf32> to vector<2x16x1xf32>
    %64 = vector.broadcast %63 : vector<2x16x1xf32> to vector<2x16x16xf32>
    %65 = arith.subf %61, %64 : vector<2x16x16xf32>
    %66 = math.exp %65 : vector<2x16x16xf32>
    %cst_21 = arith.constant dense<0.000000e+00> : vector<2x16xf32>
    %67 = vector.multi_reduction <add>, %66, %cst_21 [2] : vector<2x16x16xf32> to vector<2x16xf32>
    %68 = vector.shape_cast %67 : vector<2x16xf32> to vector<2x16x1xf32>
    %69 = tpu.reciprocal %68 {approx = true} : vector<2x16x1xf32> -> vector<2x16x1xf32>
    %70 = vector.broadcast %69 : vector<2x16x1xf32> to vector<2x16x16xf32>
    %71 = arith.mulf %66, %70 : vector<2x16x16xf32>
    %72 = arith.truncf %71 : vector<2x16x16xf32> to vector<2x16x16xbf16>
    "tpu.trace_start"() <{level = 10 : i32, message = "bqk,bkd->bqd"}> : () -> ()
    %cst_22 = arith.constant dense<0.000000e+00> : vector<2x16x32xf32>
    %73 = tpu.matmul %72, %60, %cst_22 {dimension_numbers = #tpu.dot_dimension_numbers<[2], [1], [1], [2], [0, 0, 0, 1, 1, 2], [0], [0]>} : vector<2x16x16xbf16>, vector<2x16x32xbf16>, vector<2x16x32xf32> -> vector<2x16x32xf32>
    "tpu.trace_stop"() : () -> ()
    %74 = arith.truncf %73 : vector<2x16x32xf32> to vector<2x16x32xbf16>
    %75 = vector.extract_strided_slice %34 {offsets = [0, 0, 64], sizes = [2, 16, 32], strides = [1, 1, 1]} : vector<2x16x128xbf16> to vector<2x16x32xbf16>
    %76 = vector.extract_strided_slice %37 {offsets = [0, 0, 64], sizes = [2, 16, 32], strides = [1, 1, 1]} : vector<2x16x128xbf16> to vector<2x16x32xbf16>
    %77 = vector.extract_strided_slice %40 {offsets = [0, 0, 64], sizes = [2, 16, 32], strides = [1, 1, 1]} : vector<2x16x128xbf16> to vector<2x16x32xbf16>
    "tpu.trace_start"() <{level = 10 : i32, message = "bqd,bkd->bqk"}> : () -> ()
    %cst_23 = arith.constant dense<0.000000e+00> : vector<2x16x16xf32>
    %78 = tpu.matmul %75, %76, %cst_23 {dimension_numbers = #tpu.dot_dimension_numbers<[2], [2], [1], [1], [0, 0, 0, 1, 1, 1], [0], [0]>} : vector<2x16x32xbf16>, vector<2x16x32xbf16>, vector<2x16x16xf32> -> vector<2x16x16xf32>
    "tpu.trace_stop"() : () -> ()
    %cst_24 = arith.constant dense<0xFF800000> : vector<2x16xf32>
    %79 = vector.multi_reduction <maximumf>, %78, %cst_24 [2] : vector<2x16x16xf32> to vector<2x16xf32>
    %80 = vector.shape_cast %79 : vector<2x16xf32> to vector<2x16x1xf32>
    %81 = vector.broadcast %80 : vector<2x16x1xf32> to vector<2x16x16xf32>
    %82 = arith.subf %78, %81 : vector<2x16x16xf32>
    %83 = math.exp %82 : vector<2x16x16xf32>
    %cst_25 = arith.constant dense<0.000000e+00> : vector<2x16xf32>
    %84 = vector.multi_reduction <add>, %83, %cst_25 [2] : vector<2x16x16xf32> to vector<2x16xf32>
    %85 = vector.shape_cast %84 : vector<2x16xf32> to vector<2x16x1xf32>
    %86 = tpu.reciprocal %85 {approx = true} : vector<2x16x1xf32> -> vector<2x16x1xf32>
    %87 = vector.broadcast %86 : vector<2x16x1xf32> to vector<2x16x16xf32>
    %88 = arith.mulf %83, %87 : vector<2x16x16xf32>
    %89 = arith.truncf %88 : vector<2x16x16xf32> to vector<2x16x16xbf16>
    "tpu.trace_start"() <{level = 10 : i32, message = "bqk,bkd->bqd"}> : () -> ()
    %cst_26 = arith.constant dense<0.000000e+00> : vector<2x16x32xf32>
    %90 = tpu.matmul %89, %77, %cst_26 {dimension_numbers = #tpu.dot_dimension_numbers<[2], [1], [1], [2], [0, 0, 0, 1, 1, 2], [0], [0]>} : vector<2x16x16xbf16>, vector<2x16x32xbf16>, vector<2x16x32xf32> -> vector<2x16x32xf32>
    "tpu.trace_stop"() : () -> ()
    %91 = arith.truncf %90 : vector<2x16x32xf32> to vector<2x16x32xbf16>
    %92 = vector.extract_strided_slice %34 {offsets = [0, 0, 96], sizes = [2, 16, 32], strides = [1, 1, 1]} : vector<2x16x128xbf16> to vector<2x16x32xbf16>
    %93 = vector.extract_strided_slice %37 {offsets = [0, 0, 96], sizes = [2, 16, 32], strides = [1, 1, 1]} : vector<2x16x128xbf16> to vector<2x16x32xbf16>
    %94 = vector.extract_strided_slice %40 {offsets = [0, 0, 96], sizes = [2, 16, 32], strides = [1, 1, 1]} : vector<2x16x128xbf16> to vector<2x16x32xbf16>
    "tpu.trace_start"() <{level = 10 : i32, message = "bqd,bkd->bqk"}> : () -> ()
    %cst_27 = arith.constant dense<0.000000e+00> : vector<2x16x16xf32>
    %95 = tpu.matmul %92, %93, %cst_27 {dimension_numbers = #tpu.dot_dimension_numbers<[2], [2], [1], [1], [0, 0, 0, 1, 1, 1], [0], [0]>} : vector<2x16x32xbf16>, vector<2x16x32xbf16>, vector<2x16x16xf32> -> vector<2x16x16xf32>
    "tpu.trace_stop"() : () -> ()
    %cst_28 = arith.constant dense<0xFF800000> : vector<2x16xf32>
    %96 = vector.multi_reduction <maximumf>, %95, %cst_28 [2] : vector<2x16x16xf32> to vector<2x16xf32>
    %97 = vector.shape_cast %96 : vector<2x16xf32> to vector<2x16x1xf32>
    %98 = vector.broadcast %97 : vector<2x16x1xf32> to vector<2x16x16xf32>
    %99 = arith.subf %95, %98 : vector<2x16x16xf32>
    %100 = math.exp %99 : vector<2x16x16xf32>
    %cst_29 = arith.constant dense<0.000000e+00> : vector<2x16xf32>
    %101 = vector.multi_reduction <add>, %100, %cst_29 [2] : vector<2x16x16xf32> to vector<2x16xf32>
    %102 = vector.shape_cast %101 : vector<2x16xf32> to vector<2x16x1xf32>
    %103 = tpu.reciprocal %102 {approx = true} : vector<2x16x1xf32> -> vector<2x16x1xf32>
    %104 = vector.broadcast %103 : vector<2x16x1xf32> to vector<2x16x16xf32>
    %105 = arith.mulf %100, %104 : vector<2x16x16xf32>
    %106 = arith.truncf %105 : vector<2x16x16xf32> to vector<2x16x16xbf16>
    "tpu.trace_start"() <{level = 10 : i32, message = "bqk,bkd->bqd"}> : () -> ()
    %cst_30 = arith.constant dense<0.000000e+00> : vector<2x16x32xf32>
    %107 = tpu.matmul %106, %94, %cst_30 {dimension_numbers = #tpu.dot_dimension_numbers<[2], [1], [1], [2], [0, 0, 0, 1, 1, 2], [0], [0]>} : vector<2x16x16xbf16>, vector<2x16x32xbf16>, vector<2x16x32xf32> -> vector<2x16x32xf32>
    "tpu.trace_stop"() : () -> ()
    %108 = arith.truncf %107 : vector<2x16x32xf32> to vector<2x16x32xbf16>
    %109 = tpu.concatenate %57, %74, %91, %108 in 2 : vector<2x16x32xbf16>, vector<2x16x32xbf16>, vector<2x16x32xbf16>, vector<2x16x32xbf16> -> vector<2x16x128xbf16>
    %110 = vector.shape_cast %109 : vector<2x16x128xbf16> to vector<32x128xbf16>
    %c0_31 = arith.constant 0 : index
    %c0_32 = arith.constant 0 : index
    %111 = vector.load %arg6[%c0_31, %c0_32] : memref<128x128xbf16, #tpu.memory_space<vmem>>, vector<128x128xbf16>
    %cst_33 = arith.constant dense<0.000000e+00> : vector<32x128xf32>
    %112 = tpu.matmul %110, %111, %cst_33 {dimension_numbers = #tpu.dot_dimension_numbers<[1], [0], [0], [1], [0, 0, 1, 1], [], []>} : vector<32x128xbf16>, vector<128x128xbf16>, vector<32x128xf32> -> vector<32x128xf32>
    %c0_34 = arith.constant 0 : index
    %c0_35 = arith.constant 0 : index
    %113 = vector.load %arg7[%c0_34, %c0_35] : memref<1x128xf32, #tpu.memory_space<vmem>>, vector<1x128xf32>
    %114 = vector.broadcast %113 : vector<1x128xf32> to vector<32x128xf32>
    %115 = arith.addf %112, %114 : vector<32x128xf32>
    %116 = arith.addf %1, %115 : vector<32x128xf32>
    %c0_36 = arith.constant 0 : index
    %c0_37 = arith.constant 0 : index
    %117 = vector.load %arg8[%c0_36, %c0_37] : memref<1x128xf32, #tpu.memory_space<vmem>>, vector<1x128xf32>
    %c0_38 = arith.constant 0 : index
    %c0_39 = arith.constant 0 : index
    %118 = vector.load %arg9[%c0_38, %c0_39] : memref<1x128xf32, #tpu.memory_space<vmem>>, vector<1x128xf32>
    %cst_40 = arith.constant dense<0.000000e+00> : vector<32xf32>
    %119 = vector.multi_reduction <add>, %116, %cst_40 [1] : vector<32x128xf32> to vector<32xf32>
    %120 = vector.shape_cast %119 : vector<32xf32> to vector<32x1xf32>
    %cst_41 = arith.constant 1.280000e+02 : f32
    %121 = vector.broadcast %cst_41 : f32 to vector<32x1xf32>
    %122 = arith.divf %120, %121 : vector<32x1xf32>
    %123 = vector.broadcast %122 : vector<32x1xf32> to vector<32x128xf32>
    %124 = arith.subf %116, %123 : vector<32x128xf32>
    %125 = arith.mulf %124, %124 : vector<32x128xf32>
    %cst_42 = arith.constant dense<0.000000e+00> : vector<32xf32>
    %126 = vector.multi_reduction <add>, %125, %cst_42 [1] : vector<32x128xf32> to vector<32xf32>
    %127 = vector.shape_cast %126 : vector<32xf32> to vector<32x1xf32>
    %cst_43 = arith.constant 1.280000e+02 : f32
    %128 = vector.broadcast %cst_43 : f32 to vector<32x1xf32>
    %129 = arith.divf %127, %128 : vector<32x1xf32>
    %130 = vector.broadcast %122 : vector<32x1xf32> to vector<32x128xf32>
    %131 = arith.subf %116, %130 : vector<32x128xf32>
    %cst_44 = arith.constant 9.99999974E-6 : f32
    %132 = vector.broadcast %cst_44 : f32 to vector<32x1xf32>
    %133 = arith.addf %129, %132 : vector<32x1xf32>
    %134 = math.rsqrt %133 : vector<32x1xf32>
    %135 = vector.broadcast %134 : vector<32x1xf32> to vector<32x128xf32>
    %136 = arith.mulf %131, %135 : vector<32x128xf32>
    %137 = vector.broadcast %117 : vector<1x128xf32> to vector<32x128xf32>
    %138 = arith.mulf %136, %137 : vector<32x128xf32>
    %139 = vector.broadcast %118 : vector<1x128xf32> to vector<32x128xf32>
    %140 = arith.addf %138, %139 : vector<32x128xf32>
    %141 = arith.truncf %140 : vector<32x128xf32> to vector<32x128xbf16>
    %c0_45 = arith.constant 0 : index
    %c0_46 = arith.constant 0 : index
    %142 = vector.load %arg10[%c0_45, %c0_46] : memref<128x512xbf16, #tpu.memory_space<vmem>>, vector<128x512xbf16>
    %cst_47 = arith.constant dense<0.000000e+00> : vector<32x512xf32>
    %143 = tpu.matmul %141, %142, %cst_47 {dimension_numbers = #tpu.dot_dimension_numbers<[1], [0], [0], [1], [0, 0, 1, 1], [], []>} : vector<32x128xbf16>, vector<128x512xbf16>, vector<32x512xf32> -> vector<32x512xf32>
    %c0_48 = arith.constant 0 : index
    %c0_49 = arith.constant 0 : index
    %144 = vector.load %arg11[%c0_48, %c0_49] : memref<1x512xf32, #tpu.memory_space<vmem>>, vector<1x512xf32>
    %145 = vector.broadcast %144 : vector<1x512xf32> to vector<32x512xf32>
    %146 = arith.addf %143, %145 : vector<32x512xf32>
    %cst_50 = arith.constant 5.000000e-01 : f32
    %147 = vector.broadcast %cst_50 : f32 to vector<32x512xf32>
    %148 = arith.mulf %147, %146 : vector<32x512xf32>
    %cst_51 = arith.constant 4.471500e-02 : f32
    %149 = vector.broadcast %cst_51 : f32 to vector<32x512xf32>
    %150 = arith.mulf %149, %146 : vector<32x512xf32>
    %151 = arith.mulf %150, %146 : vector<32x512xf32>
    %152 = arith.mulf %151, %146 : vector<32x512xf32>
    %153 = arith.addf %146, %152 : vector<32x512xf32>
    %cst_52 = arith.constant 0.797884583 : f32
    %154 = vector.broadcast %cst_52 : f32 to vector<32x512xf32>
    %155 = arith.mulf %154, %153 : vector<32x512xf32>
    %156 = math.tanh %155 : vector<32x512xf32>
    %cst_53 = arith.constant 1.000000e+00 : f32
    %157 = vector.broadcast %cst_53 : f32 to vector<32x512xf32>
    %158 = arith.addf %157, %156 : vector<32x512xf32>
    %159 = arith.mulf %148, %158 : vector<32x512xf32>
    %160 = arith.truncf %159 : vector<32x512xf32> to vector<32x512xbf16>
    %c0_54 = arith.constant 0 : index
    %c0_55 = arith.constant 0 : index
    %161 = vector.load %arg12[%c0_54, %c0_55] : memref<512x128xbf16, #tpu.memory_space<vmem>>, vector<512x128xbf16>
    %cst_56 = arith.constant dense<0.000000e+00> : vector<32x128xf32>
    %162 = tpu.matmul %160, %161, %cst_56 {dimension_numbers = #tpu.dot_dimension_numbers<[1], [0], [0], [1], [0, 0, 1, 1], [], []>} : vector<32x512xbf16>, vector<512x128xbf16>, vector<32x128xf32> -> vector<32x128xf32>
    %c0_57 = arith.constant 0 : index
    %c0_58 = arith.constant 0 : index
    %163 = vector.load %arg13[%c0_57, %c0_58] : memref<1x128xf32, #tpu.memory_space<vmem>>, vector<1x128xf32>
    %164 = vector.broadcast %163 : vector<1x128xf32> to vector<32x128xf32>
    %165 = arith.addf %162, %164 : vector<32x128xf32>
    %166 = arith.addf %116, %165 : vector<32x128xf32>
    %167 = vector.shape_cast %166 : vector<32x128xf32> to vector<2x16x128xf32>
    %c0_59 = arith.constant 0 : index
    %c0_60 = arith.constant 0 : index
    %c0_61 = arith.constant 0 : index
    %168 = vector.load %arg14[%c0_59, %c0_60, %c0_61] : memref<2x16x128xf32, #tpu.memory_space<vmem>>, vector<2x16x128xf32>
    tpu.vector_store %arg14[%c0_59, %c0_60, %c0_61], %167 {strides = array<i32>} : memref<2x16x128xf32, #tpu.memory_space<vmem>>, vector<2x16x128xf32>,
    return
  }
  func.func @transform_0(%arg0: i32) -> (i32, i32, i32) {
    %c0_i32 = arith.constant 0 : i32
    %c0_i32_0 = arith.constant 0 : i32
    %c0_i32_1 = arith.constant 0 : i32
    return %arg0, %c0_i32, %c0_i32_0 : i32, i32, i32
  }
  func.func @transform_1(%arg0: i32) -> (i32, i32) {
    %c0_i32 = arith.constant 0 : i32
    %c0_i32_0 = arith.constant 0 : i32
    %c0_i32_1 = arith.constant 0 : i32
    return %c0_i32, %c0_i32_0 : i32, i32
  }
  func.func @transform_2(%arg0: i32) -> (i32, i32) {
    %c0_i32 = arith.constant 0 : i32
    %c0_i32_0 = arith.constant 0 : i32
    %c0_i32_1 = arith.constant 0 : i32
    return %c0_i32, %c0_i32_0 : i32, i32
  }
  func.func @transform_3(%arg0: i32) -> (i32, i32) {
    %c0_i32 = arith.constant 0 : i32
    %c0_i32_0 = arith.constant 0 : i32
    %c0_i32_1 = arith.constant 0 : i32
    return %c0_i32, %c0_i32_0 : i32, i32
  }
  func.func @transform_4(%arg0: i32) -> (i32, i32) {
    %c0_i32 = arith.constant 0 : i32
    %c0_i32_0 = arith.constant 0 : i32
    %c0_i32_1 = arith.constant 0 : i32
    return %c0_i32, %c0_i32_0 : i32, i32
  }
  func.func @transform_5(%arg0: i32) -> (i32, i32) {
    %c0_i32 = arith.constant 0 : i32
    %c0_i32_0 = arith.constant 0 : i32
    %c0_i32_1 = arith.constant 0 : i32
    return %c0_i32, %c0_i32_0 : i32, i32
  }
  func.func @transform_6(%arg0: i32) -> (i32, i32) {
    %c0_i32 = arith.constant 0 : i32
    %c0_i32_0 = arith.constant 0 : i32
    %c0_i32_1 = arith.constant 0 : i32
    return %c0_i32, %c0_i32_0 : i32, i32
  }
  func.func @transform_7(%arg0: i32) -> (i32, i32) {
    %c0_i32 = arith.constant 0 : i32
    %c0_i32_0 = arith.constant 0 : i32
    %c0_i32_1 = arith.constant 0 : i32
    return %c0_i32, %c0_i32_0 : i32, i32
  }
  func.func @transform_8(%arg0: i32) -> (i32, i32) {
    %c0_i32 = arith.constant 0 : i32
    %c0_i32_0 = arith.constant 0 : i32
    %c0_i32_1 = arith.constant 0 : i32
    return %c0_i32, %c0_i32_0 : i32, i32
  }
  func.func @transform_9(%arg0: i32) -> (i32, i32) {
    %c0_i32 = arith.constant 0 : i32
    %c0_i32_0 = arith.constant 0 : i32
    %c0_i32_1 = arith.constant 0 : i32
    return %c0_i32, %c0_i32_0 : i32, i32
  }
  func.func @transform_10(%arg0: i32) -> (i32, i32) {
    %c0_i32 = arith.constant 0 : i32
    %c0_i32_0 = arith.constant 0 : i32
    %c0_i32_1 = arith.constant 0 : i32
    return %c0_i32, %c0_i32_0 : i32, i32
  }
  func.func @transform_11(%arg0: i32) -> (i32, i32) {
    %c0_i32 = arith.constant 0 : i32
    %c0_i32_0 = arith.constant 0 : i32
    %c0_i32_1 = arith.constant 0 : i32
    return %c0_i32, %c0_i32_0 : i32, i32
  }
  func.func @transform_12(%arg0: i32) -> (i32, i32) {
    %c0_i32 = arith.constant 0 : i32
    %c0_i32_0 = arith.constant 0 : i32
    %c0_i32_1 = arith.constant 0 : i32
    return %c0_i32, %c0_i32_0 : i32, i32
  }
  func.func @transform_13(%arg0: i32) -> (i32, i32, i32) {
    %c0_i32 = arith.constant 0 : i32
    %c0_i32_0 = arith.constant 0 : i32
    %c0_i32_1 = arith.constant 0 : i32
    return %arg0, %c0_i32, %c0_i32_0 : i32, i32, i32
  }
}

module attributes {stable_mosaic.version = 11 : i64} {
  func.func @_ln_linear_kernel(%arg0: i32, %arg1: memref<32x128xf32, #tpu.memory_space<vmem>>, %arg2: memref<1x128xf32, #tpu.memory_space<vmem>>, %arg3: memref<1x128xf32, #tpu.memory_space<vmem>>, %arg4: memref<128x128xbf16, #tpu.memory_space<vmem>>, %arg5: memref<1x128xf32, #tpu.memory_space<vmem>>, %arg6: memref<32x128xf32, #tpu.memory_space<vmem>>) attributes {dimension_semantics = [#tpu.dimension_semantics<parallel>], iteration_bounds = array<i64: 1>, scalar_prefetch = 0 : i64, scratch_operands = 0 : i64, tpu.core_type = #tpu.core_type<tc>, window_params = [{transform_indices = @transform_0, window_bounds = array<i64: 32, 128>}, {pipeline_mode = #tpu.pipeline_mode<synchronous>, transform_indices = @transform_1, window_bounds = array<i64: 1, 128>}, {pipeline_mode = #tpu.pipeline_mode<synchronous>, transform_indices = @transform_2, window_bounds = array<i64: 1, 128>}, {pipeline_mode = #tpu.pipeline_mode<synchronous>, transform_indices = @transform_3, window_bounds = array<i64: 128, 128>}, {pipeline_mode = #tpu.pipeline_mode<synchronous>, transform_indices = @transform_4, window_bounds = array<i64: 1, 128>}, {transform_indices = @transform_5, window_bounds = array<i64: 32, 128>}]} {
    %c0 = arith.constant 0 : index
    %c0_0 = arith.constant 0 : index
    %0 = vector.load %arg1[%c0, %c0_0] : memref<32x128xf32, #tpu.memory_space<vmem>>, vector<32x128xf32>
    %c0_1 = arith.constant 0 : index
    %c0_2 = arith.constant 0 : index
    %1 = vector.load %arg2[%c0_1, %c0_2] : memref<1x128xf32, #tpu.memory_space<vmem>>, vector<1x128xf32>
    %c0_3 = arith.constant 0 : index
    %c0_4 = arith.constant 0 : index
    %2 = vector.load %arg3[%c0_3, %c0_4] : memref<1x128xf32, #tpu.memory_space<vmem>>, vector<1x128xf32>
    %cst = arith.constant dense<0.000000e+00> : vector<32xf32>
    %3 = vector.multi_reduction <add>, %0, %cst [1] : vector<32x128xf32> to vector<32xf32>
    %4 = vector.shape_cast %3 : vector<32xf32> to vector<32x1xf32>
    %cst_5 = arith.constant 1.280000e+02 : f32
    %5 = vector.broadcast %cst_5 : f32 to vector<32x1xf32>
    %6 = arith.divf %4, %5 : vector<32x1xf32>
    %7 = vector.broadcast %6 : vector<32x1xf32> to vector<32x128xf32>
    %8 = arith.subf %0, %7 : vector<32x128xf32>
    %9 = arith.mulf %8, %8 : vector<32x128xf32>
    %cst_6 = arith.constant dense<0.000000e+00> : vector<32xf32>
    %10 = vector.multi_reduction <add>, %9, %cst_6 [1] : vector<32x128xf32> to vector<32xf32>
    %11 = vector.shape_cast %10 : vector<32xf32> to vector<32x1xf32>
    %cst_7 = arith.constant 1.280000e+02 : f32
    %12 = vector.broadcast %cst_7 : f32 to vector<32x1xf32>
    %13 = arith.divf %11, %12 : vector<32x1xf32>
    %14 = vector.broadcast %6 : vector<32x1xf32> to vector<32x128xf32>
    %15 = arith.subf %0, %14 : vector<32x128xf32>
    %cst_8 = arith.constant 9.99999974E-6 : f32
    %16 = vector.broadcast %cst_8 : f32 to vector<32x1xf32>
    %17 = arith.addf %13, %16 : vector<32x1xf32>
    %18 = math.rsqrt %17 : vector<32x1xf32>
    %19 = vector.broadcast %18 : vector<32x1xf32> to vector<32x128xf32>
    %20 = arith.mulf %15, %19 : vector<32x128xf32>
    %21 = vector.broadcast %1 : vector<1x128xf32> to vector<32x128xf32>
    %22 = arith.mulf %20, %21 : vector<32x128xf32>
    %23 = vector.broadcast %2 : vector<1x128xf32> to vector<32x128xf32>
    %24 = arith.addf %22, %23 : vector<32x128xf32>
    %25 = arith.truncf %24 : vector<32x128xf32> to vector<32x128xbf16>
    %c0_9 = arith.constant 0 : index
    %c0_10 = arith.constant 0 : index
    %26 = vector.load %arg4[%c0_9, %c0_10] : memref<128x128xbf16, #tpu.memory_space<vmem>>, vector<128x128xbf16>
    %cst_11 = arith.constant dense<0.000000e+00> : vector<32x128xf32>
    %27 = tpu.matmul %25, %26, %cst_11 {dimension_numbers = #tpu.dot_dimension_numbers<[1], [0], [0], [1], [0, 0, 1, 1], [], []>} : vector<32x128xbf16>, vector<128x128xbf16>, vector<32x128xf32> -> vector<32x128xf32>
    %c0_12 = arith.constant 0 : index
    %c0_13 = arith.constant 0 : index
    %28 = vector.load %arg5[%c0_12, %c0_13] : memref<1x128xf32, #tpu.memory_space<vmem>>, vector<1x128xf32>
    %29 = vector.broadcast %28 : vector<1x128xf32> to vector<32x128xf32>
    %30 = arith.addf %27, %29 : vector<32x128xf32>
    %c0_14 = arith.constant 0 : index
    %c0_15 = arith.constant 0 : index
    %31 = vector.load %arg6[%c0_14, %c0_15] : memref<32x128xf32, #tpu.memory_space<vmem>>, vector<32x128xf32>
    tpu.vector_store %arg6[%c0_14, %c0_15], %30 {strides = array<i32>} : memref<32x128xf32, #tpu.memory_space<vmem>>, vector<32x128xf32>,
    return
  }
  func.func @transform_0(%arg0: i32) -> (i32, i32) {
    %c0_i32 = arith.constant 0 : i32
    %c0_i32_0 = arith.constant 0 : i32
    return %arg0, %c0_i32 : i32, i32
  }
  func.func @transform_1(%arg0: i32) -> (i32, i32) {
    %c0_i32 = arith.constant 0 : i32
    %c0_i32_0 = arith.constant 0 : i32
    %c0_i32_1 = arith.constant 0 : i32
    return %c0_i32, %c0_i32_0 : i32, i32
  }
  func.func @transform_2(%arg0: i32) -> (i32, i32) {
    %c0_i32 = arith.constant 0 : i32
    %c0_i32_0 = arith.constant 0 : i32
    %c0_i32_1 = arith.constant 0 : i32
    return %c0_i32, %c0_i32_0 : i32, i32
  }
  func.func @transform_3(%arg0: i32) -> (i32, i32) {
    %c0_i32 = arith.constant 0 : i32
    %c0_i32_0 = arith.constant 0 : i32
    %c0_i32_1 = arith.constant 0 : i32
    return %c0_i32, %c0_i32_0 : i32, i32
  }
  func.func @transform_4(%arg0: i32) -> (i32, i32) {
    %c0_i32 = arith.constant 0 : i32
    %c0_i32_0 = arith.constant 0 : i32
    %c0_i32_1 = arith.constant 0 : i32
    return %c0_i32, %c0_i32_0 : i32, i32
  }
  func.func @transform_5(%arg0: i32) -> (i32, i32) {
    %c0_i32 = arith.constant 0 : i32
    %c0_i32_0 = arith.constant 0 : i32
    return %arg0, %c0_i32 : i32, i32
  }
}

</mosaic_0001>

<llo_original>
// kernel: tpu_custom_call.1
$region0: #{tpu_custom_call.1}
  #allocation0 [shape = 'u32[]', space=smem, size = 0x4, offset = 0x4, fixed_abs, tag = 'smem constant byte address 0x4 - core index']
  #allocation1 [shape = 'u32[144,128]{1,0:T(1,128)}', space=vmem, size = 0x12000, scoped, tag = 'internal scratch']
  %s0 = inlined_call_operand.hbm [shape: f32[8,128], index: 0, kind: input, shape index: {}]
  %s1 = inlined_call_operand.hbm [shape: f32[8,128], index: 1, kind: output, shape index: {}]
  %s2 = sld [smem:[#allocation0]]
  $region18: #{tpu_custom_call.1} parent=0
    _
  %s4 = ssub.s32 1, %s2
  %s5 = scalar_select 0, %s4, %s2
  $region1: #{tpu_custom_call.1} parent=0
    #allocation2 [shape = 'u8[4096]{0}', space=vmem, size = 0x1000, scoped, tag = 'input window, operand 0, single buffered']
    #allocation3 [shape = 's32[1]{0}', space=sflag, size = 0x4, scoped, tag = 'scoped memory for tpu_custom_call.1']
    #allocation4 [shape = 's32[1]{0}', space=sflag, size = 0x4, scoped, tag = 'scoped memory for tpu_custom_call.1']
    #allocation5 [shape = 'u8[4096]{0}', space=vmem, size = 0x1000, scoped, tag = 'output window, operand 0, single buffered']
    %6 = vsyncpa [#allocation3], 0
    %7 = vsyncpa [#allocation4], 0
    // Predicated region
    $region2: #{tpu_custom_call.1} parent=1 // pred_check
      _
    $region3: #{tpu_custom_call.1} parent=1 // pred_check_branch
      %9 = sbr.rel (0) target = $region5
    $region4: #{tpu_custom_call.1} parent=1 // pred_region
      %s11 = ssub.s32 128, 128
      %12 = vsyncadd [#allocation3], %s11
      %s14 = sshll.u32 [#allocation2], 4
      %s15 = int_to_ptr.vmem [resolvable:$true] %s14
      %17 = dma.hbm_to_vmem [thread:$0]  %s0, 128, %s15, [#allocation3]
    $region5: #{tpu_custom_call.1} parent=1 // pred_fallthru
      _
    // Predicated region
    $region6: #{tpu_custom_call.1} parent=1 // pred_check
      _
    $region7: #{tpu_custom_call.1} parent=1 // pred_check_branch
      %19 = sbr.rel (0) target = $region9
    $region8: #{tpu_custom_call.1} parent=1 // pred_region
      %20 = dma.done [#allocation3], 128
    $region9: #{tpu_custom_call.1} parent=1 // pred_fallthru
      _
    %v21 = vld [vmem:[#allocation2] sm:$0xff]
    %v22 = vadd.f32 %v21, 1.0
    %23 = vst [vmem:[#allocation5] sm:$0xff] %v22
    // Predicated region
    $region10: #{tpu_custom_call.1} parent=1 // pred_check
      _
    $region11: #{tpu_custom_call.1} parent=1 // pred_check_branch
      %25 = sbr.rel (0) target = $region13
    $region12: #{tpu_custom_call.1} parent=1 // pred_region
      %s27 = ssub.s32 128, 128
      %28 = vsyncadd [#allocation4], %s27
      %s30 = sshll.u32 [#allocation5], 4
      %s31 = int_to_ptr.vmem [resolvable:$true] %s30
      %33 = dma.vmem_to_hbm [thread:$0]  %s31, 128, %s1, [#allocation4]
    $region13: #{tpu_custom_call.1} parent=1 // pred_fallthru
      _
    // Predicated region
    $region14: #{tpu_custom_call.1} parent=1 // pred_check
      _
    $region15: #{tpu_custom_call.1} parent=1 // pred_check_branch
      %35 = sbr.rel (0) target = $region17
    $region16: #{tpu_custom_call.1} parent=1 // pred_region
      %36 = dma.done [#allocation4], 128
    $region17: #{tpu_custom_call.1} parent=1 // pred_fallthru
      _
    %37 = vsyncpa [#allocation3], 1
    %38 = vsyncpa [#allocation4], 1

// kernel: _lambda_.7
$region0: #{_lambda_.7}
  #allocation0 [shape = 'u32[]', space=smem, size = 0x4, offset = 0x4, fixed_abs, tag = 'smem constant byte address 0x4 - core index']
  #allocation1 [shape = 'u32[144,128]{1,0:T(1,128)}', space=vmem, size = 0x12000, scoped, tag = 'internal scratch']
  %s0 = inlined_call_operand.vmem [shape: f32[2,16,48], index: 0, kind: input, shape index: {}]
  %s1 = inlined_call_operand.vmem [shape: bf16[48,128], index: 1, kind: input, shape index: {}]
  %s2 = inlined_call_operand.vmem [shape: f32[1,128], index: 2, kind: input, shape index: {}]
  %s3 = inlined_call_operand.vmem [shape: f32[16,128], index: 3, kind: input, shape index: {}]
  %s4 = inlined_call_operand.vmem [shape: f32[2,16,128], index: 4, kind: output, shape index: {}]
  %s5 = sld [smem:[#allocation0]]
  $region26: #{_lambda_.7} parent=0
    _
  %s7 = ssub.s32 1, %s5
  %s8 = scalar_select 0, %s7, %s5
  // Predicated region
  $region2: #{_lambda_.7} parent=0 // pred_check
    _
  $region3: #{_lambda_.7} parent=0 // pred_check_branch
    %10 = sbr.rel (0) target = $region5
  $region4: #{_lambda_.7} parent=0 // pred_region
    _
  $region5: #{_lambda_.7} parent=0 // pred_fallthru
    _
  // Predicated region
  $region6: #{_lambda_.7} parent=0 // pred_check
    _
  $region7: #{_lambda_.7} parent=0 // pred_check_branch
    %12 = sbr.rel (0) target = $region9
  $region8: #{_lambda_.7} parent=0 // pred_region
    _
  $region9: #{_lambda_.7} parent=0 // pred_fallthru
    _
  // Predicated region
  $region10: #{_lambda_.7} parent=0 // pred_check
    _
  $region11: #{_lambda_.7} parent=0 // pred_check_branch
    %14 = sbr.rel (0) target = $region13
  $region12: #{_lambda_.7} parent=0 // pred_region
    _
  $region13: #{_lambda_.7} parent=0 // pred_fallthru
    _
  // Predicated region
  $region14: #{_lambda_.7} parent=0 // pred_check
    _
  $region15: #{_lambda_.7} parent=0 // pred_check_branch
    %16 = sbr.rel (0) target = $region17
  $region16: #{_lambda_.7} parent=0 // pred_region
    _
  $region17: #{_lambda_.7} parent=0 // pred_fallthru
    _
  %v18 = vld [vmem:[%s0] sm:$0xff]
  %v19 = vld [vmem:[%s0 + $0x8] sm:$0xff]
  %v20 = vld [vmem:[%s0 + $0x10] sm:$0xff]
  %v21 = vld [vmem:[%s0 + $0x18] sm:$0xff]
  %v22 = vpack.c.bf16 %v19, %v18
  %v23 = vpack.c.bf16 %v21, %v20
  %v24 = vld [vmem:[%s1] sm:$0xf]
  %v25 = vld [vmem:[%s1 + $0x4] sm:$0xf]
  %v26 = vld [vmem:[%s1 + $0x8] sm:$0xf]
  %v27 = vld [vmem:[%s1 + $0xc] sm:$0xf]
  %v28 = vld [vmem:[%s1 + $0x10] sm:$0xf]
  %v29 = vld [vmem:[%s1 + $0x14] sm:$0xf]
  %v30 = vld [vmem:[%s2] sm:$0x1]
  %v32 = vlaneseq
  %v33 = vshrl.u32 %v32, 7
  %v34 = vsub.s32 0, %v33
  %v35 = vrot.slane %v30, %v34
  %v43 = vunpack.c.l.b16 %v24
  %v44 = vunpack.c.l.b16 %v25
  %v45 = vunpack.c.l.b16 %v26
  %v46 = vunpack.c.l.b16 %v27
  %v47 = vunpack.c.l.b16 %v28
  %v48 = vunpack.c.l.b16 %v29
  %v49 = vpack.c.b16 %v44, %v43
  %v50 = vpack.c.b16 %v46, %v45
  %v51 = vpack.c.b16 %v48, %v47
  %vm55 = vcmask 392192
  %v57 = vsel %vm55, %v22, 0
  %v60 = vsel %vm55, %v23, 0
  %62 = vmatprep.subr.bf16.mxu0 0
  %63 = vmatpush1.bf16.msra.mxu0 0
  %64 = vmatprep.subr.bf16.mxu0 0
  %65 = vmatpush1.bf16.msra.mxu0 0
  %66 = vmatprep.subr.bf16.mxu0 0
  %67 = vmatpush1.bf16.msra.mxu0 0
  %68 = vmatprep.subr.bf16.mxu0 0
  %69 = vmatpush1.bf16.msra.mxu0 0
  %70 = vmatprep.subr.bf16.mxu0 0
  %71 = vmatpush1.bf16.msra.mxu0 0
  %72 = vmatprep.subr.bf16.mxu0 0
  %73 = vmatpush1.bf16.msra.mxu0 %v51
  %74 = vmatprep.subr.bf16.mxu0 0
  %75 = vmatpush1.bf16.msra.mxu0 %v50
  %76 = vmatprep.subr.bf16.mxu0 0
  %77 = vmatpush1.bf16.msra.mxu0 %v49
  %78 = vmatprep.subr.bf16.mxu0 0
  %79 = vmatpush2.bf16.msra.mxu0 0
  %80 = vmatprep.subr.bf16.mxu0 0
  %81 = vmatpush2.bf16.msra.mxu0 0
  %82 = vmatprep.subr.bf16.mxu0 0
  %83 = vmatpush2.bf16.msra.mxu0 0
  %84 = vmatprep.subr.bf16.mxu0 0
  %85 = vmatpush2.bf16.msra.mxu0 0
  %86 = vmatprep.subr.bf16.mxu0 0
  %87 = vmatpush2.bf16.msra.mxu0 0
  %88 = vmatprep.subr.bf16.mxu0 0
  %89 = vmatpush2.bf16.msra.mxu0 0
  %90 = vmatprep.subr.bf16.mxu0 0
  %91 = vmatpush2.bf16.msra.mxu0 0
  %92 = vmatprep.subr.bf16.mxu0 0
  %93 = vmatpush2.bf16.msra.mxu0 0
  %94 = vmatprep.mubr.bf16.mxu0 0
  %95 = vmatmul.mubr.bf16.gmra.mxu0 %v57
  %v96 = vpop.f32.mrf.mxu0
  %v97 = vadd.f32 %v35, %v96
  %v98 = vpop.f32.mrf.mxu0
  %v99 = vpop.f32.mrf.mxu0
  %v100 = vadd.f32 %v35, %v99
  %v101 = vpop.f32.mrf.mxu0
  %102 = vmatprep.mubr.bf16.mxu0 0
  %103 = vmatmul.mubr.bf16.gmra.mxu0 %v60
  %v104 = vpop.f32.mrf.mxu0
  %v105 = vadd.f32 %v35, %v104
  %v106 = vpop.f32.mrf.mxu0
  %v107 = vpop.f32.mrf.mxu0
  %v108 = vadd.f32 %v35, %v107
  %v109 = vpop.f32.mrf.mxu0
  %110 = vdwg.mxu0
  %v111 = vld [vmem:[%s3] sm:$0xff]
  %v112 = vld [vmem:[%s3 + $0x8] sm:$0xff]
  %v113 = vadd.f32 %v97, %v111
  %v114 = vadd.f32 %v100, %v112
  %v115 = vadd.f32 %v105, %v111
  %v116 = vadd.f32 %v108, %v112
  %117 = vst [vmem:[%s4] sm:$0xff] %v113
  %118 = vst [vmem:[%s4 + $0x8] sm:$0xff] %v114
  %119 = vst [vmem:[%s4 + $0x10] sm:$0xff] %v115
  %120 = vst [vmem:[%s4 + $0x18] sm:$0xff] %v116
  // Predicated region
  $region18: #{_lambda_.7} parent=0 // pred_check
    _
  $region19: #{_lambda_.7} parent=0 // pred_check_branch
    %122 = sbr.rel (0) target = $region21
  $region20: #{_lambda_.7} parent=0 // pred_region
    _
  $region21: #{_lambda_.7} parent=0 // pred_fallthru
    _
  // Predicated region
  $region22: #{_lambda_.7} parent=0 // pred_check
    _
  $region23: #{_lambda_.7} parent=0 // pred_check_branch
    %124 = sbr.rel (0) target = $region25
  $region24: #{_lambda_.7} parent=0 // pred_region
    _
  $region25: #{_lambda_.7} parent=0 // pred_fallthru
    _

// kernel: _lambda_.10
$region0: #{_lambda_.10}
  #allocation0 [shape = 'u32[]', space=smem, size = 0x4, offset = 0x4, fixed_abs, tag = 'smem constant byte address 0x4 - core index']
  #allocation1 [shape = 'u32[144,128]{1,0:T(1,128)}', space=vmem, size = 0x12000, scoped, tag = 'internal scratch']
  %s0 = inlined_call_operand.vmem [shape: f32[8,128], index: 0, kind: input, shape index: {}]
  %s1 = inlined_call_operand.vmem [shape: f32[1,128], index: 1, kind: input, shape index: {}]
  %s2 = inlined_call_operand.vmem [shape: f32[1,128], index: 2, kind: input, shape index: {}]
  %s3 = inlined_call_operand.vmem [shape: bf16[128,128], index: 3, kind: input, shape index: {}]
  %s4 = inlined_call_operand.vmem [shape: f32[1,128], index: 4, kind: input, shape index: {}]
  %s5 = inlined_call_operand.vmem [shape: f32[8,128], index: 5, kind: output, shape index: {}]
  %s6 = sld [smem:[#allocation0]]
  $region30: #{_lambda_.10} parent=0
    _
  %s8 = ssub.s32 1, %s6
  %s9 = scalar_select 0, %s8, %s6
  // Predicated region
  $region2: #{_lambda_.10} parent=0 // pred_check
    _
  $region3: #{_lambda_.10} parent=0 // pred_check_branch
    %11 = sbr.rel (0) target = $region5
  $region4: #{_lambda_.10} parent=0 // pred_region
    _
  $region5: #{_lambda_.10} parent=0 // pred_fallthru
    _
  // Predicated region
  $region6: #{_lambda_.10} parent=0 // pred_check
    _
  $region7: #{_lambda_.10} parent=0 // pred_check_branch
    %13 = sbr.rel (0) target = $region9
  $region8: #{_lambda_.10} parent=0 // pred_region
    _
  $region9: #{_lambda_.10} parent=0 // pred_fallthru
    _
  // Predicated region
  $region10: #{_lambda_.10} parent=0 // pred_check
    _
  $region11: #{_lambda_.10} parent=0 // pred_check_branch
    %15 = sbr.rel (0) target = $region13
  $region12: #{_lambda_.10} parent=0 // pred_region
    _
  $region13: #{_lambda_.10} parent=0 // pred_fallthru
    _
  // Predicated region
  $region14: #{_lambda_.10} parent=0 // pred_check
    _
  $region15: #{_lambda_.10} parent=0 // pred_check_branch
    %17 = sbr.rel (0) target = $region17
  $region16: #{_lambda_.10} parent=0 // pred_region
    _
  $region17: #{_lambda_.10} parent=0 // pred_fallthru
    _
  // Predicated region
  $region18: #{_lambda_.10} parent=0 // pred_check
    _
  $region19: #{_lambda_.10} parent=0 // pred_check_branch
    %19 = sbr.rel (0) target = $region21
  $region20: #{_lambda_.10} parent=0 // pred_region
    _
  $region21: #{_lambda_.10} parent=0 // pred_fallthru
    _
  %v21 = vld [vmem:[%s0] sm:$0xff]
  %v22 = vld [vmem:[%s1] sm:$0x1]
  %v23 = vld [vmem:[%s2] sm:$0x1]
  %24 = vadd.xlane.f32.xlu0 %v21
  %v25 = vpop.xlane.xlu0 %24
  %v26 = vrcp.pop 128.0
  %v27 = vmul.f32 %v25, %v26
  %v28 = vsub.f32 %v21, %v27
  %v29 = vmul.f32 %v28, %v28
  %30 = vadd.xlane.f32.xlu0 %v29
  %v31 = vpop.xlane.xlu0 %30
  %v32 = vmul.f32 %v31, %v26
  %v33 = vadd.f32 %v32, 1e-05
  %v34 = vrsqrt.pop %v33
  %v35 = vmul.f32 %v28, %v34
  %v37 = vlaneseq
  %v38 = vshrl.u32 %v37, 7
  %v39 = vsub.s32 0, %v38
  %v40 = vrot.slane %v22, %v39
  %v42 = vmul.f32 %v35, %v40
  %v44 = vlaneseq
  %v45 = vshrl.u32 %v44, 7
  %v46 = vsub.s32 0, %v45
  %v47 = vrot.slane %v23, %v46
  %v49 = vadd.f32 %v42, %v47
  %v50 = vpack.c.bf16 %v49, %v49
  %v51 = vld [vmem:[%s3] sm:$0xf]
  %v52 = vld [vmem:[%s3 + $0x4] sm:$0xf]
  %v53 = vld [vmem:[%s3 + $0x8] sm:$0xf]
  %v54 = vld [vmem:[%s3 + $0xc] sm:$0xf]
  %v55 = vld [vmem:[%s3 + $0x10] sm:$0xf]
  %v56 = vld [vmem:[%s3 + $0x14] sm:$0xf]
  %v57 = vld [vmem:[%s3 + $0x18] sm:$0xf]
  %v58 = vld [vmem:[%s3 + $0x1c] sm:$0xf]
  %v59 = vld [vmem:[%s3 + $0x20] sm:$0xf]
  %v60 = vld [vmem:[%s3 + $0x24] sm:$0xf]
  %v61 = vld [vmem:[%s3 + $0x28] sm:$0xf]
  %v62 = vld [vmem:[%s3 + $0x2c] sm:$0xf]
  %v63 = vld [vmem:[%s3 + $0x30] sm:$0xf]
  %v64 = vld [vmem:[%s3 + $0x34] sm:$0xf]
  %v65 = vld [vmem:[%s3 + $0x38] sm:$0xf]
  %v66 = vld [vmem:[%s3 + $0x3c] sm:$0xf]
  %v67 = vld [vmem:[%s4] sm:$0x1]
  %v69 = vlaneseq
  %v70 = vshrl.u32 %v69, 7
  %v71 = vsub.s32 0, %v70
  %v72 = vrot.slane %v67, %v71
  %v90 = vunpack.c.l.b16 %v51
  %v91 = vunpack.c.l.b16 %v52
  %v92 = vunpack.c.l.b16 %v53
  %v93 = vunpack.c.l.b16 %v54
  %v94 = vunpack.c.l.b16 %v55
  %v95 = vunpack.c.l.b16 %v56
  %v96 = vunpack.c.l.b16 %v57
  %v97 = vunpack.c.l.b16 %v58
  %v98 = vunpack.c.l.b16 %v59
  %v99 = vunpack.c.l.b16 %v60
  %v100 = vunpack.c.l.b16 %v61
  %v101 = vunpack.c.l.b16 %v62
  %v102 = vunpack.c.l.b16 %v63
  %v103 = vunpack.c.l.b16 %v64
  %v104 = vunpack.c.l.b16 %v65
  %v105 = vunpack.c.l.b16 %v66
  %v106 = vpack.c.b16 %v91, %v90
  %v107 = vpack.c.b16 %v93, %v92
  %v108 = vpack.c.b16 %v95, %v94
  %v109 = vpack.c.b16 %v97, %v96
  %v110 = vpack.c.b16 %v99, %v98
  %v111 = vpack.c.b16 %v101, %v100
  %v112 = vpack.c.b16 %v103, %v102
  %v113 = vpack.c.b16 %v105, %v104
  %122 = vmatprep.subr.bf16.mxu0 0
  %123 = vmatpush1.bf16.msra.mxu0 %v113
  %124 = vmatprep.subr.bf16.mxu0 0
  %125 = vmatpush1.bf16.msra.mxu0 %v112
  %126 = vmatprep.subr.bf16.mxu0 0
  %127 = vmatpush1.bf16.msra.mxu0 %v111
  %128 = vmatprep.subr.bf16.mxu0 0
  %129 = vmatpush1.bf16.msra.mxu0 %v110
  %130 = vmatprep.subr.bf16.mxu0 0
  %131 = vmatpush1.bf16.msra.mxu0 %v109
  %132 = vmatprep.subr.bf16.mxu0 0
  %133 = vmatpush1.bf16.msra.mxu0 %v108
  %134 = vmatprep.subr.bf16.mxu0 0
  %135 = vmatpush1.bf16.msra.mxu0 %v107
  %136 = vmatprep.subr.bf16.mxu0 0
  %137 = vmatpush1.bf16.msra.mxu0 %v106
  %138 = vmatprep.subr.bf16.mxu0 0
  %139 = vmatpush2.bf16.msra.mxu0 0
  %140 = vmatprep.subr.bf16.mxu0 0
  %141 = vmatpush2.bf16.msra.mxu0 0
  %142 = vmatprep.subr.bf16.mxu0 0
  %143 = vmatpush2.bf16.msra.mxu0 0
  %144 = vmatprep.subr.bf16.mxu0 0
  %145 = vmatpush2.bf16.msra.mxu0 0
  %146 = vmatprep.subr.bf16.mxu0 0
  %147 = vmatpush2.bf16.msra.mxu0 0
  %148 = vmatprep.subr.bf16.mxu0 0
  %149 = vmatpush2.bf16.msra.mxu0 0
  %150 = vmatprep.subr.bf16.mxu0 0
  %151 = vmatpush2.bf16.msra.mxu0 0
  %152 = vmatprep.subr.bf16.mxu0 0
  %153 = vmatpush2.bf16.msra.mxu0 0
  %154 = vmatprep.mubr.bf16.mxu0 0
  %155 = vmatmul.mubr.bf16.gmra.mxu0 %v50
  %v156 = vpop.f32.mrf.mxu0
  %v157 = vadd.f32 %v72, %v156
  %v158 = vpop.f32.mrf.mxu0
  %v159 = vpop.f32.mrf.mxu0
  %v160 = vpop.f32.mrf.mxu0
  %161 = vdwg.mxu0
  %162 = vst [vmem:[%s5] sm:$0xff] %v157
  // Predicated region
  $region22: #{_lambda_.10} parent=0 // pred_check
    _
  $region23: #{_lambda_.10} parent=0 // pred_check_branch
    %164 = sbr.rel (0) target = $region25
  $region24: #{_lambda_.10} parent=0 // pred_region
    _
  $region25: #{_lambda_.10} parent=0 // pred_fallthru
    _
  // Predicated region
  $region26: #{_lambda_.10} parent=0 // pred_check
    _
  $region27: #{_lambda_.10} parent=0 // pred_check_branch
    %166 = sbr.rel (0) target = $region29
  $region28: #{_lambda_.10} parent=0 // pred_region
    _
  $region29: #{_lambda_.10} parent=0 // pred_fallthru
    _

// kernel: _lambda_.13
$region0: #{_lambda_.13}
  #allocation0 [shape = 'u32[]', space=smem, size = 0x4, offset = 0x4, fixed_abs, tag = 'smem constant byte address 0x4 - core index']
  #allocation1 [shape = 'u32[144,128]{1,0:T(1,128)}', space=vmem, size = 0x12000, scoped, tag = 'internal scratch']
  %s0 = inlined_call_operand.vmem [shape: f32[32,128], index: 0, kind: input, shape index: {}]
  %s1 = inlined_call_operand.vmem [shape: f32[1,128], index: 1, kind: input, shape index: {}]
  %s2 = inlined_call_operand.vmem [shape: f32[1,128], index: 2, kind: input, shape index: {}]
  %s3 = inlined_call_operand.vmem [shape: bf16[128,128], index: 3, kind: input, shape index: {}]
  %s4 = inlined_call_operand.vmem [shape: f32[1,128], index: 4, kind: input, shape index: {}]
  %s5 = inlined_call_operand.hbm [shape: f32[32,128], index: 5, kind: output, shape index: {}]
  %s6 = sld [smem:[#allocation0]]
  $region30: #{_lambda_.13} parent=0
    _
  %s8 = ssub.s32 1, %s6
  %s9 = scalar_select 0, %s8, %s6
  $region1: #{_lambda_.13} parent=0
    #allocation2 [shape = 'u8[16384]{0}', space=vmem, size = 0x4000, scoped, tag = 'output window, operand 0, single buffered']
    #allocation3 [shape = 's32[1]{0}', space=sflag, size = 0x4, scoped, tag = 'scoped memory for _lambda_.13']
    %10 = vsyncpa [#allocation3], 0
    // Predicated region
    $region2: #{_lambda_.13} parent=1 // pred_check
      _
    $region3: #{_lambda_.13} parent=1 // pred_check_branch
      %12 = sbr.rel (0) target = $region5
    $region4: #{_lambda_.13} parent=1 // pred_region
      _
    $region5: #{_lambda_.13} parent=1 // pred_fallthru
      _
    // Predicated region
    $region6: #{_lambda_.13} parent=1 // pred_check
      _
    $region7: #{_lambda_.13} parent=1 // pred_check_branch
      %14 = sbr.rel (0) target = $region9
    $region8: #{_lambda_.13} parent=1 // pred_region
      _
    $region9: #{_lambda_.13} parent=1 // pred_fallthru
      _
    // Predicated region
    $region10: #{_lambda_.13} parent=1 // pred_check
      _
    $region11: #{_lambda_.13} parent=1 // pred_check_branch
      %16 = sbr.rel (0) target = $region13
    $region12: #{_lambda_.13} parent=1 // pred_region
      _
    $region13: #{_lambda_.13} parent=1 // pred_fallthru
      _
    // Predicated region
    $region14: #{_lambda_.13} parent=1 // pred_check
      _
    $region15: #{_lambda_.13} parent=1 // pred_check_branch
      %18 = sbr.rel (0) target = $region17
    $region16: #{_lambda_.13} parent=1 // pred_region
      _
    $region17: #{_lambda_.13} parent=1 // pred_fallthru
      _
    // Predicated region
    $region18: #{_lambda_.13} parent=1 // pred_check
      _
    $region19: #{_lambda_.13} parent=1 // pred_check_branch
      %20 = sbr.rel (0) target = $region21
    $region20: #{_lambda_.13} parent=1 // pred_region
      _
    $region21: #{_lambda_.13} parent=1 // pred_fallthru
      _
    %v22 = vld [vmem:[%s0] sm:$0xff]
    %v23 = vld [vmem:[%s0 + $0x8] sm:$0xff]
    %v24 = vld [vmem:[%s0 + $0x10] sm:$0xff]
    %v25 = vld [vmem:[%s0 + $0x18] sm:$0xff]
    %v26 = vld [vmem:[%s1] sm:$0x1]
    %v27 = vld [vmem:[%s2] sm:$0x1]
    %28 = vadd.xlane.f32.xlu0 %v22
    %v29 = vpop.xlane.xlu0 %28
    %30 = vadd.xlane.f32.xlu0 %v23
    %v31 = vpop.xlane.xlu0 %30
    %32 = vadd.xlane.f32.xlu0 %v24
    %v33 = vpop.xlane.xlu0 %32
    %34 = vadd.xlane.f32.xlu0 %v25
    %v35 = vpop.xlane.xlu0 %34
    %v36 = vrcp.pop 128.0
    %v37 = vmul.f32 %v29, %v36
    %v38 = vmul.f32 %v31, %v36
    %v39 = vmul.f32 %v33, %v36
    %v40 = vmul.f32 %v35, %v36
    %v41 = vsub.f32 %v22, %v37
    %v42 = vsub.f32 %v23, %v38
    %v43 = vsub.f32 %v24, %v39
    %v44 = vsub.f32 %v25, %v40
    %v45 = vmul.f32 %v41, %v41
    %v46 = vmul.f32 %v42, %v42
    %v47 = vmul.f32 %v43, %v43
    %v48 = vmul.f32 %v44, %v44
    %49 = vadd.xlane.f32.xlu0 %v45
    %v50 = vpop.xlane.xlu0 %49
    %51 = vadd.xlane.f32.xlu0 %v46
    %v52 = vpop.xlane.xlu0 %51
    %53 = vadd.xlane.f32.xlu0 %v47
    %v54 = vpop.xlane.xlu0 %53
    %55 = vadd.xlane.f32.xlu0 %v48
    %v56 = vpop.xlane.xlu0 %55
    %v57 = vmul.f32 %v50, %v36
    %v58 = vmul.f32 %v52, %v36
    %v59 = vmul.f32 %v54, %v36
    %v60 = vmul.f32 %v56, %v36
    %v61 = vadd.f32 %v57, 1e-05
    %v62 = vadd.f32 %v58, 1e-05
    %v63 = vadd.f32 %v59, 1e-05
    %v64 = vadd.f32 %v60, 1e-05
    %v65 = vrsqrt.pop %v61
    %v66 = vrsqrt.pop %v62
    %v67 = vrsqrt.pop %v63
    %v68 = vrsqrt.pop %v64
    %v69 = vmul.f32 %v41, %v65
    %v70 = vmul.f32 %v42, %v66
    %v71 = vmul.f32 %v43, %v67
    %v72 = vmul.f32 %v44, %v68
    %v74 = vlaneseq
    %v75 = vshrl.u32 %v74, 7
    %v76 = vsub.s32 0, %v75
    %v77 = vrot.slane %v26, %v76
    %v79 = vmul.f32 %v69, %v77
    %v80 = vmul.f32 %v70, %v77
    %v81 = vmul.f32 %v71, %v77
    %v82 = vmul.f32 %v72, %v77
    %v84 = vlaneseq
    %v85 = vshrl.u32 %v84, 7
    %v86 = vsub.s32 0, %v85
    %v87 = vrot.slane %v27, %v86
    %v89 = vadd.f32 %v79, %v87
    %v90 = vadd.f32 %v80, %v87
    %v91 = vadd.f32 %v81, %v87
    %v92 = vadd.f32 %v82, %v87
    %v93 = vpack.c.bf16 %v90, %v89
    %v94 = vpack.c.bf16 %v92, %v91
    %v95 = vld [vmem:[%s3] sm:$0xf]
    %v96 = vld [vmem:[%s3 + $0x4] sm:$0xf]
    %v97 = vld [vmem:[%s3 + $0x8] sm:$0xf]
    %v98 = vld [vmem:[%s3 + $0xc] sm:$0xf]
    %v99 = vld [vmem:[%s3 + $0x10] sm:$0xf]
    %v100 = vld [vmem:[%s3 + $0x14] sm:$0xf]
    %v101 = vld [vmem:[%s3 + $0x18] sm:$0xf]
    %v102 = vld [vmem:[%s3 + $0x1c] sm:$0xf]
    %v103 = vld [vmem:[%s3 + $0x20] sm:$0xf]
    %v104 = vld [vmem:[%s3 + $0x24] sm:$0xf]
    %v105 = vld [vmem:[%s3 + $0x28] sm:$0xf]
    %v106 = vld [vmem:[%s3 + $0x2c] sm:$0xf]
    %v107 = vld [vmem:[%s3 + $0x30] sm:$0xf]
    %v108 = vld [vmem:[%s3 + $0x34] sm:$0xf]
    %v109 = vld [vmem:[%s3 + $0x38] sm:$0xf]
    %v110 = vld [vmem:[%s3 + $0x3c] sm:$0xf]
    %v111 = vld [vmem:[%s4] sm:$0x1]
    %v113 = vlaneseq
    %v114 = vshrl.u32 %v113, 7
    %v115 = vsub.s32 0, %v114
    %v116 = vrot.slane %v111, %v115
    %v134 = vunpack.c.l.b16 %v95
    %v135 = vunpack.c.l.b16 %v96
    %v136 = vunpack.c.l.b16 %v97
    %v137 = vunpack.c.l.b16 %v98
    %v138 = vunpack.c.l.b16 %v99
    %v139 = vunpack.c.l.b16 %v100
    %v140 = vunpack.c.l.b16 %v101
    %v141 = vunpack.c.l.b16 %v102
    %v142 = vunpack.c.l.b16 %v103
    %v143 = vunpack.c.l.b16 %v104
    %v144 = vunpack.c.l.b16 %v105
    %v145 = vunpack.c.l.b16 %v106
    %v146 = vunpack.c.l.b16 %v107
    %v147 = vunpack.c.l.b16 %v108
    %v148 = vunpack.c.l.b16 %v109
    %v149 = vunpack.c.l.b16 %v110
    %v150 = vpack.c.b16 %v135, %v134
    %v151 = vpack.c.b16 %v137, %v136
    %v152 = vpack.c.b16 %v139, %v138
    %v153 = vpack.c.b16 %v141, %v140
    %v154 = vpack.c.b16 %v143, %v142
    %v155 = vpack.c.b16 %v145, %v144
    %v156 = vpack.c.b16 %v147, %v146
    %v157 = vpack.c.b16 %v149, %v148
    %166 = vmatprep.subr.bf16.mxu0 0
    %167 = vmatpush1.bf16.msra.mxu0 %v157
    %168 = vmatprep.subr.bf16.mxu0 0
    %169 = vmatpush1.bf16.msra.mxu0 %v156
    %170 = vmatprep.subr.bf16.mxu0 0
    %171 = vmatpush1.bf16.msra.mxu0 %v155
    %172 = vmatprep.subr.bf16.mxu0 0
    %173 = vmatpush1.bf16.msra.mxu0 %v154
    %174 = vmatprep.subr.bf16.mxu0 0
    %175 = vmatpush1.bf16.msra.mxu0 %v153
    %176 = vmatprep.subr.bf16.mxu0 0
    %177 = vmatpush1.bf16.msra.mxu0 %v152
    %178 = vmatprep.subr.bf16.mxu0 0
    %179 = vmatpush1.bf16.msra.mxu0 %v151
    %180 = vmatprep.subr.bf16.mxu0 0
    %181 = vmatpush1.bf16.msra.mxu0 %v150
    %182 = vmatprep.subr.bf16.mxu0 0
    %183 = vmatpush2.bf16.msra.mxu0 0
    %184 = vmatprep.subr.bf16.mxu0 0
    %185 = vmatpush2.bf16.msra.mxu0 0
    %186 = vmatprep.subr.bf16.mxu0 0
    %187 = vmatpush2.bf16.msra.mxu0 0
    %188 = vmatprep.subr.bf16.mxu0 0
    %189 = vmatpush2.bf16.msra.mxu0 0
    %190 = vmatprep.subr.bf16.mxu0 0
    %191 = vmatpush2.bf16.msra.mxu0 0
    %192 = vmatprep.subr.bf16.mxu0 0
    %193 = vmatpush2.bf16.msra.mxu0 0
    %194 = vmatprep.subr.bf16.mxu0 0
    %195 = vmatpush2.bf16.msra.mxu0 0
    %196 = vmatprep.subr.bf16.mxu0 0
    %197 = vmatpush2.bf16.msra.mxu0 0
    %198 = vmatprep.mubr.bf16.mxu0 0
    %199 = vmatmul.mubr.bf16.gmra.mxu0 %v93
    %v200 = vpop.f32.mrf.mxu0
    %v201 = vadd.f32 %v116, %v200
    %v202 = vpop.f32.mrf.mxu0
    %v203 = vpop.f32.mrf.mxu0
    %v204 = vadd.f32 %v116, %v203
    %v205 = vpop.f32.mrf.mxu0
    %206 = vmatprep.mubr.bf16.mxu0 0
    %207 = vmatmul.mubr.bf16.gmra.mxu0 %v94
    %v208 = vpop.f32.mrf.mxu0
    %v209 = vadd.f32 %v116, %v208
    %v210 = vpop.f32.mrf.mxu0
    %v211 = vpop.f32.mrf.mxu0
    %v212 = vadd.f32 %v116, %v211
    %v213 = vpop.f32.mrf.mxu0
    %214 = vdwg.mxu0
    %215 = vst [vmem:[#allocation2] sm:$0xff] %v201
    %216 = vst [vmem:[#allocation2 + $0x8] sm:$0xff] %v204
    %217 = vst [vmem:[#allocation2 + $0x10] sm:$0xff] %v209
    %218 = vst [vmem:[#allocation2 + $0x18] sm:$0xff] %v212
    // Predicated region
    $region22: #{_lambda_.13} parent=1 // pred_check
      _
    $region23: #{_lambda_.13} parent=1 // pred_check_branch
      %220 = sbr.rel (0) target = $region25
    $region24: #{_lambda_.13} parent=1 // pred_region
      %s222 = ssub.s32 512, 512
      %223 = vsyncadd [#allocation3], %s222
      %s224 = sshll.u32 [#allocation2], 4
      %s225 = int_to_ptr.vmem [resolvable:$true] %s224
      %230 = dma.vmem_to_hbm [thread:$0]  %s225, 512, %s5, [#allocation3], 128, 128, 8
    $region25: #{_lambda_.13} parent=1 // pred_fallthru
      _
    // Predicated region
    $region26: #{_lambda_.13} parent=1 // pred_check
      _
    $region27: #{_lambda_.13} parent=1 // pred_check_branch
      %232 = sbr.rel (0) target = $region29
    $region28: #{_lambda_.13} parent=1 // pred_region
      %233 = dma.done [#allocation3], 512
    $region29: #{_lambda_.13} parent=1 // pred_fallthru
      _
    %234 = vsyncpa [#allocation3], 1

// kernel: _lambda_.8
$region0: #{_lambda_.8}
  #allocation0 [shape = 'u32[]', space=smem, size = 0x4, offset = 0x4, fixed_abs, tag = 'smem constant byte address 0x4 - core index']
  #allocation1 [shape = 'u32[144,128]{1,0:T(1,128)}', space=vmem, size = 0x12000, scoped, tag = 'internal scratch']
  %s0 = inlined_call_operand.vmem [shape: f32[2,4,128], index: 0, kind: input, shape index: {}]
  %s1 = inlined_call_operand.vmem [shape: f32[1,128], index: 1, kind: input, shape index: {}]
  %s2 = inlined_call_operand.vmem [shape: f32[1,128], index: 2, kind: input, shape index: {}]
  %s3 = inlined_call_operand.vmem [shape: bf16[128,384], index: 3, kind: input, shape index: {}]
  %s4 = inlined_call_operand.vmem [shape: f32[1,384], index: 4, kind: input, shape index: {}]
  %s5 = inlined_call_operand.vmem [shape: bf16[128,128], index: 5, kind: input, shape index: {}]
  %s6 = inlined_call_operand.vmem [shape: f32[1,128], index: 6, kind: input, shape index: {}]
  %s7 = inlined_call_operand.vmem [shape: f32[1,128], index: 7, kind: input, shape index: {}]
  %s8 = inlined_call_operand.vmem [shape: f32[1,128], index: 8, kind: input, shape index: {}]
  %s9 = inlined_call_operand.vmem [shape: bf16[128,512], index: 9, kind: input, shape index: {}]
  %s10 = inlined_call_operand.vmem [shape: f32[1,512], index: 10, kind: input, shape index: {}]
  %s11 = inlined_call_operand.vmem [shape: bf16[512,128], index: 11, kind: input, shape index: {}]
  %s12 = inlined_call_operand.vmem [shape: f32[1,128], index: 12, kind: input, shape index: {}]
  %s13 = inlined_call_operand.vmem [shape: f32[2,4,128], index: 13, kind: output, shape index: {}]
  %s14 = sld [smem:[#allocation0]]
  $region62: #{_lambda_.8} parent=0
    _
  %s16 = ssub.s32 1, %s14
  %s17 = scalar_select 0, %s16, %s14
  // Predicated region
  $region2: #{_lambda_.8} parent=0 // pred_check
    _
  $region3: #{_lambda_.8} parent=0 // pred_check_branch
    %19 = sbr.rel (0) target = $region5
  $region4: #{_lambda_.8} parent=0 // pred_region
    _
  $region5: #{_lambda_.8} parent=0 // pred_fallthru
    _
  // Predicated region
  $region6: #{_lambda_.8} parent=0 // pred_check
    _
  $region7: #{_lambda_.8} parent=0 // pred_check_branch
    %21 = sbr.rel (0) target = $region9
  $region8: #{_lambda_.8} parent=0 // pred_region
    _
  $region9: #{_lambda_.8} parent=0 // pred_fallthru
    _
  // Predicated region
  $region10: #{_lambda_.8} parent=0 // pred_check
    _
  $region11: #{_lambda_.8} parent=0 // pred_check_branch
    %23 = sbr.rel (0) target = $region13
  $region12: #{_lambda_.8} parent=0 // pred_region
    _
  $region13: #{_lambda_.8} parent=0 // pred_fallthru
    _
  // Predicated region
  $region14: #{_lambda_.8} parent=0 // pred_check
    _
  $region15: #{_lambda_.8} parent=0 // pred_check_branch
    %25 = sbr.rel (0) target = $region17
  $region16: #{_lambda_.8} parent=0 // pred_region
    _
  $region17: #{_lambda_.8} parent=0 // pred_fallthru
    _
  // Predicated region
  $region18: #{_lambda_.8} parent=0 // pred_check
    _
  $region19: #{_lambda_.8} parent=0 // pred_check_branch
    %27 = sbr.rel (0) target = $region21
  $region20: #{_lambda_.8} parent=0 // pred_region
    _
  $region21: #{_lambda_.8} parent=0 // pred_fallthru
    _
  // Predicated region
  $region22: #{_lambda_.8} parent=0 // pred_check
    _
  $region23: #{_lambda_.8} parent=0 // pred_check_branch
    %29 = sbr.rel (0) target = $region25
  $region24: #{_lambda_.8} parent=0 // pred_region
    _
  $region25: #{_lambda_.8} parent=0 // pred_fallthru
    _
  // Predicated region
  $region26: #{_lambda_.8} parent=0 // pred_check
    _
  $region27: #{_lambda_.8} parent=0 // pred_check_branch
    %31 = sbr.rel (0) target = $region29
  $region28: #{_lambda_.8} parent=0 // pred_region
    _
  $region29: #{_lambda_.8} parent=0 // pred_fallthru
    _
  // Predicated region
  $region30: #{_lambda_.8} parent=0 // pred_check
    _
  $region31: #{_lambda_.8} parent=0 // pred_check_branch
    %33 = sbr.rel (0) target = $region33
  $region32: #{_lambda_.8} parent=0 // pred_region
    _
  $region33: #{_lambda_.8} parent=0 // pred_fallthru
    _
  // Predicated region
  $region34: #{_lambda_.8} parent=0 // pred_check
    _
  $region35: #{_lambda_.8} parent=0 // pred_check_branch
    %35 = sbr.rel (0) target = $region37
  $region36: #{_lambda_.8} parent=0 // pred_region
    _
  $region37: #{_lambda_.8} parent=0 // pred_fallthru
    _
  // Predicated region
  $region38: #{_lambda_.8} parent=0 // pred_check
    _
  $region39: #{_lambda_.8} parent=0 // pred_check_branch
    %37 = sbr.rel (0) target = $region41
  $region40: #{_lambda_.8} parent=0 // pred_region
    _
  $region41: #{_lambda_.8} parent=0 // pred_fallthru
    _
  // Predicated region
  $region42: #{_lambda_.8} parent=0 // pred_check
    _
  $region43: #{_lambda_.8} parent=0 // pred_check_branch
    %39 = sbr.rel (0) target = $region45
  $region44: #{_lambda_.8} parent=0 // pred_region
    _
  $region45: #{_lambda_.8} parent=0 // pred_fallthru
    _
  // Predicated region
  $region46: #{_lambda_.8} parent=0 // pred_check
    _
  $region47: #{_lambda_.8} parent=0 // pred_check_branch
    %41 = sbr.rel (0) target = $region49
  $region48: #{_lambda_.8} parent=0 // pred_region
    _
  $region49: #{_lambda_.8} parent=0 // pred_fallthru
    _
  // Predicated region
  $region50: #{_lambda_.8} parent=0 // pred_check
    _
  $region51: #{_lambda_.8} parent=0 // pred_check_branch
    %43 = sbr.rel (0) target = $region53
  $region52: #{_lambda_.8} parent=0 // pred_region
    _
  $region53: #{_lambda_.8} parent=0 // pred_fallthru
    _
  %v45 = vld [vmem:[%s0] sm:$0xf]
  %v46 = vld [vmem:[%s0 + $0x4] sm:$0xf]
  %v47 = vld [vmem:[%s1] sm:$0x1]
  %v48 = vld [vmem:[%s2] sm:$0x1]
  %v51 = vcombine.low %v45, %v46
  %53 = vadd.xlane.f32.xlu0 %v51
  %v54 = vpop.xlane.xlu0 %53
  %v55 = vrcp.pop 128.0
  %v56 = vmul.f32 %v54, %v55
  %v59 = vunpack.c.l.s4 839922192
  %v60 = vunpack.c.0.s8 %v59
  %v61 = vlaneseq
  %v62 = vshrl.u32 %v61, 7
  %v63 = vsub.s32 %v60, %v62
  %v64 = vrot.slane %v56, %v63
  %v66 = vunpack.c.l.s4 1985246804
  %v67 = vunpack.c.0.s8 %v66
  %v68 = vlaneseq
  %v69 = vshrl.u32 %v68, 7
  %v70 = vsub.s32 %v67, %v69
  %v71 = vrot.slane %v56, %v70
  %v74 = vsub.f32 %v45, %v64
  %v75 = vsub.f32 %v46, %v71
  %v76 = vmul.f32 %v74, %v74
  %v77 = vmul.f32 %v75, %v75
  %v80 = vcombine.low %v76, %v77
  %82 = vadd.xlane.f32.xlu0 %v80
  %v83 = vpop.xlane.xlu0 %82
  %v84 = vmul.f32 %v83, %v55
  %v85 = vadd.f32 %v84, 1e-05
  %v86 = vrsqrt.pop %v85
  %v89 = vunpack.c.l.s4 839922192
  %v90 = vunpack.c.0.s8 %v89
  %v91 = vlaneseq
  %v92 = vshrl.u32 %v91, 7
  %v93 = vsub.s32 %v90, %v92
  %v94 = vrot.slane %v86, %v93
  %v96 = vunpack.c.l.s4 1985246804
  %v97 = vunpack.c.0.s8 %v96
  %v98 = vlaneseq
  %v99 = vshrl.u32 %v98, 7
  %v100 = vsub.s32 %v97, %v99
  %v101 = vrot.slane %v86, %v100
  %v104 = vmul.f32 %v74, %v94
  %v105 = vmul.f32 %v75, %v101
  %v107 = vlaneseq
  %v108 = vshrl.u32 %v107, 7
  %v109 = vsub.s32 0, %v108
  %v110 = vrot.slane %v47, %v109
  %v112 = vcombine.high %v110, %v110
  %v114 = vmul.f32 %v104, %v110
  %v115 = vmul.f32 %v105, %v112
  %v117 = vlaneseq
  %v118 = vshrl.u32 %v117, 7
  %v119 = vsub.s32 0, %v118
  %v120 = vrot.slane %v48, %v119
  %v122 = vcombine.high %v120, %v120
  %v124 = vadd.f32 %v114, %v120
  %v125 = vadd.f32 %v115, %v122
  %v128 = vcombine.low %v124, %v125
  %v130 = vpack.c.bf16 %v128, %v128
  %v131 = vld [vmem:[%s3] sm:$0xff]
  %v132 = vld [vmem:[%s3 + $0x8] sm:$0xf]
  %v133 = vld [vmem:[%s3 + $0xc] sm:$0xff]
  %v134 = vld [vmem:[%s3 + $0x14] sm:$0xf]
  %v135 = vld [vmem:[%s3 + $0x18] sm:$0xff]
  %v136 = vld [vmem:[%s3 + $0x20] sm:$0xf]
  %v137 = vld [vmem:[%s3 + $0x24] sm:$0xff]
  %v138 = vld [vmem:[%s3 + $0x2c] sm:$0xf]
  %v139 = vld [vmem:[%s3 + $0x30] sm:$0xff]
  %v140 = vld [vmem:[%s3 + $0x38] sm:$0xf]
  %v141 = vld [vmem:[%s3 + $0x3c] sm:$0xff]
  %v142 = vld [vmem:[%s3 + $0x44] sm:$0xf]
  %v143 = vld [vmem:[%s3 + $0x48] sm:$0xff]
  %v144 = vld [vmem:[%s3 + $0x50] sm:$0xf]
  %v145 = vld [vmem:[%s3 + $0x54] sm:$0xff]
  %v146 = vld [vmem:[%s3 + $0x5c] sm:$0xf]
  %v147 = vld [vmem:[%s3 + $0x60] sm:$0xff]
  %v148 = vld [vmem:[%s3 + $0x68] sm:$0xf]
  %v149 = vld [vmem:[%s3 + $0x6c] sm:$0xff]
  %v150 = vld [vmem:[%s3 + $0x74] sm:$0xf]
  %v151 = vld [vmem:[%s3 + $0x78] sm:$0xff]
  %v152 = vld [vmem:[%s3 + $0x80] sm:$0xf]
  %v153 = vld [vmem:[%s3 + $0x84] sm:$0xff]
  %v154 = vld [vmem:[%s3 + $0x8c] sm:$0xf]
  %v155 = vld [vmem:[%s3 + $0x90] sm:$0xff]
  %v156 = vld [vmem:[%s3 + $0x98] sm:$0xf]
  %v157 = vld [vmem:[%s3 + $0x9c] sm:$0xff]
  %v158 = vld [vmem:[%s3 + $0xa4] sm:$0xf]
  %v159 = vld [vmem:[%s3 + $0xa8] sm:$0xff]
  %v160 = vld [vmem:[%s3 + $0xb0] sm:$0xf]
  %v161 = vld [vmem:[%s3 + $0xb4] sm:$0xff]
  %v162 = vld [vmem:[%s3 + $0xbc] sm:$0xf]
  %v163 = vld [vmem:[%s4] sm:$0x7]
  %v165 = vlaneseq
  %v166 = vshrl.u32 %v165, 7
  %v167 = vsub.s32 0, %v166
  %v168 = vrot.slane %v163, %v167
  %v169 = vlaneseq
  %v170 = vshrl.u32 %v169, 7
  %v171 = vsub.s32 1, %v170
  %v172 = vrot.slane %v163, %v171
  %v173 = vlaneseq
  %v174 = vshrl.u32 %v173, 7
  %v175 = vsub.s32 2, %v174
  %v176 = vrot.slane %v163, %v175
  %v212 = vunpack.c.l.b16 %v131
  %v213 = vunpack.c.h.b16 %v131
  %v214 = vunpack.c.l.b16 %v132
  %v215 = vunpack.c.l.b16 %v133
  %v216 = vunpack.c.h.b16 %v133
  %v217 = vunpack.c.l.b16 %v134
  %v218 = vunpack.c.l.b16 %v135
  %v219 = vunpack.c.h.b16 %v135
  %v220 = vunpack.c.l.b16 %v136
  %v221 = vunpack.c.l.b16 %v137
  %v222 = vunpack.c.h.b16 %v137
  %v223 = vunpack.c.l.b16 %v138
  %v224 = vunpack.c.l.b16 %v139
  %v225 = vunpack.c.h.b16 %v139
  %v226 = vunpack.c.l.b16 %v140
  %v227 = vunpack.c.l.b16 %v141
  %v228 = vunpack.c.h.b16 %v141
  %v229 = vunpack.c.l.b16 %v142
  %v230 = vunpack.c.l.b16 %v143
  %v231 = vunpack.c.h.b16 %v143
  %v232 = vunpack.c.l.b16 %v144
  %v233 = vunpack.c.l.b16 %v145
  %v234 = vunpack.c.h.b16 %v145
  %v235 = vunpack.c.l.b16 %v146
  %v236 = vunpack.c.l.b16 %v147
  %v237 = vunpack.c.h.b16 %v147
  %v238 = vunpack.c.l.b16 %v148
  %v239 = vunpack.c.l.b16 %v149
  %v240 = vunpack.c.h.b16 %v149
  %v241 = vunpack.c.l.b16 %v150
  %v242 = vunpack.c.l.b16 %v151
  %v243 = vunpack.c.h.b16 %v151
  %v244 = vunpack.c.l.b16 %v152
  %v245 = vunpack.c.l.b16 %v153
  %v246 = vunpack.c.h.b16 %v153
  %v247 = vunpack.c.l.b16 %v154
  %v248 = vunpack.c.l.b16 %v155
  %v249 = vunpack.c.h.b16 %v155
  %v250 = vunpack.c.l.b16 %v156
  %v251 = vunpack.c.l.b16 %v157
  %v252 = vunpack.c.h.b16 %v157
  %v253 = vunpack.c.l.b16 %v158
  %v254 = vunpack.c.l.b16 %v159
  %v255 = vunpack.c.h.b16 %v159
  %v256 = vunpack.c.l.b16 %v160
  %v257 = vunpack.c.l.b16 %v161
  %v258 = vunpack.c.h.b16 %v161
  %v259 = vunpack.c.l.b16 %v162
  %v260 = vpack.c.b16 %v215, %v212
  %v261 = vpack.c.b16 %v216, %v213
  %v262 = vpack.c.b16 %v217, %v214
  %v263 = vpack.c.b16 %v221, %v218
  %v264 = vpack.c.b16 %v222, %v219
  %v265 = vpack.c.b16 %v223, %v220
  %v266 = vpack.c.b16 %v227, %v224
  %v267 = vpack.c.b16 %v228, %v225
  %v268 = vpack.c.b16 %v229, %v226
  %v269 = vpack.c.b16 %v233, %v230
  %v270 = vpack.c.b16 %v234, %v231
  %v271 = vpack.c.b16 %v235, %v232
  %v272 = vpack.c.b16 %v239, %v236
  %v273 = vpack.c.b16 %v240, %v237
  %v274 = vpack.c.b16 %v241, %v238
  %v275 = vpack.c.b16 %v245, %v242
  %v276 = vpack.c.b16 %v246, %v243
  %v277 = vpack.c.b16 %v247, %v244
  %v278 = vpack.c.b16 %v251, %v248
  %v279 = vpack.c.b16 %v252, %v249
  %v280 = vpack.c.b16 %v253, %v250
  %v281 = vpack.c.b16 %v257, %v254
  %v282 = vpack.c.b16 %v258, %v255
  %v283 = vpack.c.b16 %v259, %v256
  %308 = vmatprep.subr.bf16.mxu0 %v282
  %309 = vmatpush1.bf16.msra.mxu0 %v281
  %310 = vmatprep.subr.bf16.mxu0 %v279
  %311 = vmatpush1.bf16.msra.mxu0 %v278
  %312 = vmatprep.subr.bf16.mxu0 %v276
  %313 = vmatpush1.bf16.msra.mxu0 %v275
  %314 = vmatprep.subr.bf16.mxu0 %v273
  %315 = vmatpush1.bf16.msra.mxu0 %v272
  %316 = vmatprep.subr.bf16.mxu0 %v270
  %317 = vmatpush1.bf16.msra.mxu0 %v269
  %318 = vmatprep.subr.bf16.mxu0 %v267
  %319 = vmatpush1.bf16.msra.mxu0 %v266
  %320 = vmatprep.subr.bf16.mxu0 %v264
  %321 = vmatpush1.bf16.msra.mxu0 %v263
  %322 = vmatprep.subr.bf16.mxu0 %v261
  %323 = vmatpush1.bf16.msra.mxu0 %v260
  %324 = vmatprep.subr.bf16.mxu0 0
  %325 = vmatpush2.bf16.msra.mxu0 0
  %326 = vmatprep.subr.bf16.mxu0 0
  %327 = vmatpush2.bf16.msra.mxu0 0
  %328 = vmatprep.subr.bf16.mxu0 0
  %329 = vmatpush2.bf16.msra.mxu0 0
  %330 = vmatprep.subr.bf16.mxu0 0
  %331 = vmatpush2.bf16.msra.mxu0 0
  %332 = vmatprep.subr.bf16.mxu0 0
  %333 = vmatpush2.bf16.msra.mxu0 0
  %334 = vmatprep.subr.bf16.mxu0 0
  %335 = vmatpush2.bf16.msra.mxu0 0
  %336 = vmatprep.subr.bf16.mxu0 0
  %337 = vmatpush2.bf16.msra.mxu0 0
  %338 = vmatprep.subr.bf16.mxu0 0
  %339 = vmatpush2.bf16.msra.mxu0 0
  %340 = vmatprep.mubr.bf16.mxu0 0
  %341 = vmatmul.mubr.bf16.gmra.mxu0 %v130
  %v342 = vpop.f32.mrf.mxu0
  %v343 = vadd.f32 %v168, %v342
  %v344 = vpop.f32.mrf.mxu0
  %v345 = vadd.f32 %v172, %v344
  %v346 = vpop.f32.mrf.mxu0
  %v347 = vpop.f32.mrf.mxu0
  %348 = vdwg.mxu0
  %349 = vmatprep.subr.bf16.mxu0 0
  %350 = vmatpush1.bf16.msra.mxu0 %v283
  %351 = vmatprep.subr.bf16.mxu0 0
  %352 = vmatpush1.bf16.msra.mxu0 %v280
  %353 = vmatprep.subr.bf16.mxu0 0
  %354 = vmatpush1.bf16.msra.mxu0 %v277
  %355 = vmatprep.subr.bf16.mxu0 0
  %356 = vmatpush1.bf16.msra.mxu0 %v274
  %357 = vmatprep.subr.bf16.mxu0 0
  %358 = vmatpush1.bf16.msra.mxu0 %v271
  %359 = vmatprep.subr.bf16.mxu0 0
  %360 = vmatpush1.bf16.msra.mxu0 %v268
  %361 = vmatprep.subr.bf16.mxu0 0
  %362 = vmatpush1.bf16.msra.mxu0 %v265
  %363 = vmatprep.subr.bf16.mxu0 0
  %364 = vmatpush1.bf16.msra.mxu0 %v262
  %365 = vmatprep.subr.bf16.mxu0 0
  %366 = vmatpush2.bf16.msra.mxu0 0
  %367 = vmatprep.subr.bf16.mxu0 0
  %368 = vmatpush2.bf16.msra.mxu0 0
  %369 = vmatprep.subr.bf16.mxu0 0
  %370 = vmatpush2.bf16.msra.mxu0 0
  %371 = vmatprep.subr.bf16.mxu0 0
  %372 = vmatpush2.bf16.msra.mxu0 0
  %373 = vmatprep.subr.bf16.mxu0 0
  %374 = vmatpush2.bf16.msra.mxu0 0
  %375 = vmatprep.subr.bf16.mxu0 0
  %376 = vmatpush2.bf16.msra.mxu0 0
  %377 = vmatprep.subr.bf16.mxu0 0
  %378 = vmatpush2.bf16.msra.mxu0 0
  %379 = vmatprep.subr.bf16.mxu0 0
  %380 = vmatpush2.bf16.msra.mxu0 0
  %381 = vmatprep.mubr.bf16.mxu0 0
  %382 = vmatmul.mubr.bf16.gmra.mxu0 %v130
  %v383 = vpop.f32.mrf.mxu0
  %v384 = vadd.f32 %v176, %v383
  %v385 = vpop.f32.mrf.mxu0
  %v386 = vpop.f32.mrf.mxu0
  %v387 = vpop.f32.mrf.mxu0
  %388 = vdwg.mxu0
  %v389 = vpack.c.bf16 %v343, %v343
  %v392 = vunpack.c.l.s4 1983009808
  %v393 = vunpack.c.0.s8 %v392
  %v394 = vlaneseq
  %v395 = vshrl.u32 %v394, 7
  %v396 = vsub.s32 %v393, %v395
  %v397 = vrot.slane %v389, %v396
  %v398 = vcombine.high %v397, %v397
  %v399 = vpack.c.bf16 %v345, %v345
  %v402 = vunpack.c.l.s4 1983009808
  %v403 = vunpack.c.0.s8 %v402
  %v404 = vlaneseq
  %v405 = vshrl.u32 %v404, 7
  %v406 = vsub.s32 %v403, %v405
  %v407 = vrot.slane %v399, %v406
  %v408 = vcombine.high %v407, %v407
  %v409 = vpack.c.bf16 %v384, %v384
  %v412 = vunpack.c.l.s4 1983009808
  %v413 = vunpack.c.0.s8 %v412
  %v414 = vlaneseq
  %v415 = vshrl.u32 %v414, 7
  %v416 = vsub.s32 %v413, %v415
  %v417 = vrot.slane %v409, %v416
  %v418 = vcombine.high %v417, %v417
  %vm419 = vcmask 261120
  %v421 = vsel %vm419, %v397, 0
  %v424 = vsel %vm419, %v407, 0
  %426 = vmatprep.subr.bf16.mxu0 0
  %427 = vmatpush1.bf16.xpose.msra.mxu0 0
  %428 = vmatprep.subr.bf16.mxu0 0
  %429 = vmatpush1.bf16.xpose.msra.mxu0 0
  %430 = vmatprep.subr.bf16.mxu0 0
  %431 = vmatpush1.bf16.xpose.msra.mxu0 0
  %432 = vmatprep.subr.bf16.mxu0 0
  %433 = vmatpush1.bf16.xpose.msra.mxu0 0
  %434 = vmatprep.subr.bf16.mxu0 0
  %435 = vmatpush1.bf16.xpose.msra.mxu0 0
  %436 = vmatprep.subr.bf16.mxu0 0
  %437 = vmatpush1.bf16.xpose.msra.mxu0 0
  %438 = vmatprep.subr.bf16.mxu0 0
  %439 = vmatpush1.bf16.xpose.msra.mxu0 0
  %440 = vmatprep.subr.bf16.mxu0 0
  %441 = vmatpush1.bf16.xpose.msra.mxu0 %v424
  %442 = vmatprep.subr.bf16.mxu0 0
  %443 = vmatpush2.bf16.xpose.msra.mxu0 0
  %444 = vmatprep.subr.bf16.mxu0 0
  %445 = vmatpush2.bf16.xpose.msra.mxu0 0
  %446 = vmatprep.subr.bf16.mxu0 0
  %447 = vmatpush2.bf16.xpose.msra.mxu0 0
  %448 = vmatprep.subr.bf16.mxu0 0
  %449 = vmatpush2.bf16.xpose.msra.mxu0 0
  %450 = vmatprep.subr.bf16.mxu0 0
  %451 = vmatpush2.bf16.xpose.msra.mxu0 0
  %452 = vmatprep.subr.bf16.mxu0 0
  %453 = vmatpush2.bf16.xpose.msra.mxu0 0
  %454 = vmatprep.subr.bf16.mxu0 0
  %455 = vmatpush2.bf16.xpose.msra.mxu0 0
  %456 = vmatprep.subr.bf16.mxu0 0
  %457 = vmatpush2.bf16.xpose.msra.mxu0 0
  %458 = vmatprep.mubr.bf16.mxu0 0
  %459 = vmatmul.mubr.bf16.gmra.mxu0 %v421
  %v460 = vpop.f32.mrf.mxu0
  %v461 = vadd.f32 0.0, %v460
  %v462 = vpop.f32.mrf.mxu0
  %v463 = vpop.f32.mrf.mxu0
  %v464 = vpop.f32.mrf.mxu0
  %465 = vdwg.mxu0
  %v467 = vsel %vm419, %v398, 0
  %v470 = vsel %vm419, %v408, 0
  %472 = vmatprep.subr.bf16.mxu0 0
  %473 = vmatpush1.bf16.xpose.msra.mxu0 0
  %474 = vmatprep.subr.bf16.mxu0 0
  %475 = vmatpush1.bf16.xpose.msra.mxu0 0
  %476 = vmatprep.subr.bf16.mxu0 0
  %477 = vmatpush1.bf16.xpose.msra.mxu0 0
  %478 = vmatprep.subr.bf16.mxu0 0
  %479 = vmatpush1.bf16.xpose.msra.mxu0 0
  %480 = vmatprep.subr.bf16.mxu0 0
  %481 = vmatpush1.bf16.xpose.msra.mxu0 0
  %482 = vmatprep.subr.bf16.mxu0 0
  %483 = vmatpush1.bf16.xpose.msra.mxu0 0
  %484 = vmatprep.subr.bf16.mxu0 0
  %485 = vmatpush1.bf16.xpose.msra.mxu0 0
  %486 = vmatprep.subr.bf16.mxu0 0
  %487 = vmatpush1.bf16.xpose.msra.mxu0 %v470
  %488 = vmatprep.subr.bf16.mxu0 0
  %489 = vmatpush2.bf16.xpose.msra.mxu0 0
  %490 = vmatprep.subr.bf16.mxu0 0
  %491 = vmatpush2.bf16.xpose.msra.mxu0 0
  %492 = vmatprep.subr.bf16.mxu0 0
  %493 = vmatpush2.bf16.xpose.msra.mxu0 0
  %494 = vmatprep.subr.bf16.mxu0 0
  %495 = vmatpush2.bf16.xpose.msra.mxu0 0
  %496 = vmatprep.subr.bf16.mxu0 0
  %497 = vmatpush2.bf16.xpose.msra.mxu0 0
  %498 = vmatprep.subr.bf16.mxu0 0
  %499 = vmatpush2.bf16.xpose.msra.mxu0 0
  %500 = vmatprep.subr.bf16.mxu0 0
  %501 = vmatpush2.bf16.xpose.msra.mxu0 0
  %502 = vmatprep.subr.bf16.mxu0 0
  %503 = vmatpush2.bf16.xpose.msra.mxu0 0
  %504 = vmatprep.mubr.bf16.mxu0 0
  %505 = vmatmul.mubr.bf16.gmra.mxu0 %v467
  %v506 = vpop.f32.mrf.mxu0
  %v507 = vadd.f32 0.0, %v506
  %v508 = vpop.f32.mrf.mxu0
  %v509 = vpop.f32.mrf.mxu0
  %v510 = vpop.f32.mrf.mxu0
  %511 = vdwg.mxu0
  %vm512 = vcmask 27648
  %v513 = vsel %vm512, %v461, -inf
  %514 = vmax.xlane.f32.xlu0 %v513
  %v515 = vpop.xlane.xlu0 %514
  %v516 = vsel %vm512, %v507, -inf
  %517 = vmax.xlane.f32.xlu0 %v516
  %v518 = vpop.xlane.xlu0 %517
  %v519 = vsub.f32 %v461, %v515
  %v520 = vsub.f32 %v507, %v518
  %v521 = vmul.f32 %v519, 1.442695
  %v522 = vpow.pop %v521
  %v523 = vmul.f32 %v520, 1.442695
  %v524 = vpow.pop %v523
  %v525 = vsel %vm512, %v522, 0.0
  %526 = vadd.xlane.f32.xlu0 %v525
  %v527 = vpop.xlane.xlu0 %526
  %v528 = vsel %vm512, %v524, 0.0
  %529 = vadd.xlane.f32.xlu0 %v528
  %v530 = vpop.xlane.xlu0 %529
  %v531 = vrcp.pop %v527
  %v532 = vrcp.pop %v530
  %v533 = vmul.f32 %v522, %v531
  %v534 = vmul.f32 %v524, %v532
  %v535 = vpack.c.bf16 %v533, %v533
  %v536 = vpack.c.bf16 %v534, %v534
  %vm537 = vcmask 31744
  %v539 = vsel %vm537, %v535, 0
  %vm541 = vcmask 1041408
  %v543 = vsel %vm541, %v417, 0
  %545 = vmatprep.subr.bf16.mxu0 0
  %546 = vmatpush1.bf16.msra.mxu0 0
  %547 = vmatprep.subr.bf16.mxu0 0
  %548 = vmatpush1.bf16.msra.mxu0 0
  %549 = vmatprep.subr.bf16.mxu0 0
  %550 = vmatpush1.bf16.msra.mxu0 0
  %551 = vmatprep.subr.bf16.mxu0 0
  %552 = vmatpush1.bf16.msra.mxu0 0
  %553 = vmatprep.subr.bf16.mxu0 0
  %554 = vmatpush1.bf16.msra.mxu0 0
  %555 = vmatprep.subr.bf16.mxu0 0
  %556 = vmatpush1.bf16.msra.mxu0 0
  %557 = vmatprep.subr.bf16.mxu0 0
  %558 = vmatpush1.bf16.msra.mxu0 0
  %559 = vmatprep.subr.bf16.mxu0 0
  %560 = vmatpush1.bf16.msra.mxu0 %v543
  %561 = vmatprep.subr.bf16.mxu0 0
  %562 = vmatpush2.bf16.msra.mxu0 0
  %563 = vmatprep.subr.bf16.mxu0 0
  %564 = vmatpush2.bf16.msra.mxu0 0
  %565 = vmatprep.subr.bf16.mxu0 0
  %566 = vmatpush2.bf16.msra.mxu0 0
  %567 = vmatprep.subr.bf16.mxu0 0
  %568 = vmatpush2.bf16.msra.mxu0 0
  %569 = vmatprep.subr.bf16.mxu0 0
  %570 = vmatpush2.bf16.msra.mxu0 0
  %571 = vmatprep.subr.bf16.mxu0 0
  %572 = vmatpush2.bf16.msra.mxu0 0
  %573 = vmatprep.subr.bf16.mxu0 0
  %574 = vmatpush2.bf16.msra.mxu0 0
  %575 = vmatprep.subr.bf16.mxu0 0
  %576 = vmatpush2.bf16.msra.mxu0 0
  %577 = vmatprep.mubr.bf16.mxu0 0
  %578 = vmatmul.mubr.bf16.gmra.mxu0 %v539
  %v579 = vpop.f32.mrf.mxu0
  %v580 = vadd.f32 0.0, %v579
  %v581 = vpop.f32.mrf.mxu0
  %v582 = vpop.f32.mrf.mxu0
  %v583 = vpop.f32.mrf.mxu0
  %584 = vdwg.mxu0
  %v586 = vsel %vm537, %v536, 0
  %v589 = vsel %vm541, %v418, 0
  %591 = vmatprep.subr.bf16.mxu0 0
  %592 = vmatpush1.bf16.msra.mxu0 0
  %593 = vmatprep.subr.bf16.mxu0 0
  %594 = vmatpush1.bf16.msra.mxu0 0
  %595 = vmatprep.subr.bf16.mxu0 0
  %596 = vmatpush1.bf16.msra.mxu0 0
  %597 = vmatprep.subr.bf16.mxu0 0
  %598 = vmatpush1.bf16.msra.mxu0 0
  %599 = vmatprep.subr.bf16.mxu0 0
  %600 = vmatpush1.bf16.msra.mxu0 0
  %601 = vmatprep.subr.bf16.mxu0 0
  %602 = vmatpush1.bf16.msra.mxu0 0
  %603 = vmatprep.subr.bf16.mxu0 0
  %604 = vmatpush1.bf16.msra.mxu0 0
  %605 = vmatprep.subr.bf16.mxu0 0
  %606 = vmatpush1.bf16.msra.mxu0 %v589
  %607 = vmatprep.subr.bf16.mxu0 0
  %608 = vmatpush2.bf16.msra.mxu0 0
  %609 = vmatprep.subr.bf16.mxu0 0
  %610 = vmatpush2.bf16.msra.mxu0 0
  %611 = vmatprep.subr.bf16.mxu0 0
  %612 = vmatpush2.bf16.msra.mxu0 0
  %613 = vmatprep.subr.bf16.mxu0 0
  %614 = vmatpush2.bf16.msra.mxu0 0
  %615 = vmatprep.subr.bf16.mxu0 0
  %616 = vmatpush2.bf16.msra.mxu0 0
  %617 = vmatprep.subr.bf16.mxu0 0
  %618 = vmatpush2.bf16.msra.mxu0 0
  %619 = vmatprep.subr.bf16.mxu0 0
  %620 = vmatpush2.bf16.msra.mxu0 0
  %621 = vmatprep.subr.bf16.mxu0 0
  %622 = vmatpush2.bf16.msra.mxu0 0
  %623 = vmatprep.mubr.bf16.mxu0 0
  %624 = vmatmul.mubr.bf16.gmra.mxu0 %v586
  %v625 = vpop.f32.mrf.mxu0
  %v626 = vadd.f32 0.0, %v625
  %v627 = vpop.f32.mrf.mxu0
  %v628 = vpop.f32.mrf.mxu0
  %v629 = vpop.f32.mrf.mxu0
  %630 = vdwg.mxu0
  %v631 = vpack.c.bf16 %v580, %v580
  %v632 = vpack.c.bf16 %v626, %v626
  %v634 = vunpack.c.l.s4 1983009808
  %v635 = vunpack.c.0.s8 %v634
  %v636 = vlaneseq
  %v637 = vshrl.u32 %v636, 7
  %v638 = vsub.s32 %v635, %v637
  %v639 = vrot.slane %v397, %v638
  %640 = vrot.lane.b32.xlu0 %v639, 96
  %v641 = vpop.permute.xlu0 %640
  %v643 = vunpack.c.l.s4 1983009808
  %v644 = vunpack.c.0.s8 %v643
  %v645 = vlaneseq
  %v646 = vshrl.u32 %v645, 7
  %v647 = vsub.s32 %v644, %v646
  %v648 = vrot.slane %v407, %v647
  %649 = vrot.lane.b32.xlu0 %v648, 96
  %v650 = vpop.permute.xlu0 %649
  %v652 = vsel %vm419, %v641, 0
  %v655 = vsel %vm419, %v650, 0
  %657 = vmatprep.subr.bf16.mxu0 0
  %658 = vmatpush1.bf16.xpose.msra.mxu0 0
  %659 = vmatprep.subr.bf16.mxu0 0
  %660 = vmatpush1.bf16.xpose.msra.mxu0 0
  %661 = vmatprep.subr.bf16.mxu0 0
  %662 = vmatpush1.bf16.xpose.msra.mxu0 0
  %663 = vmatprep.subr.bf16.mxu0 0
  %664 = vmatpush1.bf16.xpose.msra.mxu0 0
  %665 = vmatprep.subr.bf16.mxu0 0
  %666 = vmatpush1.bf16.xpose.msra.mxu0 0
  %667 = vmatprep.subr.bf16.mxu0 0
  %668 = vmatpush1.bf16.xpose.msra.mxu0 0
  %669 = vmatprep.subr.bf16.mxu0 0
  %670 = vmatpush1.bf16.xpose.msra.mxu0 0
  %671 = vmatprep.subr.bf16.mxu0 0
  %672 = vmatpush1.bf16.xpose.msra.mxu0 %v655
  %673 = vmatprep.subr.bf16.mxu0 0
  %674 = vmatpush2.bf16.xpose.msra.mxu0 0
  %675 = vmatprep.subr.bf16.mxu0 0
  %676 = vmatpush2.bf16.xpose.msra.mxu0 0
  %677 = vmatprep.subr.bf16.mxu0 0
  %678 = vmatpush2.bf16.xpose.msra.mxu0 0
  %679 = vmatprep.subr.bf16.mxu0 0
  %680 = vmatpush2.bf16.xpose.msra.mxu0 0
  %681 = vmatprep.subr.bf16.mxu0 0
  %682 = vmatpush2.bf16.xpose.msra.mxu0 0
  %683 = vmatprep.subr.bf16.mxu0 0
  %684 = vmatpush2.bf16.xpose.msra.mxu0 0
  %685 = vmatprep.subr.bf16.mxu0 0
  %686 = vmatpush2.bf16.xpose.msra.mxu0 0
  %687 = vmatprep.subr.bf16.mxu0 0
  %688 = vmatpush2.bf16.xpose.msra.mxu0 0
  %689 = vmatprep.mubr.bf16.mxu0 0
  %690 = vmatmul.mubr.bf16.gmra.mxu0 %v652
  %v691 = vpop.f32.mrf.mxu0
  %v692 = vadd.f32 0.0, %v691
  %v693 = vpop.f32.mrf.mxu0
  %v694 = vpop.f32.mrf.mxu0
  %v695 = vpop.f32.mrf.mxu0
  %696 = vdwg.mxu0
  %v698 = vunpack.c.l.s4 1983009808
  %v699 = vunpack.c.0.s8 %v698
  %v700 = vlaneseq
  %v701 = vshrl.u32 %v700, 7
  %v702 = vsub.s32 %v699, %v701
  %v703 = vrot.slane %v398, %v702
  %704 = vrot.lane.b32.xlu0 %v703, 96
  %v705 = vpop.permute.xlu0 %704
  %v707 = vunpack.c.l.s4 1983009808
  %v708 = vunpack.c.0.s8 %v707
  %v709 = vlaneseq
  %v710 = vshrl.u32 %v709, 7
  %v711 = vsub.s32 %v708, %v710
  %v712 = vrot.slane %v408, %v711
  %713 = vrot.lane.b32.xlu0 %v712, 96
  %v714 = vpop.permute.xlu0 %713
  %v716 = vsel %vm419, %v705, 0
  %v719 = vsel %vm419, %v714, 0
  %721 = vmatprep.subr.bf16.mxu0 0
  %722 = vmatpush1.bf16.xpose.msra.mxu0 0
  %723 = vmatprep.subr.bf16.mxu0 0
  %724 = vmatpush1.bf16.xpose.msra.mxu0 0
  %725 = vmatprep.subr.bf16.mxu0 0
  %726 = vmatpush1.bf16.xpose.msra.mxu0 0
  %727 = vmatprep.subr.bf16.mxu0 0
  %728 = vmatpush1.bf16.xpose.msra.mxu0 0
  %729 = vmatprep.subr.bf16.mxu0 0
  %730 = vmatpush1.bf16.xpose.msra.mxu0 0
  %731 = vmatprep.subr.bf16.mxu0 0
  %732 = vmatpush1.bf16.xpose.msra.mxu0 0
  %733 = vmatprep.subr.bf16.mxu0 0
  %734 = vmatpush1.bf16.xpose.msra.mxu0 0
  %735 = vmatprep.subr.bf16.mxu0 0
  %736 = vmatpush1.bf16.xpose.msra.mxu0 %v719
  %737 = vmatprep.subr.bf16.mxu0 0
  %738 = vmatpush2.bf16.xpose.msra.mxu0 0
  %739 = vmatprep.subr.bf16.mxu0 0
  %740 = vmatpush2.bf16.xpose.msra.mxu0 0
  %741 = vmatprep.subr.bf16.mxu0 0
  %742 = vmatpush2.bf16.xpose.msra.mxu0 0
  %743 = vmatprep.subr.bf16.mxu0 0
  %744 = vmatpush2.bf16.xpose.msra.mxu0 0
  %745 = vmatprep.subr.bf16.mxu0 0
  %746 = vmatpush2.bf16.xpose.msra.mxu0 0
  %747 = vmatprep.subr.bf16.mxu0 0
  %748 = vmatpush2.bf16.xpose.msra.mxu0 0
  %749 = vmatprep.subr.bf16.mxu0 0
  %750 = vmatpush2.bf16.xpose.msra.mxu0 0
  %751 = vmatprep.subr.bf16.mxu0 0
  %752 = vmatpush2.bf16.xpose.msra.mxu0 0
  %753 = vmatprep.mubr.bf16.mxu0 0
  %754 = vmatmul.mubr.bf16.gmra.mxu0 %v716
  %v755 = vpop.f32.mrf.mxu0
  %v756 = vadd.f32 0.0, %v755
  %v757 = vpop.f32.mrf.mxu0
  %v758 = vpop.f32.mrf.mxu0
  %v759 = vpop.f32.mrf.mxu0
  %760 = vdwg.mxu0
  %v761 = vsel %vm512, %v692, -inf
  %762 = vmax.xlane.f32.xlu0 %v761
  %v763 = vpop.xlane.xlu0 %762
  %v764 = vsel %vm512, %v756, -inf
  %765 = vmax.xlane.f32.xlu0 %v764
  %v766 = vpop.xlane.xlu0 %765
  %v767 = vsub.f32 %v692, %v763
  %v768 = vsub.f32 %v756, %v766
  %v769 = vmul.f32 %v767, 1.442695
  %v770 = vpow.pop %v769
  %v771 = vmul.f32 %v768, 1.442695
  %v772 = vpow.pop %v771
  %v773 = vsel %vm512, %v770, 0.0
  %774 = vadd.xlane.f32.xlu0 %v773
  %v775 = vpop.xlane.xlu0 %774
  %v776 = vsel %vm512, %v772, 0.0
  %777 = vadd.xlane.f32.xlu0 %v776
  %v778 = vpop.xlane.xlu0 %777
  %v779 = vrcp.pop %v775
  %v780 = vrcp.pop %v778
  %v781 = vmul.f32 %v770, %v779
  %v782 = vmul.f32 %v772, %v780
  %v783 = vpack.c.bf16 %v781, %v781
  %v784 = vpack.c.bf16 %v782, %v782
  %v786 = vunpack.c.l.s4 1983009808
  %v787 = vunpack.c.0.s8 %v786
  %v788 = vlaneseq
  %v789 = vshrl.u32 %v788, 7
  %v790 = vsub.s32 %v787, %v789
  %v791 = vrot.slane %v417, %v790
  %792 = vrot.lane.b32.xlu0 %v791, 96
  %v793 = vpop.permute.xlu0 %792
  %v795 = vsel %vm537, %v783, 0
  %v798 = vsel %vm541, %v793, 0
  %800 = vmatprep.subr.bf16.mxu0 0
  %801 = vmatpush1.bf16.msra.mxu0 0
  %802 = vmatprep.subr.bf16.mxu0 0
  %803 = vmatpush1.bf16.msra.mxu0 0
  %804 = vmatprep.subr.bf16.mxu0 0
  %805 = vmatpush1.bf16.msra.mxu0 0
  %806 = vmatprep.subr.bf16.mxu0 0
  %807 = vmatpush1.bf16.msra.mxu0 0
  %808 = vmatprep.subr.bf16.mxu0 0
  %809 = vmatpush1.bf16.msra.mxu0 0
  %810 = vmatprep.subr.bf16.mxu0 0
  %811 = vmatpush1.bf16.msra.mxu0 0
  %812 = vmatprep.subr.bf16.mxu0 0
  %813 = vmatpush1.bf16.msra.mxu0 0
  %814 = vmatprep.subr.bf16.mxu0 0
  %815 = vmatpush1.bf16.msra.mxu0 %v798
  %816 = vmatprep.subr.bf16.mxu0 0
  %817 = vmatpush2.bf16.msra.mxu0 0
  %818 = vmatprep.subr.bf16.mxu0 0
  %819 = vmatpush2.bf16.msra.mxu0 0
  %820 = vmatprep.subr.bf16.mxu0 0
  %821 = vmatpush2.bf16.msra.mxu0 0
  %822 = vmatprep.subr.bf16.mxu0 0
  %823 = vmatpush2.bf16.msra.mxu0 0
  %824 = vmatprep.subr.bf16.mxu0 0
  %825 = vmatpush2.bf16.msra.mxu0 0
  %826 = vmatprep.subr.bf16.mxu0 0
  %827 = vmatpush2.bf16.msra.mxu0 0
  %828 = vmatprep.subr.bf16.mxu0 0
  %829 = vmatpush2.bf16.msra.mxu0 0
  %830 = vmatprep.subr.bf16.mxu0 0
  %831 = vmatpush2.bf16.msra.mxu0 0
  %832 = vmatprep.mubr.bf16.mxu0 0
  %833 = vmatmul.mubr.bf16.gmra.mxu0 %v795
  %v834 = vpop.f32.mrf.mxu0
  %v835 = vadd.f32 0.0, %v834
  %v836 = vpop.f32.mrf.mxu0
  %v837 = vpop.f32.mrf.mxu0
  %v838 = vpop.f32.mrf.mxu0
  %839 = vdwg.mxu0
  %v841 = vunpack.c.l.s4 1983009808
  %v842 = vunpack.c.0.s8 %v841
  %v843 = vlaneseq
  %v844 = vshrl.u32 %v843, 7
  %v845 = vsub.s32 %v842, %v844
  %v846 = vrot.slane %v418, %v845
  %847 = vrot.lane.b32.xlu0 %v846, 96
  %v848 = vpop.permute.xlu0 %847
  %v850 = vsel %vm537, %v784, 0
  %v853 = vsel %vm541, %v848, 0
  %855 = vmatprep.subr.bf16.mxu0 0
  %856 = vmatpush1.bf16.msra.mxu0 0
  %857 = vmatprep.subr.bf16.mxu0 0
  %858 = vmatpush1.bf16.msra.mxu0 0
  %859 = vmatprep.subr.bf16.mxu0 0
  %860 = vmatpush1.bf16.msra.mxu0 0
  %861 = vmatprep.subr.bf16.mxu0 0
  %862 = vmatpush1.bf16.msra.mxu0 0
  %863 = vmatprep.subr.bf16.mxu0 0
  %864 = vmatpush1.bf16.msra.mxu0 0
  %865 = vmatprep.subr.bf16.mxu0 0
  %866 = vmatpush1.bf16.msra.mxu0 0
  %867 = vmatprep.subr.bf16.mxu0 0
  %868 = vmatpush1.bf16.msra.mxu0 0
  %869 = vmatprep.subr.bf16.mxu0 0
  %870 = vmatpush1.bf16.msra.mxu0 %v853
  %871 = vmatprep.subr.bf16.mxu0 0
  %872 = vmatpush2.bf16.msra.mxu0 0
  %873 = vmatprep.subr.bf16.mxu0 0
  %874 = vmatpush2.bf16.msra.mxu0 0
  %875 = vmatprep.subr.bf16.mxu0 0
  %876 = vmatpush2.bf16.msra.mxu0 0
  %877 = vmatprep.subr.bf16.mxu0 0
  %878 = vmatpush2.bf16.msra.mxu0 0
  %879 = vmatprep.subr.bf16.mxu0 0
  %880 = vmatpush2.bf16.msra.mxu0 0
  %881 = vmatprep.subr.bf16.mxu0 0
  %882 = vmatpush2.bf16.msra.mxu0 0
  %883 = vmatprep.subr.bf16.mxu0 0
  %884 = vmatpush2.bf16.msra.mxu0 0
  %885 = vmatprep.subr.bf16.mxu0 0
  %886 = vmatpush2.bf16.msra.mxu0 0
  %887 = vmatprep.mubr.bf16.mxu0 0
  %888 = vmatmul.mubr.bf16.gmra.mxu0 %v850
  %v889 = vpop.f32.mrf.mxu0
  %v890 = vadd.f32 0.0, %v889
  %v891 = vpop.f32.mrf.mxu0
  %v892 = vpop.f32.mrf.mxu0
  %v893 = vpop.f32.mrf.mxu0
  %894 = vdwg.mxu0
  %v895 = vpack.c.bf16 %v835, %v835
  %v896 = vpack.c.bf16 %v890, %v890
  %897 = vrot.lane.b32.xlu0 %v639, 64
  %v898 = vpop.permute.xlu0 %897
  %899 = vrot.lane.b32.xlu0 %v648, 64
  %v900 = vpop.permute.xlu0 %899
  %v902 = vsel %vm419, %v898, 0
  %v905 = vsel %vm419, %v900, 0
  %907 = vmatprep.subr.bf16.mxu0 0
  %908 = vmatpush1.bf16.xpose.msra.mxu0 0
  %909 = vmatprep.subr.bf16.mxu0 0
  %910 = vmatpush1.bf16.xpose.msra.mxu0 0
  %911 = vmatprep.subr.bf16.mxu0 0
  %912 = vmatpush1.bf16.xpose.msra.mxu0 0
  %913 = vmatprep.subr.bf16.mxu0 0
  %914 = vmatpush1.bf16.xpose.msra.mxu0 0
  %915 = vmatprep.subr.bf16.mxu0 0
  %916 = vmatpush1.bf16.xpose.msra.mxu0 0
  %917 = vmatprep.subr.bf16.mxu0 0
  %918 = vmatpush1.bf16.xpose.msra.mxu0 0
  %919 = vmatprep.subr.bf16.mxu0 0
  %920 = vmatpush1.bf16.xpose.msra.mxu0 0
  %921 = vmatprep.subr.bf16.mxu0 0
  %922 = vmatpush1.bf16.xpose.msra.mxu0 %v905
  %923 = vmatprep.subr.bf16.mxu0 0
  %924 = vmatpush2.bf16.xpose.msra.mxu0 0
  %925 = vmatprep.subr.bf16.mxu0 0
  %926 = vmatpush2.bf16.xpose.msra.mxu0 0
  %927 = vmatprep.subr.bf16.mxu0 0
  %928 = vmatpush2.bf16.xpose.msra.mxu0 0
  %929 = vmatprep.subr.bf16.mxu0 0
  %930 = vmatpush2.bf16.xpose.msra.mxu0 0
  %931 = vmatprep.subr.bf16.mxu0 0
  %932 = vmatpush2.bf16.xpose.msra.mxu0 0
  %933 = vmatprep.subr.bf16.mxu0 0
  %934 = vmatpush2.bf16.xpose.msra.mxu0 0
  %935 = vmatprep.subr.bf16.mxu0 0
  %936 = vmatpush2.bf16.xpose.msra.mxu0 0
  %937 = vmatprep.subr.bf16.mxu0 0
  %938 = vmatpush2.bf16.xpose.msra.mxu0 0
  %939 = vmatprep.mubr.bf16.mxu0 0
  %940 = vmatmul.mubr.bf16.gmra.mxu0 %v902
  %v941 = vpop.f32.mrf.mxu0
  %v942 = vadd.f32 0.0, %v941
  %v943 = vpop.f32.mrf.mxu0
  %v944 = vpop.f32.mrf.mxu0
  %v945 = vpop.f32.mrf.mxu0
  %946 = vdwg.mxu0
  %947 = vrot.lane.b32.xlu0 %v703, 64
  %v948 = vpop.permute.xlu0 %947
  %949 = vrot.lane.b32.xlu0 %v712, 64
  %v950 = vpop.permute.xlu0 %949
  %v952 = vsel %vm419, %v948, 0
  %v955 = vsel %vm419, %v950, 0
  %957 = vmatprep.subr.bf16.mxu0 0
  %958 = vmatpush1.bf16.xpose.msra.mxu0 0
  %959 = vmatprep.subr.bf16.mxu0 0
  %960 = vmatpush1.bf16.xpose.msra.mxu0 0
  %961 = vmatprep.subr.bf16.mxu0 0
  %962 = vmatpush1.bf16.xpose.msra.mxu0 0
  %963 = vmatprep.subr.bf16.mxu0 0
  %964 = vmatpush1.bf16.xpose.msra.mxu0 0
  %965 = vmatprep.subr.bf16.mxu0 0
  %966 = vmatpush1.bf16.xpose.msra.mxu0 0
  %967 = vmatprep.subr.bf16.mxu0 0
  %968 = vmatpush1.bf16.xpose.msra.mxu0 0
  %969 = vmatprep.subr.bf16.mxu0 0
  %970 = vmatpush1.bf16.xpose.msra.mxu0 0
  %971 = vmatprep.subr.bf16.mxu0 0
  %972 = vmatpush1.bf16.xpose.msra.mxu0 %v955
  %973 = vmatprep.subr.bf16.mxu0 0
  %974 = vmatpush2.bf16.xpose.msra.mxu0 0
  %975 = vmatprep.subr.bf16.mxu0 0
  %976 = vmatpush2.bf16.xpose.msra.mxu0 0
  %977 = vmatprep.subr.bf16.mxu0 0
  %978 = vmatpush2.bf16.xpose.msra.mxu0 0
  %979 = vmatprep.subr.bf16.mxu0 0
  %980 = vmatpush2.bf16.xpose.msra.mxu0 0
  %981 = vmatprep.subr.bf16.mxu0 0
  %982 = vmatpush2.bf16.xpose.msra.mxu0 0
  %983 = vmatprep.subr.bf16.mxu0 0
  %984 = vmatpush2.bf16.xpose.msra.mxu0 0
  %985 = vmatprep.subr.bf16.mxu0 0
  %986 = vmatpush2.bf16.xpose.msra.mxu0 0
  %987 = vmatprep.subr.bf16.mxu0 0
  %988 = vmatpush2.bf16.xpose.msra.mxu0 0
  %989 = vmatprep.mubr.bf16.mxu0 0
  %990 = vmatmul.mubr.bf16.gmra.mxu0 %v952
  %v991 = vpop.f32.mrf.mxu0
  %v992 = vadd.f32 0.0, %v991
  %v993 = vpop.f32.mrf.mxu0
  %v994 = vpop.f32.mrf.mxu0
  %v995 = vpop.f32.mrf.mxu0
  %996 = vdwg.mxu0
  %v997 = vsel %vm512, %v942, -inf
  %998 = vmax.xlane.f32.xlu0 %v997
  %v999 = vpop.xlane.xlu0 %998
  %v1000 = vsel %vm512, %v992, -inf
  %1001 = vmax.xlane.f32.xlu0 %v1000
  %v1002 = vpop.xlane.xlu0 %1001
  %v1003 = vsub.f32 %v942, %v999
  %v1004 = vsub.f32 %v992, %v1002
  %v1005 = vmul.f32 %v1003, 1.442695
  %v1006 = vpow.pop %v1005
  %v1007 = vmul.f32 %v1004, 1.442695
  %v1008 = vpow.pop %v1007
  %v1009 = vsel %vm512, %v1006, 0.0
  %1010 = vadd.xlane.f32.xlu0 %v1009
  %v1011 = vpop.xlane.xlu0 %1010
  %v1012 = vsel %vm512, %v1008, 0.0
  %1013 = vadd.xlane.f32.xlu0 %v1012
  %v1014 = vpop.xlane.xlu0 %1013
  %v1015 = vrcp.pop %v1011
  %v1016 = vrcp.pop %v1014
  %v1017 = vmul.f32 %v1006, %v1015
  %v1018 = vmul.f32 %v1008, %v1016
  %v1019 = vpack.c.bf16 %v1017, %v1017
  %v1020 = vpack.c.bf16 %v1018, %v1018
  %1021 = vrot.lane.b32.xlu0 %v791, 64
  %v1022 = vpop.permute.xlu0 %1021
  %v1024 = vsel %vm537, %v1019, 0
  %v1027 = vsel %vm541, %v1022, 0
  %1029 = vmatprep.subr.bf16.mxu0 0
  %1030 = vmatpush1.bf16.msra.mxu0 0
  %1031 = vmatprep.subr.bf16.mxu0 0
  %1032 = vmatpush1.bf16.msra.mxu0 0
  %1033 = vmatprep.subr.bf16.mxu0 0
  %1034 = vmatpush1.bf16.msra.mxu0 0
  %1035 = vmatprep.subr.bf16.mxu0 0
  %1036 = vmatpush1.bf16.msra.mxu0 0
  %1037 = vmatprep.subr.bf16.mxu0 0
  %1038 = vmatpush1.bf16.msra.mxu0 0
  %1039 = vmatprep.subr.bf16.mxu0 0
  %1040 = vmatpush1.bf16.msra.mxu0 0
  %1041 = vmatprep.subr.bf16.mxu0 0
  %1042 = vmatpush1.bf16.msra.mxu0 0
  %1043 = vmatprep.subr.bf16.mxu0 0
  %1044 = vmatpush1.bf16.msra.mxu0 %v1027
  %1045 = vmatprep.subr.bf16.mxu0 0
  %1046 = vmatpush2.bf16.msra.mxu0 0
  %1047 = vmatprep.subr.bf16.mxu0 0
  %1048 = vmatpush2.bf16.msra.mxu0 0
  %1049 = vmatprep.subr.bf16.mxu0 0
  %1050 = vmatpush2.bf16.msra.mxu0 0
  %1051 = vmatprep.subr.bf16.mxu0 0
  %1052 = vmatpush2.bf16.msra.mxu0 0
  %1053 = vmatprep.subr.bf16.mxu0 0
  %1054 = vmatpush2.bf16.msra.mxu0 0
  %1055 = vmatprep.subr.bf16.mxu0 0
  %1056 = vmatpush2.bf16.msra.mxu0 0
  %1057 = vmatprep.subr.bf16.mxu0 0
  %1058 = vmatpush2.bf16.msra.mxu0 0
  %1059 = vmatprep.subr.bf16.mxu0 0
  %1060 = vmatpush2.bf16.msra.mxu0 0
  %1061 = vmatprep.mubr.bf16.mxu0 0
  %1062 = vmatmul.mubr.bf16.gmra.mxu0 %v1024
  %v1063 = vpop.f32.mrf.mxu0
  %v1064 = vadd.f32 0.0, %v1063
  %v1065 = vpop.f32.mrf.mxu0
  %v1066 = vpop.f32.mrf.mxu0
  %v1067 = vpop.f32.mrf.mxu0
  %1068 = vdwg.mxu0
  %1069 = vrot.lane.b32.xlu0 %v846, 64
  %v1070 = vpop.permute.xlu0 %1069
  %v1072 = vsel %vm537, %v1020, 0
  %v1075 = vsel %vm541, %v1070, 0
  %1077 = vmatprep.subr.bf16.mxu0 0
  %1078 = vmatpush1.bf16.msra.mxu0 0
  %1079 = vmatprep.subr.bf16.mxu0 0
  %1080 = vmatpush1.bf16.msra.mxu0 0
  %1081 = vmatprep.subr.bf16.mxu0 0
  %1082 = vmatpush1.bf16.msra.mxu0 0
  %1083 = vmatprep.subr.bf16.mxu0 0
  %1084 = vmatpush1.bf16.msra.mxu0 0
  %1085 = vmatprep.subr.bf16.mxu0 0
  %1086 = vmatpush1.bf16.msra.mxu0 0
  %1087 = vmatprep.subr.bf16.mxu0 0
  %1088 = vmatpush1.bf16.msra.mxu0 0
  %1089 = vmatprep.subr.bf16.mxu0 0
  %1090 = vmatpush1.bf16.msra.mxu0 0
  %1091 = vmatprep.subr.bf16.mxu0 0
  %1092 = vmatpush1.bf16.msra.mxu0 %v1075
  %1093 = vmatprep.subr.bf16.mxu0 0
  %1094 = vmatpush2.bf16.msra.mxu0 0
  %1095 = vmatprep.subr.bf16.mxu0 0
  %1096 = vmatpush2.bf16.msra.mxu0 0
  %1097 = vmatprep.subr.bf16.mxu0 0
  %1098 = vmatpush2.bf16.msra.mxu0 0
  %1099 = vmatprep.subr.bf16.mxu0 0
  %1100 = vmatpush2.bf16.msra.mxu0 0
  %1101 = vmatprep.subr.bf16.mxu0 0
  %1102 = vmatpush2.bf16.msra.mxu0 0
  %1103 = vmatprep.subr.bf16.mxu0 0
  %1104 = vmatpush2.bf16.msra.mxu0 0
  %1105 = vmatprep.subr.bf16.mxu0 0
  %1106 = vmatpush2.bf16.msra.mxu0 0
  %1107 = vmatprep.subr.bf16.mxu0 0
  %1108 = vmatpush2.bf16.msra.mxu0 0
  %1109 = vmatprep.mubr.bf16.mxu0 0
  %1110 = vmatmul.mubr.bf16.gmra.mxu0 %v1072
  %v1111 = vpop.f32.mrf.mxu0
  %v1112 = vadd.f32 0.0, %v1111
  %v1113 = vpop.f32.mrf.mxu0
  %v1114 = vpop.f32.mrf.mxu0
  %v1115 = vpop.f32.mrf.mxu0
  %1116 = vdwg.mxu0
  %v1117 = vpack.c.bf16 %v1064, %v1064
  %v1118 = vpack.c.bf16 %v1112, %v1112
  %1119 = vrot.lane.b32.xlu0 %v639, 32
  %v1120 = vpop.permute.xlu0 %1119
  %1121 = vrot.lane.b32.xlu0 %v648, 32
  %v1122 = vpop.permute.xlu0 %1121
  %v1124 = vsel %vm419, %v1120, 0
  %v1127 = vsel %vm419, %v1122, 0
  %1129 = vmatprep.subr.bf16.mxu0 0
  %1130 = vmatpush1.bf16.xpose.msra.mxu0 0
  %1131 = vmatprep.subr.bf16.mxu0 0
  %1132 = vmatpush1.bf16.xpose.msra.mxu0 0
  %1133 = vmatprep.subr.bf16.mxu0 0
  %1134 = vmatpush1.bf16.xpose.msra.mxu0 0
  %1135 = vmatprep.subr.bf16.mxu0 0
  %1136 = vmatpush1.bf16.xpose.msra.mxu0 0
  %1137 = vmatprep.subr.bf16.mxu0 0
  %1138 = vmatpush1.bf16.xpose.msra.mxu0 0
  %1139 = vmatprep.subr.bf16.mxu0 0
  %1140 = vmatpush1.bf16.xpose.msra.mxu0 0
  %1141 = vmatprep.subr.bf16.mxu0 0
  %1142 = vmatpush1.bf16.xpose.msra.mxu0 0
  %1143 = vmatprep.subr.bf16.mxu0 0
  %1144 = vmatpush1.bf16.xpose.msra.mxu0 %v1127
  %1145 = vmatprep.subr.bf16.mxu0 0
  %1146 = vmatpush2.bf16.xpose.msra.mxu0 0
  %1147 = vmatprep.subr.bf16.mxu0 0
  %1148 = vmatpush2.bf16.xpose.msra.mxu0 0
  %1149 = vmatprep.subr.bf16.mxu0 0
  %1150 = vmatpush2.bf16.xpose.msra.mxu0 0
  %1151 = vmatprep.subr.bf16.mxu0 0
  %1152 = vmatpush2.bf16.xpose.msra.mxu0 0
  %1153 = vmatprep.subr.bf16.mxu0 0
  %1154 = vmatpush2.bf16.xpose.msra.mxu0 0
  %1155 = vmatprep.subr.bf16.mxu0 0
  %1156 = vmatpush2.bf16.xpose.msra.mxu0 0
  %1157 = vmatprep.subr.bf16.mxu0 0
  %1158 = vmatpush2.bf16.xpose.msra.mxu0 0
  %1159 = vmatprep.subr.bf16.mxu0 0
  %1160 = vmatpush2.bf16.xpose.msra.mxu0 0
  %1161 = vmatprep.mubr.bf16.mxu0 0
  %1162 = vmatmul.mubr.bf16.gmra.mxu0 %v1124
  %v1163 = vpop.f32.mrf.mxu0
  %v1164 = vadd.f32 0.0, %v1163
  %v1165 = vpop.f32.mrf.mxu0
  %v1166 = vpop.f32.mrf.mxu0
  %v1167 = vpop.f32.mrf.mxu0
  %1168 = vdwg.mxu0
  %1169 = vrot.lane.b32.xlu0 %v703, 32
  %v1170 = vpop.permute.xlu0 %1169
  %1171 = vrot.lane.b32.xlu0 %v712, 32
  %v1172 = vpop.permute.xlu0 %1171
  %v1174 = vsel %vm419, %v1170, 0
  %v1177 = vsel %vm419, %v1172, 0
  %1179 = vmatprep.subr.bf16.mxu0 0
  %1180 = vmatpush1.bf16.xpose.msra.mxu0 0
  %1181 = vmatprep.subr.bf16.mxu0 0
  %1182 = vmatpush1.bf16.xpose.msra.mxu0 0
  %1183 = vmatprep.subr.bf16.mxu0 0
  %1184 = vmatpush1.bf16.xpose.msra.mxu0 0
  %1185 = vmatprep.subr.bf16.mxu0 0
  %1186 = vmatpush1.bf16.xpose.msra.mxu0 0
  %1187 = vmatprep.subr.bf16.mxu0 0
  %1188 = vmatpush1.bf16.xpose.msra.mxu0 0
  %1189 = vmatprep.subr.bf16.mxu0 0
  %1190 = vmatpush1.bf16.xpose.msra.mxu0 0
  %1191 = vmatprep.subr.bf16.mxu0 0
  %1192 = vmatpush1.bf16.xpose.msra.mxu0 0
  %1193 = vmatprep.subr.bf16.mxu0 0
  %1194 = vmatpush1.bf16.xpose.msra.mxu0 %v1177
  %1195 = vmatprep.subr.bf16.mxu0 0
  %1196 = vmatpush2.bf16.xpose.msra.mxu0 0
  %1197 = vmatprep.subr.bf16.mxu0 0
  %1198 = vmatpush2.bf16.xpose.msra.mxu0 0
  %1199 = vmatprep.subr.bf16.mxu0 0
  %1200 = vmatpush2.bf16.xpose.msra.mxu0 0
  %1201 = vmatprep.subr.bf16.mxu0 0
  %1202 = vmatpush2.bf16.xpose.msra.mxu0 0
  %1203 = vmatprep.subr.bf16.mxu0 0
  %1204 = vmatpush2.bf16.xpose.msra.mxu0 0
  %1205 = vmatprep.subr.bf16.mxu0 0
  %1206 = vmatpush2.bf16.xpose.msra.mxu0 0
  %1207 = vmatprep.subr.bf16.mxu0 0
  %1208 = vmatpush2.bf16.xpose.msra.mxu0 0
  %1209 = vmatprep.subr.bf16.mxu0 0
  %1210 = vmatpush2.bf16.xpose.msra.mxu0 0
  %1211 = vmatprep.mubr.bf16.mxu0 0
  %1212 = vmatmul.mubr.bf16.gmra.mxu0 %v1174
  %v1213 = vpop.f32.mrf.mxu0
  %v1214 = vadd.f32 0.0, %v1213
  %v1215 = vpop.f32.mrf.mxu0
  %v1216 = vpop.f32.mrf.mxu0
  %v1217 = vpop.f32.mrf.mxu0
  %1218 = vdwg.mxu0
  %v1219 = vsel %vm512, %v1164, -inf
  %1220 = vmax.xlane.f32.xlu0 %v1219
  %v1221 = vpop.xlane.xlu0 %1220
  %v1222 = vsel %vm512, %v1214, -inf
  %1223 = vmax.xlane.f32.xlu0 %v1222
  %v1224 = vpop.xlane.xlu0 %1223
  %v1225 = vsub.f32 %v1164, %v1221
  %v1226 = vsub.f32 %v1214, %v1224
  %v1227 = vmul.f32 %v1225, 1.442695
  %v1228 = vpow.pop %v1227
  %v1229 = vmul.f32 %v1226, 1.442695
  %v1230 = vpow.pop %v1229
  %v1231 = vsel %vm512, %v1228, 0.0
  %1232 = vadd.xlane.f32.xlu0 %v1231
  %v1233 = vpop.xlane.xlu0 %1232
  %v1234 = vsel %vm512, %v1230, 0.0
  %1235 = vadd.xlane.f32.xlu0 %v1234
  %v1236 = vpop.xlane.xlu0 %1235
  %v1237 = vrcp.pop %v1233
  %v1238 = vrcp.pop %v1236
  %v1239 = vmul.f32 %v1228, %v1237
  %v1240 = vmul.f32 %v1230, %v1238
  %v1241 = vpack.c.bf16 %v1239, %v1239
  %v1242 = vpack.c.bf16 %v1240, %v1240
  %1243 = vrot.lane.b32.xlu0 %v791, 32
  %v1244 = vpop.permute.xlu0 %1243
  %v1246 = vsel %vm537, %v1241, 0
  %v1249 = vsel %vm541, %v1244, 0
  %1251 = vmatprep.subr.bf16.mxu0 0
  %1252 = vmatpush1.bf16.msra.mxu0 0
  %1253 = vmatprep.subr.bf16.mxu0 0
  %1254 = vmatpush1.bf16.msra.mxu0 0
  %1255 = vmatprep.subr.bf16.mxu0 0
  %1256 = vmatpush1.bf16.msra.mxu0 0
  %1257 = vmatprep.subr.bf16.mxu0 0
  %1258 = vmatpush1.bf16.msra.mxu0 0
  %1259 = vmatprep.subr.bf16.mxu0 0
  %1260 = vmatpush1.bf16.msra.mxu0 0
  %1261 = vmatprep.subr.bf16.mxu0 0
  %1262 = vmatpush1.bf16.msra.mxu0 0
  %1263 = vmatprep.subr.bf16.mxu0 0
  %1264 = vmatpush1.bf16.msra.mxu0 0
  %1265 = vmatprep.subr.bf16.mxu0 0
  %1266 = vmatpush1.bf16.msra.mxu0 %v1249
  %1267 = vmatprep.subr.bf16.mxu0 0
  %1268 = vmatpush2.bf16.msra.mxu0 0
  %1269 = vmatprep.subr.bf16.mxu0 0
  %1270 = vmatpush2.bf16.msra.mxu0 0
  %1271 = vmatprep.subr.bf16.mxu0 0
  %1272 = vmatpush2.bf16.msra.mxu0 0
  %1273 = vmatprep.subr.bf16.mxu0 0
  %1274 = vmatpush2.bf16.msra.mxu0 0
  %1275 = vmatprep.subr.bf16.mxu0 0
  %1276 = vmatpush2.bf16.msra.mxu0 0
  %1277 = vmatprep.subr.bf16.mxu0 0
  %1278 = vmatpush2.bf16.msra.mxu0 0
  %1279 = vmatprep.subr.bf16.mxu0 0
  %1280 = vmatpush2.bf16.msra.mxu0 0
  %1281 = vmatprep.subr.bf16.mxu0 0
  %1282 = vmatpush2.bf16.msra.mxu0 0
  %1283 = vmatprep.mubr.bf16.mxu0 0
  %1284 = vmatmul.mubr.bf16.gmra.mxu0 %v1246
  %v1285 = vpop.f32.mrf.mxu0
  %v1286 = vadd.f32 0.0, %v1285
  %v1287 = vpop.f32.mrf.mxu0
  %v1288 = vpop.f32.mrf.mxu0
  %v1289 = vpop.f32.mrf.mxu0
  %1290 = vdwg.mxu0
  %1291 = vrot.lane.b32.xlu0 %v846, 32
  %v1292 = vpop.permute.xlu0 %1291
  %v1294 = vsel %vm537, %v1242, 0
  %v1297 = vsel %vm541, %v1292, 0
  %1299 = vmatprep.subr.bf16.mxu0 0
  %1300 = vmatpush1.bf16.msra.mxu0 0
  %1301 = vmatprep.subr.bf16.mxu0 0
  %1302 = vmatpush1.bf16.msra.mxu0 0
  %1303 = vmatprep.subr.bf16.mxu0 0
  %1304 = vmatpush1.bf16.msra.mxu0 0
  %1305 = vmatprep.subr.bf16.mxu0 0
  %1306 = vmatpush1.bf16.msra.mxu0 0
  %1307 = vmatprep.subr.bf16.mxu0 0
  %1308 = vmatpush1.bf16.msra.mxu0 0
  %1309 = vmatprep.subr.bf16.mxu0 0
  %1310 = vmatpush1.bf16.msra.mxu0 0
  %1311 = vmatprep.subr.bf16.mxu0 0
  %1312 = vmatpush1.bf16.msra.mxu0 0
  %1313 = vmatprep.subr.bf16.mxu0 0
  %1314 = vmatpush1.bf16.msra.mxu0 %v1297
  %1315 = vmatprep.subr.bf16.mxu0 0
  %1316 = vmatpush2.bf16.msra.mxu0 0
  %1317 = vmatprep.subr.bf16.mxu0 0
  %1318 = vmatpush2.bf16.msra.mxu0 0
  %1319 = vmatprep.subr.bf16.mxu0 0
  %1320 = vmatpush2.bf16.msra.mxu0 0
  %1321 = vmatprep.subr.bf16.mxu0 0
  %1322 = vmatpush2.bf16.msra.mxu0 0
  %1323 = vmatprep.subr.bf16.mxu0 0
  %1324 = vmatpush2.bf16.msra.mxu0 0
  %1325 = vmatprep.subr.bf16.mxu0 0
  %1326 = vmatpush2.bf16.msra.mxu0 0
  %1327 = vmatprep.subr.bf16.mxu0 0
  %1328 = vmatpush2.bf16.msra.mxu0 0
  %1329 = vmatprep.subr.bf16.mxu0 0
  %1330 = vmatpush2.bf16.msra.mxu0 0
  %1331 = vmatprep.mubr.bf16.mxu0 0
  %1332 = vmatmul.mubr.bf16.gmra.mxu0 %v1294
  %v1333 = vpop.f32.mrf.mxu0
  %v1334 = vadd.f32 0.0, %v1333
  %v1335 = vpop.f32.mrf.mxu0
  %v1336 = vpop.f32.mrf.mxu0
  %v1337 = vpop.f32.mrf.mxu0
  %1338 = vdwg.mxu0
  %v1339 = vpack.c.bf16 %v1286, %v1286
  %v1340 = vpack.c.bf16 %v1334, %v1334
  %1343 = vrot.lane.b32.xlu0 %v895, 32
  %v1344 = vpop.permute.xlu0 %1343
  %1345 = vrot.lane.b32.xlu0 %v896, 32
  %v1346 = vpop.permute.xlu0 %1345
  %1349 = vrot.lane.b32.xlu0 %v1117, 64
  %v1350 = vpop.permute.xlu0 %1349
  %1351 = vrot.lane.b32.xlu0 %v1118, 64
  %v1352 = vpop.permute.xlu0 %1351
  %1355 = vrot.lane.b32.xlu0 %v1339, 96
  %v1356 = vpop.permute.xlu0 %1355
  %1357 = vrot.lane.b32.xlu0 %v1340, 96
  %v1358 = vpop.permute.xlu0 %1357
  %v1361 = vsel %vm419, %v631, %v1344
  %v1364 = vsel %vm419, %v632, %v1346
  %vm1365 = vcmask 523264
  %v1367 = vsel %vm1365, %v1361, %v1350
  %v1369 = vsel %vm1365, %v1364, %v1352
  %vm1370 = vcmask 785408
  %v1372 = vsel %vm1370, %v1367, %v1356
  %v1374 = vsel %vm1370, %v1369, %v1358
  %v1375 = vld [vmem:[%s5] sm:$0xf]
  %v1376 = vld [vmem:[%s5 + $0x4] sm:$0xf]
  %v1377 = vld [vmem:[%s5 + $0x8] sm:$0xf]
  %v1378 = vld [vmem:[%s5 + $0xc] sm:$0xf]
  %v1379 = vld [vmem:[%s5 + $0x10] sm:$0xf]
  %v1380 = vld [vmem:[%s5 + $0x14] sm:$0xf]
  %v1381 = vld [vmem:[%s5 + $0x18] sm:$0xf]
  %v1382 = vld [vmem:[%s5 + $0x1c] sm:$0xf]
  %v1383 = vld [vmem:[%s5 + $0x20] sm:$0xf]
  %v1384 = vld [vmem:[%s5 + $0x24] sm:$0xf]
  %v1385 = vld [vmem:[%s5 + $0x28] sm:$0xf]
  %v1386 = vld [vmem:[%s5 + $0x2c] sm:$0xf]
  %v1387 = vld [vmem:[%s5 + $0x30] sm:$0xf]
  %v1388 = vld [vmem:[%s5 + $0x34] sm:$0xf]
  %v1389 = vld [vmem:[%s5 + $0x38] sm:$0xf]
  %v1390 = vld [vmem:[%s5 + $0x3c] sm:$0xf]
  %v1391 = vld [vmem:[%s6] sm:$0x1]
  %v1393 = vlaneseq
  %v1394 = vshrl.u32 %v1393, 7
  %v1395 = vsub.s32 0, %v1394
  %v1396 = vrot.slane %v1391, %v1395
  %v1400 = vcombine.low %v1372, %v1374
  %v1402 = vunpack.c.l.s4 1983009808
  %v1403 = vunpack.c.0.s8 %v1402
  %v1404 = vlaneseq
  %v1405 = vshrl.u32 %v1404, 7
  %v1406 = vsub.s32 %v1403, %v1405
  %v1407 = vrot.slane %v1400, %v1406
  %v1425 = vunpack.c.l.b16 %v1375
  %v1426 = vunpack.c.l.b16 %v1376
  %v1427 = vunpack.c.l.b16 %v1377
  %v1428 = vunpack.c.l.b16 %v1378
  %v1429 = vunpack.c.l.b16 %v1379
  %v1430 = vunpack.c.l.b16 %v1380
  %v1431 = vunpack.c.l.b16 %v1381
  %v1432 = vunpack.c.l.b16 %v1382
  %v1433 = vunpack.c.l.b16 %v1383
  %v1434 = vunpack.c.l.b16 %v1384
  %v1435 = vunpack.c.l.b16 %v1385
  %v1436 = vunpack.c.l.b16 %v1386
  %v1437 = vunpack.c.l.b16 %v1387
  %v1438 = vunpack.c.l.b16 %v1388
  %v1439 = vunpack.c.l.b16 %v1389
  %v1440 = vunpack.c.l.b16 %v1390
  %v1441 = vpack.c.b16 %v1426, %v1425
  %v1442 = vpack.c.b16 %v1428, %v1427
  %v1443 = vpack.c.b16 %v1430, %v1429
  %v1444 = vpack.c.b16 %v1432, %v1431
  %v1445 = vpack.c.b16 %v1434, %v1433
  %v1446 = vpack.c.b16 %v1436, %v1435
  %v1447 = vpack.c.b16 %v1438, %v1437
  %v1448 = vpack.c.b16 %v1440, %v1439
  %1457 = vmatprep.subr.bf16.mxu0 0
  %1458 = vmatpush1.bf16.msra.mxu0 %v1448
  %1459 = vmatprep.subr.bf16.mxu0 0
  %1460 = vmatpush1.bf16.msra.mxu0 %v1447
  %1461 = vmatprep.subr.bf16.mxu0 0
  %1462 = vmatpush1.bf16.msra.mxu0 %v1446
  %1463 = vmatprep.subr.bf16.mxu0 0
  %1464 = vmatpush1.bf16.msra.mxu0 %v1445
  %1465 = vmatprep.subr.bf16.mxu0 0
  %1466 = vmatpush1.bf16.msra.mxu0 %v1444
  %1467 = vmatprep.subr.bf16.mxu0 0
  %1468 = vmatpush1.bf16.msra.mxu0 %v1443
  %1469 = vmatprep.subr.bf16.mxu0 0
  %1470 = vmatpush1.bf16.msra.mxu0 %v1442
  %1471 = vmatprep.subr.bf16.mxu0 0
  %1472 = vmatpush1.bf16.msra.mxu0 %v1441
  %1473 = vmatprep.subr.bf16.mxu0 0
  %1474 = vmatpush2.bf16.msra.mxu0 0
  %1475 = vmatprep.subr.bf16.mxu0 0
  %1476 = vmatpush2.bf16.msra.mxu0 0
  %1477 = vmatprep.subr.bf16.mxu0 0
  %1478 = vmatpush2.bf16.msra.mxu0 0
  %1479 = vmatprep.subr.bf16.mxu0 0
  %1480 = vmatpush2.bf16.msra.mxu0 0
  %1481 = vmatprep.subr.bf16.mxu0 0
  %1482 = vmatpush2.bf16.msra.mxu0 0
  %1483 = vmatprep.subr.bf16.mxu0 0
  %1484 = vmatpush2.bf16.msra.mxu0 0
  %1485 = vmatprep.subr.bf16.mxu0 0
  %1486 = vmatpush2.bf16.msra.mxu0 0
  %1487 = vmatprep.subr.bf16.mxu0 0
  %1488 = vmatpush2.bf16.msra.mxu0 0
  %1489 = vmatprep.mubr.bf16.mxu0 0
  %1490 = vmatmul.mubr.bf16.gmra.mxu0 %v1407
  %v1491 = vpop.f32.mrf.mxu0
  %v1492 = vadd.f32 %v1396, %v1491
  %v1493 = vpop.f32.mrf.mxu0
  %v1494 = vpop.f32.mrf.mxu0
  %v1495 = vpop.f32.mrf.mxu0
  %1496 = vdwg.mxu0
  %v1498 = vcombine.high %v1492, %v1492
  %v1500 = vadd.f32 %v45, %v1492
  %v1501 = vadd.f32 %v46, %v1498
  %v1502 = vld [vmem:[%s7] sm:$0x1]
  %v1503 = vld [vmem:[%s8] sm:$0x1]
  %v1506 = vcombine.low %v1500, %v1501
  %1508 = vadd.xlane.f32.xlu0 %v1506
  %v1509 = vpop.xlane.xlu0 %1508
  %v1510 = vmul.f32 %v1509, %v55
  %v1513 = vunpack.c.l.s4 839922192
  %v1514 = vunpack.c.0.s8 %v1513
  %v1515 = vlaneseq
  %v1516 = vshrl.u32 %v1515, 7
  %v1517 = vsub.s32 %v1514, %v1516
  %v1518 = vrot.slane %v1510, %v1517
  %v1520 = vunpack.c.l.s4 1985246804
  %v1521 = vunpack.c.0.s8 %v1520
  %v1522 = vlaneseq
  %v1523 = vshrl.u32 %v1522, 7
  %v1524 = vsub.s32 %v1521, %v1523
  %v1525 = vrot.slane %v1510, %v1524
  %v1528 = vsub.f32 %v1500, %v1518
  %v1529 = vsub.f32 %v1501, %v1525
  %v1530 = vmul.f32 %v1528, %v1528
  %v1531 = vmul.f32 %v1529, %v1529
  %v1534 = vcombine.low %v1530, %v1531
  %1536 = vadd.xlane.f32.xlu0 %v1534
  %v1537 = vpop.xlane.xlu0 %1536
  %v1538 = vmul.f32 %v1537, %v55
  %v1539 = vadd.f32 %v1538, 1e-05
  %v1540 = vrsqrt.pop %v1539
  %v1543 = vunpack.c.l.s4 839922192
  %v1544 = vunpack.c.0.s8 %v1543
  %v1545 = vlaneseq
  %v1546 = vshrl.u32 %v1545, 7
  %v1547 = vsub.s32 %v1544, %v1546
  %v1548 = vrot.slane %v1540, %v1547
  %v1550 = vunpack.c.l.s4 1985246804
  %v1551 = vunpack.c.0.s8 %v1550
  %v1552 = vlaneseq
  %v1553 = vshrl.u32 %v1552, 7
  %v1554 = vsub.s32 %v1551, %v1553
  %v1555 = vrot.slane %v1540, %v1554
  %v1558 = vmul.f32 %v1528, %v1548
  %v1559 = vmul.f32 %v1529, %v1555
  %v1561 = vlaneseq
  %v1562 = vshrl.u32 %v1561, 7
  %v1563 = vsub.s32 0, %v1562
  %v1564 = vrot.slane %v1502, %v1563
  %v1566 = vcombine.high %v1564, %v1564
  %v1568 = vmul.f32 %v1558, %v1564
  %v1569 = vmul.f32 %v1559, %v1566
  %v1571 = vlaneseq
  %v1572 = vshrl.u32 %v1571, 7
  %v1573 = vsub.s32 0, %v1572
  %v1574 = vrot.slane %v1503, %v1573
  %v1576 = vcombine.high %v1574, %v1574
  %v1578 = vadd.f32 %v1568, %v1574
  %v1579 = vadd.f32 %v1569, %v1576
  %v1582 = vcombine.low %v1578, %v1579
  %v1584 = vpack.c.bf16 %v1582, %v1582
  %v1585 = vld [vmem:[%s9] sm:$0xff]
  %v1586 = vld [vmem:[%s9 + $0x8] sm:$0xff]
  %v1587 = vld [vmem:[%s9 + $0x10] sm:$0xff]
  %v1588 = vld [vmem:[%s9 + $0x18] sm:$0xff]
  %v1589 = vld [vmem:[%s9 + $0x20] sm:$0xff]
  %v1590 = vld [vmem:[%s9 + $0x28] sm:$0xff]
  %v1591 = vld [vmem:[%s9 + $0x30] sm:$0xff]
  %v1592 = vld [vmem:[%s9 + $0x38] sm:$0xff]
  %v1593 = vld [vmem:[%s9 + $0x40] sm:$0xff]
  %v1594 = vld [vmem:[%s9 + $0x48] sm:$0xff]
  %v1595 = vld [vmem:[%s9 + $0x50] sm:$0xff]
  %v1596 = vld [vmem:[%s9 + $0x58] sm:$0xff]
  %v1597 = vld [vmem:[%s9 + $0x60] sm:$0xff]
  %v1598 = vld [vmem:[%s9 + $0x68] sm:$0xff]
  %v1599 = vld [vmem:[%s9 + $0x70] sm:$0xff]
  %v1600 = vld [vmem:[%s9 + $0x78] sm:$0xff]
  %v1601 = vld [vmem:[%s9 + $0x80] sm:$0xff]
  %v1602 = vld [vmem:[%s9 + $0x88] sm:$0xff]
  %v1603 = vld [vmem:[%s9 + $0x90] sm:$0xff]
  %v1604 = vld [vmem:[%s9 + $0x98] sm:$0xff]
  %v1605 = vld [vmem:[%s9 + $0xa0] sm:$0xff]
  %v1606 = vld [vmem:[%s9 + $0xa8] sm:$0xff]
  %v1607 = vld [vmem:[%s9 + $0xb0] sm:$0xff]
  %v1608 = vld [vmem:[%s9 + $0xb8] sm:$0xff]
  %v1609 = vld [vmem:[%s9 + $0xc0] sm:$0xff]
  %v1610 = vld [vmem:[%s9 + $0xc8] sm:$0xff]
  %v1611 = vld [vmem:[%s9 + $0xd0] sm:$0xff]
  %v1612 = vld [vmem:[%s9 + $0xd8] sm:$0xff]
  %v1613 = vld [vmem:[%s9 + $0xe0] sm:$0xff]
  %v1614 = vld [vmem:[%s9 + $0xe8] sm:$0xff]
  %v1615 = vld [vmem:[%s9 + $0xf0] sm:$0xff]
  %v1616 = vld [vmem:[%s9 + $0xf8] sm:$0xff]
  %v1617 = vld [vmem:[%s10] sm:$0xf]
  %v1619 = vlaneseq
  %v1620 = vshrl.u32 %v1619, 7
  %v1621 = vsub.s32 0, %v1620
  %v1622 = vrot.slane %v1617, %v1621
  %v1623 = vlaneseq
  %v1624 = vshrl.u32 %v1623, 7
  %v1625 = vsub.s32 1, %v1624
  %v1626 = vrot.slane %v1617, %v1625
  %v1627 = vlaneseq
  %v1628 = vshrl.u32 %v1627, 7
  %v1629 = vsub.s32 2, %v1628
  %v1630 = vrot.slane %v1617, %v1629
  %v1631 = vlaneseq
  %v1632 = vshrl.u32 %v1631, 7
  %v1633 = vsub.s32 3, %v1632
  %v1634 = vrot.slane %v1617, %v1633
  %v1671 = vunpack.c.l.b16 %v1585
  %v1672 = vunpack.c.h.b16 %v1585
  %v1673 = vunpack.c.l.b16 %v1586
  %v1674 = vunpack.c.h.b16 %v1586
  %v1675 = vunpack.c.l.b16 %v1587
  %v1676 = vunpack.c.h.b16 %v1587
  %v1677 = vunpack.c.l.b16 %v1588
  %v1678 = vunpack.c.h.b16 %v1588
  %v1679 = vunpack.c.l.b16 %v1589
  %v1680 = vunpack.c.h.b16 %v1589
  %v1681 = vunpack.c.l.b16 %v1590
  %v1682 = vunpack.c.h.b16 %v1590
  %v1683 = vunpack.c.l.b16 %v1591
  %v1684 = vunpack.c.h.b16 %v1591
  %v1685 = vunpack.c.l.b16 %v1592
  %v1686 = vunpack.c.h.b16 %v1592
  %v1687 = vunpack.c.l.b16 %v1593
  %v1688 = vunpack.c.h.b16 %v1593
  %v1689 = vunpack.c.l.b16 %v1594
  %v1690 = vunpack.c.h.b16 %v1594
  %v1691 = vunpack.c.l.b16 %v1595
  %v1692 = vunpack.c.h.b16 %v1595
  %v1693 = vunpack.c.l.b16 %v1596
  %v1694 = vunpack.c.h.b16 %v1596
  %v1695 = vunpack.c.l.b16 %v1597
  %v1696 = vunpack.c.h.b16 %v1597
  %v1697 = vunpack.c.l.b16 %v1598
  %v1698 = vunpack.c.h.b16 %v1598
  %v1699 = vunpack.c.l.b16 %v1599
  %v1700 = vunpack.c.h.b16 %v1599
  %v1701 = vunpack.c.l.b16 %v1600
  %v1702 = vunpack.c.h.b16 %v1600
  %v1703 = vunpack.c.l.b16 %v1601
  %v1704 = vunpack.c.h.b16 %v1601
  %v1705 = vunpack.c.l.b16 %v1602
  %v1706 = vunpack.c.h.b16 %v1602
  %v1707 = vunpack.c.l.b16 %v1603
  %v1708 = vunpack.c.h.b16 %v1603
  %v1709 = vunpack.c.l.b16 %v1604
  %v1710 = vunpack.c.h.b16 %v1604
  %v1711 = vunpack.c.l.b16 %v1605
  %v1712 = vunpack.c.h.b16 %v1605
  %v1713 = vunpack.c.l.b16 %v1606
  %v1714 = vunpack.c.h.b16 %v1606
  %v1715 = vunpack.c.l.b16 %v1607
  %v1716 = vunpack.c.h.b16 %v1607
  %v1717 = vunpack.c.l.b16 %v1608
  %v1718 = vunpack.c.h.b16 %v1608
  %v1719 = vunpack.c.l.b16 %v1609
  %v1720 = vunpack.c.h.b16 %v1609
  %v1721 = vunpack.c.l.b16 %v1610
  %v1722 = vunpack.c.h.b16 %v1610
  %v1723 = vunpack.c.l.b16 %v1611
  %v1724 = vunpack.c.h.b16 %v1611
  %v1725 = vunpack.c.l.b16 %v1612
  %v1726 = vunpack.c.h.b16 %v1612
  %v1727 = vunpack.c.l.b16 %v1613
  %v1728 = vunpack.c.h.b16 %v1613
  %v1729 = vunpack.c.l.b16 %v1614
  %v1730 = vunpack.c.h.b16 %v1614
  %v1731 = vunpack.c.l.b16 %v1615
  %v1732 = vunpack.c.h.b16 %v1615
  %v1733 = vunpack.c.l.b16 %v1616
  %v1734 = vunpack.c.h.b16 %v1616
  %v1735 = vpack.c.b16 %v1675, %v1671
  %v1736 = vpack.c.b16 %v1676, %v1672
  %v1737 = vpack.c.b16 %v1677, %v1673
  %v1738 = vpack.c.b16 %v1678, %v1674
  %v1739 = vpack.c.b16 %v1683, %v1679
  %v1740 = vpack.c.b16 %v1684, %v1680
  %v1741 = vpack.c.b16 %v1685, %v1681
  %v1742 = vpack.c.b16 %v1686, %v1682
  %v1743 = vpack.c.b16 %v1691, %v1687
  %v1744 = vpack.c.b16 %v1692, %v1688
  %v1745 = vpack.c.b16 %v1693, %v1689
  %v1746 = vpack.c.b16 %v1694, %v1690
  %v1747 = vpack.c.b16 %v1699, %v1695
  %v1748 = vpack.c.b16 %v1700, %v1696
  %v1749 = vpack.c.b16 %v1701, %v1697
  %v1750 = vpack.c.b16 %v1702, %v1698
  %v1751 = vpack.c.b16 %v1707, %v1703
  %v1752 = vpack.c.b16 %v1708, %v1704
  %v1753 = vpack.c.b16 %v1709, %v1705
  %v1754 = vpack.c.b16 %v1710, %v1706
  %v1755 = vpack.c.b16 %v1715, %v1711
  %v1756 = vpack.c.b16 %v1716, %v1712
  %v1757 = vpack.c.b16 %v1717, %v1713
  %v1758 = vpack.c.b16 %v1718, %v1714
  %v1759 = vpack.c.b16 %v1723, %v1719
  %v1760 = vpack.c.b16 %v1724, %v1720
  %v1761 = vpack.c.b16 %v1725, %v1721
  %v1762 = vpack.c.b16 %v1726, %v1722
  %v1763 = vpack.c.b16 %v1731, %v1727
  %v1764 = vpack.c.b16 %v1732, %v1728
  %v1765 = vpack.c.b16 %v1733, %v1729
  %v1766 = vpack.c.b16 %v1734, %v1730
  %1799 = vmatprep.subr.bf16.mxu0 %v1764
  %1800 = vmatpush1.bf16.msra.mxu0 %v1763
  %1801 = vmatprep.subr.bf16.mxu0 %v1760
  %1802 = vmatpush1.bf16.msra.mxu0 %v1759
  %1803 = vmatprep.subr.bf16.mxu0 %v1756
  %1804 = vmatpush1.bf16.msra.mxu0 %v1755
  %1805 = vmatprep.subr.bf16.mxu0 %v1752
  %1806 = vmatpush1.bf16.msra.mxu0 %v1751
  %1807 = vmatprep.subr.bf16.mxu0 %v1748
  %1808 = vmatpush1.bf16.msra.mxu0 %v1747
  %1809 = vmatprep.subr.bf16.mxu0 %v1744
  %1810 = vmatpush1.bf16.msra.mxu0 %v1743
  %1811 = vmatprep.subr.bf16.mxu0 %v1740
  %1812 = vmatpush1.bf16.msra.mxu0 %v1739
  %1813 = vmatprep.subr.bf16.mxu0 %v1736
  %1814 = vmatpush1.bf16.msra.mxu0 %v1735
  %1815 = vmatprep.subr.bf16.mxu0 0
  %1816 = vmatpush2.bf16.msra.mxu0 0
  %1817 = vmatprep.subr.bf16.mxu0 0
  %1818 = vmatpush2.bf16.msra.mxu0 0
  %1819 = vmatprep.subr.bf16.mxu0 0
  %1820 = vmatpush2.bf16.msra.mxu0 0
  %1821 = vmatprep.subr.bf16.mxu0 0
  %1822 = vmatpush2.bf16.msra.mxu0 0
  %1823 = vmatprep.subr.bf16.mxu0 0
  %1824 = vmatpush2.bf16.msra.mxu0 0
  %1825 = vmatprep.subr.bf16.mxu0 0
  %1826 = vmatpush2.bf16.msra.mxu0 0
  %1827 = vmatprep.subr.bf16.mxu0 0
  %1828 = vmatpush2.bf16.msra.mxu0 0
  %1829 = vmatprep.subr.bf16.mxu0 0
  %1830 = vmatpush2.bf16.msra.mxu0 0
  %1831 = vmatprep.mubr.bf16.mxu0 0
  %1832 = vmatmul.mubr.bf16.gmra.mxu0 %v1584
  %v1833 = vpop.f32.mrf.mxu0
  %v1834 = vadd.f32 %v1622, %v1833
  %v1835 = vpop.f32.mrf.mxu0
  %v1836 = vadd.f32 %v1626, %v1835
  %v1837 = vpop.f32.mrf.mxu0
  %v1838 = vpop.f32.mrf.mxu0
  %1839 = vdwg.mxu0
  %1840 = vmatprep.subr.bf16.mxu0 %v1766
  %1841 = vmatpush1.bf16.msra.mxu0 %v1765
  %1842 = vmatprep.subr.bf16.mxu0 %v1762
  %1843 = vmatpush1.bf16.msra.mxu0 %v1761
  %1844 = vmatprep.subr.bf16.mxu0 %v1758
  %1845 = vmatpush1.bf16.msra.mxu0 %v1757
  %1846 = vmatprep.subr.bf16.mxu0 %v1754
  %1847 = vmatpush1.bf16.msra.mxu0 %v1753
  %1848 = vmatprep.subr.bf16.mxu0 %v1750
  %1849 = vmatpush1.bf16.msra.mxu0 %v1749
  %1850 = vmatprep.subr.bf16.mxu0 %v1746
  %1851 = vmatpush1.bf16.msra.mxu0 %v1745
  %1852 = vmatprep.subr.bf16.mxu0 %v1742
  %1853 = vmatpush1.bf16.msra.mxu0 %v1741
  %1854 = vmatprep.subr.bf16.mxu0 %v1738
  %1855 = vmatpush1.bf16.msra.mxu0 %v1737
  %1856 = vmatprep.subr.bf16.mxu0 0
  %1857 = vmatpush2.bf16.msra.mxu0 0
  %1858 = vmatprep.subr.bf16.mxu0 0
  %1859 = vmatpush2.bf16.msra.mxu0 0
  %1860 = vmatprep.subr.bf16.mxu0 0
  %1861 = vmatpush2.bf16.msra.mxu0 0
  %1862 = vmatprep.subr.bf16.mxu0 0
  %1863 = vmatpush2.bf16.msra.mxu0 0
  %1864 = vmatprep.subr.bf16.mxu0 0
  %1865 = vmatpush2.bf16.msra.mxu0 0
  %1866 = vmatprep.subr.bf16.mxu0 0
  %1867 = vmatpush2.bf16.msra.mxu0 0
  %1868 = vmatprep.subr.bf16.mxu0 0
  %1869 = vmatpush2.bf16.msra.mxu0 0
  %1870 = vmatprep.subr.bf16.mxu0 0
  %1871 = vmatpush2.bf16.msra.mxu0 0
  %1872 = vmatprep.mubr.bf16.mxu0 0
  %1873 = vmatmul.mubr.bf16.gmra.mxu0 %v1584
  %v1874 = vpop.f32.mrf.mxu0
  %v1875 = vadd.f32 %v1630, %v1874
  %v1876 = vpop.f32.mrf.mxu0
  %v1877 = vadd.f32 %v1634, %v1876
  %v1878 = vpop.f32.mrf.mxu0
  %v1879 = vpop.f32.mrf.mxu0
  %1880 = vdwg.mxu0
  %v1881 = vmul.f32 %v1834, 0.5
  %v1882 = vmul.f32 %v1836, 0.5
  %v1883 = vmul.f32 %v1875, 0.5
  %v1884 = vmul.f32 %v1877, 0.5
  %v1885 = vmul.f32 %v1834, 0.044715
  %v1886 = vmul.f32 %v1836, 0.044715
  %v1887 = vmul.f32 %v1875, 0.044715
  %v1888 = vmul.f32 %v1877, 0.044715
  %v1889 = vmul.f32 %v1885, %v1834
  %v1890 = vmul.f32 %v1886, %v1836
  %v1891 = vmul.f32 %v1887, %v1875
  %v1892 = vmul.f32 %v1888, %v1877
  %v1893 = vmul.f32 %v1889, %v1834
  %v1894 = vmul.f32 %v1890, %v1836
  %v1895 = vmul.f32 %v1891, %v1875
  %v1896 = vmul.f32 %v1892, %v1877
  %v1897 = vadd.f32 %v1834, %v1893
  %v1898 = vadd.f32 %v1836, %v1894
  %v1899 = vadd.f32 %v1875, %v1895
  %v1900 = vadd.f32 %v1877, %v1896
  %v1901 = vmul.f32 %v1897, 0.7978846
  %v1902 = vmul.f32 %v1898, 0.7978846
  %v1903 = vmul.f32 %v1899, 0.7978846
  %v1904 = vmul.f32 %v1900, 0.7978846
  %v1905 = vtanh.pop %v1901
  %v1906 = vtanh.pop %v1902
  %v1907 = vtanh.pop %v1903
  %v1908 = vtanh.pop %v1904
  %v1909 = vadd.f32 %v1905, 1.0
  %v1910 = vadd.f32 %v1906, 1.0
  %v1911 = vadd.f32 %v1907, 1.0
  %v1912 = vadd.f32 %v1908, 1.0
  %v1913 = vmul.f32 %v1881, %v1909
  %v1914 = vmul.f32 %v1882, %v1910
  %v1915 = vmul.f32 %v1883, %v1911
  %v1916 = vmul.f32 %v1884, %v1912
  %v1917 = vpack.c.bf16 %v1913, %v1913
  %v1918 = vpack.c.bf16 %v1914, %v1914
  %v1919 = vpack.c.bf16 %v1915, %v1915
  %v1920 = vpack.c.bf16 %v1916, %v1916
  %v1921 = vld [vmem:[%s11] sm:$0xf]
  %v1922 = vld [vmem:[%s11 + $0x4] sm:$0xf]
  %v1923 = vld [vmem:[%s11 + $0x8] sm:$0xf]
  %v1924 = vld [vmem:[%s11 + $0xc] sm:$0xf]
  %v1925 = vld [vmem:[%s11 + $0x10] sm:$0xf]
  %v1926 = vld [vmem:[%s11 + $0x14] sm:$0xf]
  %v1927 = vld [vmem:[%s11 + $0x18] sm:$0xf]
  %v1928 = vld [vmem:[%s11 + $0x1c] sm:$0xf]
  %v1929 = vld [vmem:[%s11 + $0x20] sm:$0xf]
  %v1930 = vld [vmem:[%s11 + $0x24] sm:$0xf]
  %v1931 = vld [vmem:[%s11 + $0x28] sm:$0xf]
  %v1932 = vld [vmem:[%s11 + $0x2c] sm:$0xf]
  %v1933 = vld [vmem:[%s11 + $0x30] sm:$0xf]
  %v1934 = vld [vmem:[%s11 + $0x34] sm:$0xf]
  %v1935 = vld [vmem:[%s11 + $0x38] sm:$0xf]
  %v1936 = vld [vmem:[%s11 + $0x3c] sm:$0xf]
  %v1937 = vld [vmem:[%s11 + $0x40] sm:$0xf]
  %v1938 = vld [vmem:[%s11 + $0x44] sm:$0xf]
  %v1939 = vld [vmem:[%s11 + $0x48] sm:$0xf]
  %v1940 = vld [vmem:[%s11 + $0x4c] sm:$0xf]
  %v1941 = vld [vmem:[%s11 + $0x50] sm:$0xf]
  %v1942 = vld [vmem:[%s11 + $0x54] sm:$0xf]
  %v1943 = vld [vmem:[%s11 + $0x58] sm:$0xf]
  %v1944 = vld [vmem:[%s11 + $0x5c] sm:$0xf]
  %v1945 = vld [vmem:[%s11 + $0x60] sm:$0xf]
  %v1946 = vld [vmem:[%s11 + $0x64] sm:$0xf]
  %v1947 = vld [vmem:[%s11 + $0x68] sm:$0xf]
  %v1948 = vld [vmem:[%s11 + $0x6c] sm:$0xf]
  %v1949 = vld [vmem:[%s11 + $0x70] sm:$0xf]
  %v1950 = vld [vmem:[%s11 + $0x74] sm:$0xf]
  %v1951 = vld [vmem:[%s11 + $0x78] sm:$0xf]
  %v1952 = vld [vmem:[%s11 + $0x7c] sm:$0xf]
  %v1953 = vld [vmem:[%s11 + $0x80] sm:$0xf]
  %v1954 = vld [vmem:[%s11 + $0x84] sm:$0xf]
  %v1955 = vld [vmem:[%s11 + $0x88] sm:$0xf]
  %v1956 = vld [vmem:[%s11 + $0x8c] sm:$0xf]
  %v1957 = vld [vmem:[%s11 + $0x90] sm:$0xf]
  %v1958 = vld [vmem:[%s11 + $0x94] sm:$0xf]
  %v1959 = vld [vmem:[%s11 + $0x98] sm:$0xf]
  %v1960 = vld [vmem:[%s11 + $0x9c] sm:$0xf]
  %v1961 = vld [vmem:[%s11 + $0xa0] sm:$0xf]
  %v1962 = vld [vmem:[%s11 + $0xa4] sm:$0xf]
  %v1963 = vld [vmem:[%s11 + $0xa8] sm:$0xf]
  %v1964 = vld [vmem:[%s11 + $0xac] sm:$0xf]
  %v1965 = vld [vmem:[%s11 + $0xb0] sm:$0xf]
  %v1966 = vld [vmem:[%s11 + $0xb4] sm:$0xf]
  %v1967 = vld [vmem:[%s11 + $0xb8] sm:$0xf]
  %v1968 = vld [vmem:[%s11 + $0xbc] sm:$0xf]
  %v1969 = vld [vmem:[%s11 + $0xc0] sm:$0xf]
  %v1970 = vld [vmem:[%s11 + $0xc4] sm:$0xf]
  %v1971 = vld [vmem:[%s11 + $0xc8] sm:$0xf]
  %v1972 = vld [vmem:[%s11 + $0xcc] sm:$0xf]
  %v1973 = vld [vmem:[%s11 + $0xd0] sm:$0xf]
  %v1974 = vld [vmem:[%s11 + $0xd4] sm:$0xf]
  %v1975 = vld [vmem:[%s11 + $0xd8] sm:$0xf]
  %v1976 = vld [vmem:[%s11 + $0xdc] sm:$0xf]
  %v1977 = vld [vmem:[%s11 + $0xe0] sm:$0xf]
  %v1978 = vld [vmem:[%s11 + $0xe4] sm:$0xf]
  %v1979 = vld [vmem:[%s11 + $0xe8] sm:$0xf]
  %v1980 = vld [vmem:[%s11 + $0xec] sm:$0xf]
  %v1981 = vld [vmem:[%s11 + $0xf0] sm:$0xf]
  %v1982 = vld [vmem:[%s11 + $0xf4] sm:$0xf]
  %v1983 = vld [vmem:[%s11 + $0xf8] sm:$0xf]
  %v1984 = vld [vmem:[%s11 + $0xfc] sm:$0xf]
  %v1985 = vld [vmem:[%s12] sm:$0x1]
  %v1987 = vlaneseq
  %v1988 = vshrl.u32 %v1987, 7
  %v1989 = vsub.s32 0, %v1988
  %v1990 = vrot.slane %v1985, %v1989
  %v2056 = vunpack.c.l.b16 %v1921
  %v2057 = vunpack.c.l.b16 %v1922
  %v2058 = vunpack.c.l.b16 %v1923
  %v2059 = vunpack.c.l.b16 %v1924
  %v2060 = vunpack.c.l.b16 %v1925
  %v2061 = vunpack.c.l.b16 %v1926
  %v2062 = vunpack.c.l.b16 %v1927
  %v2063 = vunpack.c.l.b16 %v1928
  %v2064 = vunpack.c.l.b16 %v1929
  %v2065 = vunpack.c.l.b16 %v1930
  %v2066 = vunpack.c.l.b16 %v1931
  %v2067 = vunpack.c.l.b16 %v1932
  %v2068 = vunpack.c.l.b16 %v1933
  %v2069 = vunpack.c.l.b16 %v1934
  %v2070 = vunpack.c.l.b16 %v1935
  %v2071 = vunpack.c.l.b16 %v1936
  %v2072 = vunpack.c.l.b16 %v1937
  %v2073 = vunpack.c.l.b16 %v1938
  %v2074 = vunpack.c.l.b16 %v1939
  %v2075 = vunpack.c.l.b16 %v1940
  %v2076 = vunpack.c.l.b16 %v1941
  %v2077 = vunpack.c.l.b16 %v1942
  %v2078 = vunpack.c.l.b16 %v1943
  %v2079 = vunpack.c.l.b16 %v1944
  %v2080 = vunpack.c.l.b16 %v1945
  %v2081 = vunpack.c.l.b16 %v1946
  %v2082 = vunpack.c.l.b16 %v1947
  %v2083 = vunpack.c.l.b16 %v1948
  %v2084 = vunpack.c.l.b16 %v1949
  %v2085 = vunpack.c.l.b16 %v1950
  %v2086 = vunpack.c.l.b16 %v1951
  %v2087 = vunpack.c.l.b16 %v1952
  %v2088 = vunpack.c.l.b16 %v1953
  %v2089 = vunpack.c.l.b16 %v1954
  %v2090 = vunpack.c.l.b16 %v1955
  %v2091 = vunpack.c.l.b16 %v1956
  %v2092 = vunpack.c.l.b16 %v1957
  %v2093 = vunpack.c.l.b16 %v1958
  %v2094 = vunpack.c.l.b16 %v1959
  %v2095 = vunpack.c.l.b16 %v1960
  %v2096 = vunpack.c.l.b16 %v1961
  %v2097 = vunpack.c.l.b16 %v1962
  %v2098 = vunpack.c.l.b16 %v1963
  %v2099 = vunpack.c.l.b16 %v1964
  %v2100 = vunpack.c.l.b16 %v1965
  %v2101 = vunpack.c.l.b16 %v1966
  %v2102 = vunpack.c.l.b16 %v1967
  %v2103 = vunpack.c.l.b16 %v1968
  %v2104 = vunpack.c.l.b16 %v1969
  %v2105 = vunpack.c.l.b16 %v1970
  %v2106 = vunpack.c.l.b16 %v1971
  %v2107 = vunpack.c.l.b16 %v1972
  %v2108 = vunpack.c.l.b16 %v1973
  %v2109 = vunpack.c.l.b16 %v1974
  %v2110 = vunpack.c.l.b16 %v1975
  %v2111 = vunpack.c.l.b16 %v1976
  %v2112 = vunpack.c.l.b16 %v1977
  %v2113 = vunpack.c.l.b16 %v1978
  %v2114 = vunpack.c.l.b16 %v1979
  %v2115 = vunpack.c.l.b16 %v1980
  %v2116 = vunpack.c.l.b16 %v1981
  %v2117 = vunpack.c.l.b16 %v1982
  %v2118 = vunpack.c.l.b16 %v1983
  %v2119 = vunpack.c.l.b16 %v1984
  %v2120 = vpack.c.b16 %v2057, %v2056
  %v2121 = vpack.c.b16 %v2059, %v2058
  %v2122 = vpack.c.b16 %v2061, %v2060
  %v2123 = vpack.c.b16 %v2063, %v2062
  %v2124 = vpack.c.b16 %v2065, %v2064
  %v2125 = vpack.c.b16 %v2067, %v2066
  %v2126 = vpack.c.b16 %v2069, %v2068
  %v2127 = vpack.c.b16 %v2071, %v2070
  %v2128 = vpack.c.b16 %v2073, %v2072
  %v2129 = vpack.c.b16 %v2075, %v2074
  %v2130 = vpack.c.b16 %v2077, %v2076
  %v2131 = vpack.c.b16 %v2079, %v2078
  %v2132 = vpack.c.b16 %v2081, %v2080
  %v2133 = vpack.c.b16 %v2083, %v2082
  %v2134 = vpack.c.b16 %v2085, %v2084
  %v2135 = vpack.c.b16 %v2087, %v2086
  %v2136 = vpack.c.b16 %v2089, %v2088
  %v2137 = vpack.c.b16 %v2091, %v2090
  %v2138 = vpack.c.b16 %v2093, %v2092
  %v2139 = vpack.c.b16 %v2095, %v2094
  %v2140 = vpack.c.b16 %v2097, %v2096
  %v2141 = vpack.c.b16 %v2099, %v2098
  %v2142 = vpack.c.b16 %v2101, %v2100
  %v2143 = vpack.c.b16 %v2103, %v2102
  %v2144 = vpack.c.b16 %v2105, %v2104
  %v2145 = vpack.c.b16 %v2107, %v2106
  %v2146 = vpack.c.b16 %v2109, %v2108
  %v2147 = vpack.c.b16 %v2111, %v2110
  %v2148 = vpack.c.b16 %v2113, %v2112
  %v2149 = vpack.c.b16 %v2115, %v2114
  %v2150 = vpack.c.b16 %v2117, %v2116
  %v2151 = vpack.c.b16 %v2119, %v2118
  %2184 = vmatprep.subr.bf16.mxu0 0
  %2185 = vmatpush1.bf16.msra.mxu0 %v2127
  %2186 = vmatprep.subr.bf16.mxu0 0
  %2187 = vmatpush1.bf16.msra.mxu0 %v2126
  %2188 = vmatprep.subr.bf16.mxu0 0
  %2189 = vmatpush1.bf16.msra.mxu0 %v2125
  %2190 = vmatprep.subr.bf16.mxu0 0
  %2191 = vmatpush1.bf16.msra.mxu0 %v2124
  %2192 = vmatprep.subr.bf16.mxu0 0
  %2193 = vmatpush1.bf16.msra.mxu0 %v2123
  %2194 = vmatprep.subr.bf16.mxu0 0
  %2195 = vmatpush1.bf16.msra.mxu0 %v2122
  %2196 = vmatprep.subr.bf16.mxu0 0
  %2197 = vmatpush1.bf16.msra.mxu0 %v2121
  %2198 = vmatprep.subr.bf16.mxu0 0
  %2199 = vmatpush1.bf16.msra.mxu0 %v2120
  %2200 = vmatprep.subr.bf16.mxu0 0
  %2201 = vmatpush2.bf16.msra.mxu0 %v2135
  %2202 = vmatprep.subr.bf16.mxu0 0
  %2203 = vmatpush2.bf16.msra.mxu0 %v2134
  %2204 = vmatprep.subr.bf16.mxu0 0
  %2205 = vmatpush2.bf16.msra.mxu0 %v2133
  %2206 = vmatprep.subr.bf16.mxu0 0
  %2207 = vmatpush2.bf16.msra.mxu0 %v2132
  %2208 = vmatprep.subr.bf16.mxu0 0
  %2209 = vmatpush2.bf16.msra.mxu0 %v2131
  %2210 = vmatprep.subr.bf16.mxu0 0
  %2211 = vmatpush2.bf16.msra.mxu0 %v2130
  %2212 = vmatprep.subr.bf16.mxu0 0
  %2213 = vmatpush2.bf16.msra.mxu0 %v2129
  %2214 = vmatprep.subr.bf16.mxu0 0
  %2215 = vmatpush2.bf16.msra.mxu0 %v2128
  %2216 = vmatprep.mubr.bf16.mxu0 %v1918
  %2217 = vmatmul.mubr.bf16.gmra.mxu0 %v1917
  %v2218 = vpop.f32.mrf.mxu0
  %v2219 = vadd.f32 %v1990, %v2218
  %v2220 = vpop.f32.mrf.mxu0
  %v2221 = vpop.f32.mrf.mxu0
  %v2222 = vpop.f32.mrf.mxu0
  %2223 = vdwg.mxu0
  %2224 = vmatprep.subr.bf16.mxu0 0
  %2225 = vmatpush1.bf16.msra.mxu0 %v2143
  %2226 = vmatprep.subr.bf16.mxu0 0
  %2227 = vmatpush1.bf16.msra.mxu0 %v2142
  %2228 = vmatprep.subr.bf16.mxu0 0
  %2229 = vmatpush1.bf16.msra.mxu0 %v2141
  %2230 = vmatprep.subr.bf16.mxu0 0
  %2231 = vmatpush1.bf16.msra.mxu0 %v2140
  %2232 = vmatprep.subr.bf16.mxu0 0
  %2233 = vmatpush1.bf16.msra.mxu0 %v2139
  %2234 = vmatprep.subr.bf16.mxu0 0
  %2235 = vmatpush1.bf16.msra.mxu0 %v2138
  %2236 = vmatprep.subr.bf16.mxu0 0
  %2237 = vmatpush1.bf16.msra.mxu0 %v2137
  %2238 = vmatprep.subr.bf16.mxu0 0
  %2239 = vmatpush1.bf16.msra.mxu0 %v2136
  %2240 = vmatprep.subr.bf16.mxu0 0
  %2241 = vmatpush2.bf16.msra.mxu0 %v2151
  %2242 = vmatprep.subr.bf16.mxu0 0
  %2243 = vmatpush2.bf16.msra.mxu0 %v2150
  %2244 = vmatprep.subr.bf16.mxu0 0
  %2245 = vmatpush2.bf16.msra.mxu0 %v2149
  %2246 = vmatprep.subr.bf16.mxu0 0
  %2247 = vmatpush2.bf16.msra.mxu0 %v2148
  %2248 = vmatprep.subr.bf16.mxu0 0
  %2249 = vmatpush2.bf16.msra.mxu0 %v2147
  %2250 = vmatprep.subr.bf16.mxu0 0
  %2251 = vmatpush2.bf16.msra.mxu0 %v2146
  %2252 = vmatprep.subr.bf16.mxu0 0
  %2253 = vmatpush2.bf16.msra.mxu0 %v2145
  %2254 = vmatprep.subr.bf16.mxu0 0
  %2255 = vmatpush2.bf16.msra.mxu0 %v2144
  %2256 = vmatprep.mubr.bf16.mxu0 %v1920
  %2257 = vmatmul.mubr.bf16.gmra.mxu0 %v1919
  %v2258 = vpop.f32.mrf.mxu0
  %v2259 = vadd.f32 %v2219, %v2258
  %v2260 = vpop.f32.mrf.mxu0
  %v2261 = vpop.f32.mrf.mxu0
  %v2262 = vpop.f32.mrf.mxu0
  %2263 = vdwg.mxu0
  %v2265 = vcombine.high %v2259, %v2259
  %v2267 = vadd.f32 %v1500, %v2259
  %v2268 = vadd.f32 %v1501, %v2265
  %2269 = vst [vmem:[%s13] sm:$0xf] %v2267
  %2270 = vst [vmem:[%s13 + $0x4] sm:$0xf] %v2268
  // Predicated region
  $region54: #{_lambda_.8} parent=0 // pred_check
    _
  $region55: #{_lambda_.8} parent=0 // pred_check_branch
    %2272 = sbr.rel (0) target = $region57
  $region56: #{_lambda_.8} parent=0 // pred_region
    _
  $region57: #{_lambda_.8} parent=0 // pred_fallthru
    _
  // Predicated region
  $region58: #{_lambda_.8} parent=0 // pred_check
    _
  $region59: #{_lambda_.8} parent=0 // pred_check_branch
    %2274 = sbr.rel (0) target = $region61
  $region60: #{_lambda_.8} parent=0 // pred_region
    _
  $region61: #{_lambda_.8} parent=0 // pred_fallthru
    _

// kernel: _lambda_.11
$region0: #{_lambda_.11}
  #allocation0 [shape = 'u32[]', space=smem, size = 0x4, offset = 0x4, fixed_abs, tag = 'smem constant byte address 0x4 - core index']
  #allocation1 [shape = 'u32[144,128]{1,0:T(1,128)}', space=vmem, size = 0x12000, scoped, tag = 'internal scratch']
  %s0 = inlined_call_operand.vmem [shape: f32[2,16,128], index: 0, kind: input, shape index: {}]
  %s1 = inlined_call_operand.vmem [shape: f32[1,128], index: 1, kind: input, shape index: {}]
  %s2 = inlined_call_operand.vmem [shape: f32[1,128], index: 2, kind: input, shape index: {}]
  %s3 = inlined_call_operand.vmem [shape: bf16[128,384], index: 3, kind: input, shape index: {}]
  %s4 = inlined_call_operand.vmem [shape: f32[1,384], index: 4, kind: input, shape index: {}]
  %s5 = inlined_call_operand.vmem [shape: bf16[128,128], index: 5, kind: input, shape index: {}]
  %s6 = inlined_call_operand.vmem [shape: f32[1,128], index: 6, kind: input, shape index: {}]
  %s7 = inlined_call_operand.vmem [shape: f32[1,128], index: 7, kind: input, shape index: {}]
  %s8 = inlined_call_operand.vmem [shape: f32[1,128], index: 8, kind: input, shape index: {}]
  %s9 = inlined_call_operand.vmem [shape: bf16[128,512], index: 9, kind: input, shape index: {}]
  %s10 = inlined_call_operand.vmem [shape: f32[1,512], index: 10, kind: input, shape index: {}]
  %s11 = inlined_call_operand.vmem [shape: bf16[512,128], index: 11, kind: input, shape index: {}]
  %s12 = inlined_call_operand.vmem [shape: f32[1,128], index: 12, kind: input, shape index: {}]
  %s13 = inlined_call_operand.vmem [shape: f32[2,16,128], index: 13, kind: output, shape index: {}]
  %s14 = sld [smem:[#allocation0]]
  $region62: #{_lambda_.11} parent=0
    _
  %s16 = ssub.s32 1, %s14
  %s17 = scalar_select 0, %s16, %s14
  // Predicated region
  $region2: #{_lambda_.11} parent=0 // pred_check
    _
  $region3: #{_lambda_.11} parent=0 // pred_check_branch
    %19 = sbr.rel (0) target = $region5
  $region4: #{_lambda_.11} parent=0 // pred_region
    _
  $region5: #{_lambda_.11} parent=0 // pred_fallthru
    _
  // Predicated region
  $region6: #{_lambda_.11} parent=0 // pred_check
    _
  $region7: #{_lambda_.11} parent=0 // pred_check_branch
    %21 = sbr.rel (0) target = $region9
  $region8: #{_lambda_.11} parent=0 // pred_region
    _
  $region9: #{_lambda_.11} parent=0 // pred_fallthru
    _
  // Predicated region
  $region10: #{_lambda_.11} parent=0 // pred_check
    _
  $region11: #{_lambda_.11} parent=0 // pred_check_branch
    %23 = sbr.rel (0) target = $region13
  $region12: #{_lambda_.11} parent=0 // pred_region
    _
  $region13: #{_lambda_.11} parent=0 // pred_fallthru
    _
  // Predicated region
  $region14: #{_lambda_.11} parent=0 // pred_check
    _
  $region15: #{_lambda_.11} parent=0 // pred_check_branch
    %25 = sbr.rel (0) target = $region17
  $region16: #{_lambda_.11} parent=0 // pred_region
    _
  $region17: #{_lambda_.11} parent=0 // pred_fallthru
    _
  // Predicated region
  $region18: #{_lambda_.11} parent=0 // pred_check
    _
  $region19: #{_lambda_.11} parent=0 // pred_check_branch
    %27 = sbr.rel (0) target = $region21
  $region20: #{_lambda_.11} parent=0 // pred_region
    _
  $region21: #{_lambda_.11} parent=0 // pred_fallthru
    _
  // Predicated region
  $region22: #{_lambda_.11} parent=0 // pred_check
    _
  $region23: #{_lambda_.11} parent=0 // pred_check_branch
    %29 = sbr.rel (0) target = $region25
  $region24: #{_lambda_.11} parent=0 // pred_region
    _
  $region25: #{_lambda_.11} parent=0 // pred_fallthru
    _
  // Predicated region
  $region26: #{_lambda_.11} parent=0 // pred_check
    _
  $region27: #{_lambda_.11} parent=0 // pred_check_branch
    %31 = sbr.rel (0) target = $region29
  $region28: #{_lambda_.11} parent=0 // pred_region
    _
  $region29: #{_lambda_.11} parent=0 // pred_fallthru
    _
  // Predicated region
  $region30: #{_lambda_.11} parent=0 // pred_check
    _
  $region31: #{_lambda_.11} parent=0 // pred_check_branch
    %33 = sbr.rel (0) target = $region33
  $region32: #{_lambda_.11} parent=0 // pred_region
    _
  $region33: #{_lambda_.11} parent=0 // pred_fallthru
    _
  // Predicated region
  $region34: #{_lambda_.11} parent=0 // pred_check
    _
  $region35: #{_lambda_.11} parent=0 // pred_check_branch
    %35 = sbr.rel (0) target = $region37
  $region36: #{_lambda_.11} parent=0 // pred_region
    _
  $region37: #{_lambda_.11} parent=0 // pred_fallthru
    _
  // Predicated region
  $region38: #{_lambda_.11} parent=0 // pred_check
    _
  $region39: #{_lambda_.11} parent=0 // pred_check_branch
    %37 = sbr.rel (0) target = $region41
  $region40: #{_lambda_.11} parent=0 // pred_region
    _
  $region41: #{_lambda_.11} parent=0 // pred_fallthru
    _
  // Predicated region
  $region42: #{_lambda_.11} parent=0 // pred_check
    _
  $region43: #{_lambda_.11} parent=0 // pred_check_branch
    %39 = sbr.rel (0) target = $region45
  $region44: #{_lambda_.11} parent=0 // pred_region
    _
  $region45: #{_lambda_.11} parent=0 // pred_fallthru
    _
  // Predicated region
  $region46: #{_lambda_.11} parent=0 // pred_check
    _
  $region47: #{_lambda_.11} parent=0 // pred_check_branch
    %41 = sbr.rel (0) target = $region49
  $region48: #{_lambda_.11} parent=0 // pred_region
    _
  $region49: #{_lambda_.11} parent=0 // pred_fallthru
    _
  // Predicated region
  $region50: #{_lambda_.11} parent=0 // pred_check
    _
  $region51: #{_lambda_.11} parent=0 // pred_check_branch
    %43 = sbr.rel (0) target = $region53
  $region52: #{_lambda_.11} parent=0 // pred_region
    _
  $region53: #{_lambda_.11} parent=0 // pred_fallthru
    _
  %v45 = vld [vmem:[%s0] sm:$0xff]
  %v46 = vld [vmem:[%s0 + $0x8] sm:$0xff]
  %v47 = vld [vmem:[%s0 + $0x10] sm:$0xff]
  %v48 = vld [vmem:[%s0 + $0x18] sm:$0xff]
  %v49 = vld [vmem:[%s1] sm:$0x1]
  %v50 = vld [vmem:[%s2] sm:$0x1]
  %51 = vadd.xlane.f32.xlu0 %v45
  %v52 = vpop.xlane.xlu0 %51
  %53 = vadd.xlane.f32.xlu0 %v46
  %v54 = vpop.xlane.xlu0 %53
  %55 = vadd.xlane.f32.xlu0 %v47
  %v56 = vpop.xlane.xlu0 %55
  %57 = vadd.xlane.f32.xlu0 %v48
  %v58 = vpop.xlane.xlu0 %57
  %v59 = vrcp.pop 128.0
  %v60 = vmul.f32 %v52, %v59
  %v61 = vmul.f32 %v54, %v59
  %v62 = vmul.f32 %v56, %v59
  %v63 = vmul.f32 %v58, %v59
  %v64 = vsub.f32 %v45, %v60
  %v65 = vsub.f32 %v46, %v61
  %v66 = vsub.f32 %v47, %v62
  %v67 = vsub.f32 %v48, %v63
  %v68 = vmul.f32 %v64, %v64
  %v69 = vmul.f32 %v65, %v65
  %v70 = vmul.f32 %v66, %v66
  %v71 = vmul.f32 %v67, %v67
  %72 = vadd.xlane.f32.xlu0 %v68
  %v73 = vpop.xlane.xlu0 %72
  %74 = vadd.xlane.f32.xlu0 %v69
  %v75 = vpop.xlane.xlu0 %74
  %76 = vadd.xlane.f32.xlu0 %v70
  %v77 = vpop.xlane.xlu0 %76
  %78 = vadd.xlane.f32.xlu0 %v71
  %v79 = vpop.xlane.xlu0 %78
  %v80 = vmul.f32 %v73, %v59
  %v81 = vmul.f32 %v75, %v59
  %v82 = vmul.f32 %v77, %v59
  %v83 = vmul.f32 %v79, %v59
  %v84 = vadd.f32 %v80, 1e-05
  %v85 = vadd.f32 %v81, 1e-05
  %v86 = vadd.f32 %v82, 1e-05
  %v87 = vadd.f32 %v83, 1e-05
  %v88 = vrsqrt.pop %v84
  %v89 = vrsqrt.pop %v85
  %v90 = vrsqrt.pop %v86
  %v91 = vrsqrt.pop %v87
  %v92 = vmul.f32 %v64, %v88
  %v93 = vmul.f32 %v65, %v89
  %v94 = vmul.f32 %v66, %v90
  %v95 = vmul.f32 %v67, %v91
  %v97 = vlaneseq
  %v98 = vshrl.u32 %v97, 7
  %v99 = vsub.s32 0, %v98
  %v100 = vrot.slane %v49, %v99
  %v102 = vmul.f32 %v92, %v100
  %v103 = vmul.f32 %v93, %v100
  %v104 = vmul.f32 %v94, %v100
  %v105 = vmul.f32 %v95, %v100
  %v107 = vlaneseq
  %v108 = vshrl.u32 %v107, 7
  %v109 = vsub.s32 0, %v108
  %v110 = vrot.slane %v50, %v109
  %v112 = vadd.f32 %v102, %v110
  %v113 = vadd.f32 %v103, %v110
  %v114 = vadd.f32 %v104, %v110
  %v115 = vadd.f32 %v105, %v110
  %v116 = vpack.c.bf16 %v113, %v112
  %v117 = vpack.c.bf16 %v115, %v114
  %v118 = vld [vmem:[%s3] sm:$0xff]
  %v119 = vld [vmem:[%s3 + $0x8] sm:$0xf]
  %v120 = vld [vmem:[%s3 + $0xc] sm:$0xff]
  %v121 = vld [vmem:[%s3 + $0x14] sm:$0xf]
  %v122 = vld [vmem:[%s3 + $0x18] sm:$0xff]
  %v123 = vld [vmem:[%s3 + $0x20] sm:$0xf]
  %v124 = vld [vmem:[%s3 + $0x24] sm:$0xff]
  %v125 = vld [vmem:[%s3 + $0x2c] sm:$0xf]
  %v126 = vld [vmem:[%s3 + $0x30] sm:$0xff]
  %v127 = vld [vmem:[%s3 + $0x38] sm:$0xf]
  %v128 = vld [vmem:[%s3 + $0x3c] sm:$0xff]
  %v129 = vld [vmem:[%s3 + $0x44] sm:$0xf]
  %v130 = vld [vmem:[%s3 + $0x48] sm:$0xff]
  %v131 = vld [vmem:[%s3 + $0x50] sm:$0xf]
  %v132 = vld [vmem:[%s3 + $0x54] sm:$0xff]
  %v133 = vld [vmem:[%s3 + $0x5c] sm:$0xf]
  %v134 = vld [vmem:[%s3 + $0x60] sm:$0xff]
  %v135 = vld [vmem:[%s3 + $0x68] sm:$0xf]
  %v136 = vld [vmem:[%s3 + $0x6c] sm:$0xff]
  %v137 = vld [vmem:[%s3 + $0x74] sm:$0xf]
  %v138 = vld [vmem:[%s3 + $0x78] sm:$0xff]
  %v139 = vld [vmem:[%s3 + $0x80] sm:$0xf]
  %v140 = vld [vmem:[%s3 + $0x84] sm:$0xff]
  %v141 = vld [vmem:[%s3 + $0x8c] sm:$0xf]
  %v142 = vld [vmem:[%s3 + $0x90] sm:$0xff]
  %v143 = vld [vmem:[%s3 + $0x98] sm:$0xf]
  %v144 = vld [vmem:[%s3 + $0x9c] sm:$0xff]
  %v145 = vld [vmem:[%s3 + $0xa4] sm:$0xf]
  %v146 = vld [vmem:[%s3 + $0xa8] sm:$0xff]
  %v147 = vld [vmem:[%s3 + $0xb0] sm:$0xf]
  %v148 = vld [vmem:[%s3 + $0xb4] sm:$0xff]
  %v149 = vld [vmem:[%s3 + $0xbc] sm:$0xf]
  %v150 = vld [vmem:[%s4] sm:$0x7]
  %v152 = vlaneseq
  %v153 = vshrl.u32 %v152, 7
  %v154 = vsub.s32 0, %v153
  %v155 = vrot.slane %v150, %v154
  %v156 = vlaneseq
  %v157 = vshrl.u32 %v156, 7
  %v158 = vsub.s32 1, %v157
  %v159 = vrot.slane %v150, %v158
  %v160 = vlaneseq
  %v161 = vshrl.u32 %v160, 7
  %v162 = vsub.s32 2, %v161
  %v163 = vrot.slane %v150, %v162
  %v199 = vunpack.c.l.b16 %v118
  %v200 = vunpack.c.h.b16 %v118
  %v201 = vunpack.c.l.b16 %v119
  %v202 = vunpack.c.l.b16 %v120
  %v203 = vunpack.c.h.b16 %v120
  %v204 = vunpack.c.l.b16 %v121
  %v205 = vunpack.c.l.b16 %v122
  %v206 = vunpack.c.h.b16 %v122
  %v207 = vunpack.c.l.b16 %v123
  %v208 = vunpack.c.l.b16 %v124
  %v209 = vunpack.c.h.b16 %v124
  %v210 = vunpack.c.l.b16 %v125
  %v211 = vunpack.c.l.b16 %v126
  %v212 = vunpack.c.h.b16 %v126
  %v213 = vunpack.c.l.b16 %v127
  %v214 = vunpack.c.l.b16 %v128
  %v215 = vunpack.c.h.b16 %v128
  %v216 = vunpack.c.l.b16 %v129
  %v217 = vunpack.c.l.b16 %v130
  %v218 = vunpack.c.h.b16 %v130
  %v219 = vunpack.c.l.b16 %v131
  %v220 = vunpack.c.l.b16 %v132
  %v221 = vunpack.c.h.b16 %v132
  %v222 = vunpack.c.l.b16 %v133
  %v223 = vunpack.c.l.b16 %v134
  %v224 = vunpack.c.h.b16 %v134
  %v225 = vunpack.c.l.b16 %v135
  %v226 = vunpack.c.l.b16 %v136
  %v227 = vunpack.c.h.b16 %v136
  %v228 = vunpack.c.l.b16 %v137
  %v229 = vunpack.c.l.b16 %v138
  %v230 = vunpack.c.h.b16 %v138
  %v231 = vunpack.c.l.b16 %v139
  %v232 = vunpack.c.l.b16 %v140
  %v233 = vunpack.c.h.b16 %v140
  %v234 = vunpack.c.l.b16 %v141
  %v235 = vunpack.c.l.b16 %v142
  %v236 = vunpack.c.h.b16 %v142
  %v237 = vunpack.c.l.b16 %v143
  %v238 = vunpack.c.l.b16 %v144
  %v239 = vunpack.c.h.b16 %v144
  %v240 = vunpack.c.l.b16 %v145
  %v241 = vunpack.c.l.b16 %v146
  %v242 = vunpack.c.h.b16 %v146
  %v243 = vunpack.c.l.b16 %v147
  %v244 = vunpack.c.l.b16 %v148
  %v245 = vunpack.c.h.b16 %v148
  %v246 = vunpack.c.l.b16 %v149
  %v247 = vpack.c.b16 %v202, %v199
  %v248 = vpack.c.b16 %v203, %v200
  %v249 = vpack.c.b16 %v204, %v201
  %v250 = vpack.c.b16 %v208, %v205
  %v251 = vpack.c.b16 %v209, %v206
  %v252 = vpack.c.b16 %v210, %v207
  %v253 = vpack.c.b16 %v214, %v211
  %v254 = vpack.c.b16 %v215, %v212
  %v255 = vpack.c.b16 %v216, %v213
  %v256 = vpack.c.b16 %v220, %v217
  %v257 = vpack.c.b16 %v221, %v218
  %v258 = vpack.c.b16 %v222, %v219
  %v259 = vpack.c.b16 %v226, %v223
  %v260 = vpack.c.b16 %v227, %v224
  %v261 = vpack.c.b16 %v228, %v225
  %v262 = vpack.c.b16 %v232, %v229
  %v263 = vpack.c.b16 %v233, %v230
  %v264 = vpack.c.b16 %v234, %v231
  %v265 = vpack.c.b16 %v238, %v235
  %v266 = vpack.c.b16 %v239, %v236
  %v267 = vpack.c.b16 %v240, %v237
  %v268 = vpack.c.b16 %v244, %v241
  %v269 = vpack.c.b16 %v245, %v242
  %v270 = vpack.c.b16 %v246, %v243
  %295 = vmatprep.subr.bf16.mxu0 %v269
  %296 = vmatpush1.bf16.msra.mxu0 %v268
  %297 = vmatprep.subr.bf16.mxu0 %v266
  %298 = vmatpush1.bf16.msra.mxu0 %v265
  %299 = vmatprep.subr.bf16.mxu0 %v263
  %300 = vmatpush1.bf16.msra.mxu0 %v262
  %301 = vmatprep.subr.bf16.mxu0 %v260
  %302 = vmatpush1.bf16.msra.mxu0 %v259
  %303 = vmatprep.subr.bf16.mxu0 %v257
  %304 = vmatpush1.bf16.msra.mxu0 %v256
  %305 = vmatprep.subr.bf16.mxu0 %v254
  %306 = vmatpush1.bf16.msra.mxu0 %v253
  %307 = vmatprep.subr.bf16.mxu0 %v251
  %308 = vmatpush1.bf16.msra.mxu0 %v250
  %309 = vmatprep.subr.bf16.mxu0 %v248
  %310 = vmatpush1.bf16.msra.mxu0 %v247
  %311 = vmatprep.subr.bf16.mxu0 0
  %312 = vmatpush2.bf16.msra.mxu0 0
  %313 = vmatprep.subr.bf16.mxu0 0
  %314 = vmatpush2.bf16.msra.mxu0 0
  %315 = vmatprep.subr.bf16.mxu0 0
  %316 = vmatpush2.bf16.msra.mxu0 0
  %317 = vmatprep.subr.bf16.mxu0 0
  %318 = vmatpush2.bf16.msra.mxu0 0
  %319 = vmatprep.subr.bf16.mxu0 0
  %320 = vmatpush2.bf16.msra.mxu0 0
  %321 = vmatprep.subr.bf16.mxu0 0
  %322 = vmatpush2.bf16.msra.mxu0 0
  %323 = vmatprep.subr.bf16.mxu0 0
  %324 = vmatpush2.bf16.msra.mxu0 0
  %325 = vmatprep.subr.bf16.mxu0 0
  %326 = vmatpush2.bf16.msra.mxu0 0
  %327 = vmatprep.mubr.bf16.mxu0 0
  %328 = vmatmul.mubr.bf16.gmra.mxu0 %v116
  %v329 = vpop.f32.mrf.mxu0
  %v330 = vadd.f32 %v155, %v329
  %v331 = vpop.f32.mrf.mxu0
  %v332 = vadd.f32 %v159, %v331
  %v333 = vpop.f32.mrf.mxu0
  %v334 = vadd.f32 %v155, %v333
  %v335 = vpop.f32.mrf.mxu0
  %v336 = vadd.f32 %v159, %v335
  %337 = vmatprep.mubr.bf16.mxu0 0
  %338 = vmatmul.mubr.bf16.gmra.mxu0 %v117
  %v339 = vpop.f32.mrf.mxu0
  %v340 = vadd.f32 %v155, %v339
  %v341 = vpop.f32.mrf.mxu0
  %v342 = vadd.f32 %v159, %v341
  %v343 = vpop.f32.mrf.mxu0
  %v344 = vadd.f32 %v155, %v343
  %v345 = vpop.f32.mrf.mxu0
  %v346 = vadd.f32 %v159, %v345
  %347 = vdwg.mxu0
  %348 = vmatprep.subr.bf16.mxu0 0
  %349 = vmatpush1.bf16.msra.mxu0 %v270
  %350 = vmatprep.subr.bf16.mxu0 0
  %351 = vmatpush1.bf16.msra.mxu0 %v267
  %352 = vmatprep.subr.bf16.mxu0 0
  %353 = vmatpush1.bf16.msra.mxu0 %v264
  %354 = vmatprep.subr.bf16.mxu0 0
  %355 = vmatpush1.bf16.msra.mxu0 %v261
  %356 = vmatprep.subr.bf16.mxu0 0
  %357 = vmatpush1.bf16.msra.mxu0 %v258
  %358 = vmatprep.subr.bf16.mxu0 0
  %359 = vmatpush1.bf16.msra.mxu0 %v255
  %360 = vmatprep.subr.bf16.mxu0 0
  %361 = vmatpush1.bf16.msra.mxu0 %v252
  %362 = vmatprep.subr.bf16.mxu0 0
  %363 = vmatpush1.bf16.msra.mxu0 %v249
  %364 = vmatprep.subr.bf16.mxu0 0
  %365 = vmatpush2.bf16.msra.mxu0 0
  %366 = vmatprep.subr.bf16.mxu0 0
  %367 = vmatpush2.bf16.msra.mxu0 0
  %368 = vmatprep.subr.bf16.mxu0 0
  %369 = vmatpush2.bf16.msra.mxu0 0
  %370 = vmatprep.subr.bf16.mxu0 0
  %371 = vmatpush2.bf16.msra.mxu0 0
  %372 = vmatprep.subr.bf16.mxu0 0
  %373 = vmatpush2.bf16.msra.mxu0 0
  %374 = vmatprep.subr.bf16.mxu0 0
  %375 = vmatpush2.bf16.msra.mxu0 0
  %376 = vmatprep.subr.bf16.mxu0 0
  %377 = vmatpush2.bf16.msra.mxu0 0
  %378 = vmatprep.subr.bf16.mxu0 0
  %379 = vmatpush2.bf16.msra.mxu0 0
  %380 = vmatprep.mubr.bf16.mxu0 0
  %381 = vmatmul.mubr.bf16.gmra.mxu0 %v116
  %v382 = vpop.f32.mrf.mxu0
  %v383 = vadd.f32 %v163, %v382
  %v384 = vpop.f32.mrf.mxu0
  %v385 = vpop.f32.mrf.mxu0
  %v386 = vadd.f32 %v163, %v385
  %v387 = vpop.f32.mrf.mxu0
  %388 = vmatprep.mubr.bf16.mxu0 0
  %389 = vmatmul.mubr.bf16.gmra.mxu0 %v117
  %v390 = vpop.f32.mrf.mxu0
  %v391 = vadd.f32 %v163, %v390
  %v392 = vpop.f32.mrf.mxu0
  %v393 = vpop.f32.mrf.mxu0
  %v394 = vadd.f32 %v163, %v393
  %v395 = vpop.f32.mrf.mxu0
  %396 = vdwg.mxu0
  %v397 = vpack.c.bf16 %v334, %v330
  %v398 = vpack.c.bf16 %v344, %v340
  %v399 = vpack.c.bf16 %v336, %v332
  %v400 = vpack.c.bf16 %v346, %v342
  %v401 = vpack.c.bf16 %v386, %v383
  %v402 = vpack.c.bf16 %v394, %v391
  %vm403 = vcmask 261120
  %v405 = vsel %vm403, %v397, 0
  %v408 = vsel %vm403, %v399, 0
  %410 = vmatprep.subr.bf16.mxu0 0
  %411 = vmatpush1.bf16.xpose.msra.mxu0 0
  %412 = vmatprep.subr.bf16.mxu0 0
  %413 = vmatpush1.bf16.xpose.msra.mxu0 0
  %414 = vmatprep.subr.bf16.mxu0 0
  %415 = vmatpush1.bf16.xpose.msra.mxu0 0
  %416 = vmatprep.subr.bf16.mxu0 0
  %417 = vmatpush1.bf16.xpose.msra.mxu0 0
  %418 = vmatprep.subr.bf16.mxu0 0
  %419 = vmatpush1.bf16.xpose.msra.mxu0 0
  %420 = vmatprep.subr.bf16.mxu0 0
  %421 = vmatpush1.bf16.xpose.msra.mxu0 0
  %422 = vmatprep.subr.bf16.mxu0 0
  %423 = vmatpush1.bf16.xpose.msra.mxu0 0
  %424 = vmatprep.subr.bf16.mxu0 0
  %425 = vmatpush1.bf16.xpose.msra.mxu0 %v408
  %426 = vmatprep.subr.bf16.mxu0 0
  %427 = vmatpush2.bf16.xpose.msra.mxu0 0
  %428 = vmatprep.subr.bf16.mxu0 0
  %429 = vmatpush2.bf16.xpose.msra.mxu0 0
  %430 = vmatprep.subr.bf16.mxu0 0
  %431 = vmatpush2.bf16.xpose.msra.mxu0 0
  %432 = vmatprep.subr.bf16.mxu0 0
  %433 = vmatpush2.bf16.xpose.msra.mxu0 0
  %434 = vmatprep.subr.bf16.mxu0 0
  %435 = vmatpush2.bf16.xpose.msra.mxu0 0
  %436 = vmatprep.subr.bf16.mxu0 0
  %437 = vmatpush2.bf16.xpose.msra.mxu0 0
  %438 = vmatprep.subr.bf16.mxu0 0
  %439 = vmatpush2.bf16.xpose.msra.mxu0 0
  %440 = vmatprep.subr.bf16.mxu0 0
  %441 = vmatpush2.bf16.xpose.msra.mxu0 0
  %442 = vmatprep.mubr.bf16.mxu0 0
  %443 = vmatmul.mubr.bf16.gmra.mxu0 %v405
  %v444 = vpop.f32.mrf.mxu0
  %v445 = vadd.f32 0.0, %v444
  %v446 = vpop.f32.mrf.mxu0
  %v447 = vpop.f32.mrf.mxu0
  %v448 = vadd.f32 0.0, %v447
  %v449 = vpop.f32.mrf.mxu0
  %450 = vdwg.mxu0
  %v452 = vsel %vm403, %v398, 0
  %v455 = vsel %vm403, %v400, 0
  %457 = vmatprep.subr.bf16.mxu0 0
  %458 = vmatpush1.bf16.xpose.msra.mxu0 0
  %459 = vmatprep.subr.bf16.mxu0 0
  %460 = vmatpush1.bf16.xpose.msra.mxu0 0
  %461 = vmatprep.subr.bf16.mxu0 0
  %462 = vmatpush1.bf16.xpose.msra.mxu0 0
  %463 = vmatprep.subr.bf16.mxu0 0
  %464 = vmatpush1.bf16.xpose.msra.mxu0 0
  %465 = vmatprep.subr.bf16.mxu0 0
  %466 = vmatpush1.bf16.xpose.msra.mxu0 0
  %467 = vmatprep.subr.bf16.mxu0 0
  %468 = vmatpush1.bf16.xpose.msra.mxu0 0
  %469 = vmatprep.subr.bf16.mxu0 0
  %470 = vmatpush1.bf16.xpose.msra.mxu0 0
  %471 = vmatprep.subr.bf16.mxu0 0
  %472 = vmatpush1.bf16.xpose.msra.mxu0 %v455
  %473 = vmatprep.subr.bf16.mxu0 0
  %474 = vmatpush2.bf16.xpose.msra.mxu0 0
  %475 = vmatprep.subr.bf16.mxu0 0
  %476 = vmatpush2.bf16.xpose.msra.mxu0 0
  %477 = vmatprep.subr.bf16.mxu0 0
  %478 = vmatpush2.bf16.xpose.msra.mxu0 0
  %479 = vmatprep.subr.bf16.mxu0 0
  %480 = vmatpush2.bf16.xpose.msra.mxu0 0
  %481 = vmatprep.subr.bf16.mxu0 0
  %482 = vmatpush2.bf16.xpose.msra.mxu0 0
  %483 = vmatprep.subr.bf16.mxu0 0
  %484 = vmatpush2.bf16.xpose.msra.mxu0 0
  %485 = vmatprep.subr.bf16.mxu0 0
  %486 = vmatpush2.bf16.xpose.msra.mxu0 0
  %487 = vmatprep.subr.bf16.mxu0 0
  %488 = vmatpush2.bf16.xpose.msra.mxu0 0
  %489 = vmatprep.mubr.bf16.mxu0 0
  %490 = vmatmul.mubr.bf16.gmra.mxu0 %v452
  %v491 = vpop.f32.mrf.mxu0
  %v492 = vadd.f32 0.0, %v491
  %v493 = vpop.f32.mrf.mxu0
  %v494 = vpop.f32.mrf.mxu0
  %v495 = vadd.f32 0.0, %v494
  %v496 = vpop.f32.mrf.mxu0
  %497 = vdwg.mxu0
  %vm498 = vcmask 130048
  %v499 = vsel %vm498, %v445, -inf
  %500 = vmax.xlane.f32.xlu0 %v499
  %v501 = vpop.xlane.xlu0 %500
  %v502 = vsel %vm498, %v448, -inf
  %503 = vmax.xlane.f32.xlu0 %v502
  %v504 = vpop.xlane.xlu0 %503
  %v505 = vsel %vm498, %v492, -inf
  %506 = vmax.xlane.f32.xlu0 %v505
  %v507 = vpop.xlane.xlu0 %506
  %v508 = vsel %vm498, %v495, -inf
  %509 = vmax.xlane.f32.xlu0 %v508
  %v510 = vpop.xlane.xlu0 %509
  %v511 = vsub.f32 %v445, %v501
  %v512 = vsub.f32 %v448, %v504
  %v513 = vsub.f32 %v492, %v507
  %v514 = vsub.f32 %v495, %v510
  %v515 = vmul.f32 %v511, 1.442695
  %v516 = vpow.pop %v515
  %v517 = vmul.f32 %v512, 1.442695
  %v518 = vpow.pop %v517
  %v519 = vmul.f32 %v513, 1.442695
  %v520 = vpow.pop %v519
  %v521 = vmul.f32 %v514, 1.442695
  %v522 = vpow.pop %v521
  %v523 = vsel %vm498, %v516, 0.0
  %524 = vadd.xlane.f32.xlu0 %v523
  %v525 = vpop.xlane.xlu0 %524
  %v526 = vsel %vm498, %v518, 0.0
  %527 = vadd.xlane.f32.xlu0 %v526
  %v528 = vpop.xlane.xlu0 %527
  %v529 = vsel %vm498, %v520, 0.0
  %530 = vadd.xlane.f32.xlu0 %v529
  %v531 = vpop.xlane.xlu0 %530
  %v532 = vsel %vm498, %v522, 0.0
  %533 = vadd.xlane.f32.xlu0 %v532
  %v534 = vpop.xlane.xlu0 %533
  %v535 = vrcp.pop %v525
  %v536 = vrcp.pop %v528
  %v537 = vrcp.pop %v531
  %v538 = vrcp.pop %v534
  %v539 = vmul.f32 %v516, %v535
  %v540 = vmul.f32 %v518, %v536
  %v541 = vmul.f32 %v520, %v537
  %v542 = vmul.f32 %v522, %v538
  %v543 = vpack.c.bf16 %v540, %v539
  %v544 = vpack.c.bf16 %v542, %v541
  %v546 = vsel %vm498, %v543, 0
  %548 = vmatprep.subr.bf16.mxu0 0
  %549 = vmatpush1.bf16.msra.mxu0 0
  %550 = vmatprep.subr.bf16.mxu0 0
  %551 = vmatpush1.bf16.msra.mxu0 0
  %552 = vmatprep.subr.bf16.mxu0 0
  %553 = vmatpush1.bf16.msra.mxu0 0
  %554 = vmatprep.subr.bf16.mxu0 0
  %555 = vmatpush1.bf16.msra.mxu0 0
  %556 = vmatprep.subr.bf16.mxu0 0
  %557 = vmatpush1.bf16.msra.mxu0 0
  %558 = vmatprep.subr.bf16.mxu0 0
  %559 = vmatpush1.bf16.msra.mxu0 0
  %560 = vmatprep.subr.bf16.mxu0 0
  %561 = vmatpush1.bf16.msra.mxu0 0
  %562 = vmatprep.subr.bf16.mxu0 0
  %563 = vmatpush1.bf16.msra.mxu0 %v401
  %564 = vmatprep.subr.bf16.mxu0 0
  %565 = vmatpush2.bf16.msra.mxu0 0
  %566 = vmatprep.subr.bf16.mxu0 0
  %567 = vmatpush2.bf16.msra.mxu0 0
  %568 = vmatprep.subr.bf16.mxu0 0
  %569 = vmatpush2.bf16.msra.mxu0 0
  %570 = vmatprep.subr.bf16.mxu0 0
  %571 = vmatpush2.bf16.msra.mxu0 0
  %572 = vmatprep.subr.bf16.mxu0 0
  %573 = vmatpush2.bf16.msra.mxu0 0
  %574 = vmatprep.subr.bf16.mxu0 0
  %575 = vmatpush2.bf16.msra.mxu0 0
  %576 = vmatprep.subr.bf16.mxu0 0
  %577 = vmatpush2.bf16.msra.mxu0 0
  %578 = vmatprep.subr.bf16.mxu0 0
  %579 = vmatpush2.bf16.msra.mxu0 0
  %580 = vmatprep.mubr.bf16.mxu0 0
  %581 = vmatmul.mubr.bf16.gmra.mxu0 %v546
  %v582 = vpop.f32.mrf.mxu0
  %v583 = vadd.f32 0.0, %v582
  %v584 = vpop.f32.mrf.mxu0
  %v585 = vpop.f32.mrf.mxu0
  %v586 = vadd.f32 0.0, %v585
  %v587 = vpop.f32.mrf.mxu0
  %588 = vdwg.mxu0
  %v590 = vsel %vm498, %v544, 0
  %592 = vmatprep.subr.bf16.mxu0 0
  %593 = vmatpush1.bf16.msra.mxu0 0
  %594 = vmatprep.subr.bf16.mxu0 0
  %595 = vmatpush1.bf16.msra.mxu0 0
  %596 = vmatprep.subr.bf16.mxu0 0
  %597 = vmatpush1.bf16.msra.mxu0 0
  %598 = vmatprep.subr.bf16.mxu0 0
  %599 = vmatpush1.bf16.msra.mxu0 0
  %600 = vmatprep.subr.bf16.mxu0 0
  %601 = vmatpush1.bf16.msra.mxu0 0
  %602 = vmatprep.subr.bf16.mxu0 0
  %603 = vmatpush1.bf16.msra.mxu0 0
  %604 = vmatprep.subr.bf16.mxu0 0
  %605 = vmatpush1.bf16.msra.mxu0 0
  %606 = vmatprep.subr.bf16.mxu0 0
  %607 = vmatpush1.bf16.msra.mxu0 %v402
  %608 = vmatprep.subr.bf16.mxu0 0
  %609 = vmatpush2.bf16.msra.mxu0 0
  %610 = vmatprep.subr.bf16.mxu0 0
  %611 = vmatpush2.bf16.msra.mxu0 0
  %612 = vmatprep.subr.bf16.mxu0 0
  %613 = vmatpush2.bf16.msra.mxu0 0
  %614 = vmatprep.subr.bf16.mxu0 0
  %615 = vmatpush2.bf16.msra.mxu0 0
  %616 = vmatprep.subr.bf16.mxu0 0
  %617 = vmatpush2.bf16.msra.mxu0 0
  %618 = vmatprep.subr.bf16.mxu0 0
  %619 = vmatpush2.bf16.msra.mxu0 0
  %620 = vmatprep.subr.bf16.mxu0 0
  %621 = vmatpush2.bf16.msra.mxu0 0
  %622 = vmatprep.subr.bf16.mxu0 0
  %623 = vmatpush2.bf16.msra.mxu0 0
  %624 = vmatprep.mubr.bf16.mxu0 0
  %625 = vmatmul.mubr.bf16.gmra.mxu0 %v590
  %v626 = vpop.f32.mrf.mxu0
  %v627 = vadd.f32 0.0, %v626
  %v628 = vpop.f32.mrf.mxu0
  %v629 = vpop.f32.mrf.mxu0
  %v630 = vadd.f32 0.0, %v629
  %v631 = vpop.f32.mrf.mxu0
  %632 = vdwg.mxu0
  %v633 = vpack.c.bf16 %v586, %v583
  %v634 = vpack.c.bf16 %v630, %v627
  %636 = vrot.lane.b32.xlu0 %v397, 96
  %v637 = vpop.permute.xlu0 %636
  %639 = vrot.lane.b32.xlu0 %v399, 96
  %v640 = vpop.permute.xlu0 %639
  %v642 = vsel %vm403, %v637, 0
  %v645 = vsel %vm403, %v640, 0
  %647 = vmatprep.subr.bf16.mxu0 0
  %648 = vmatpush1.bf16.xpose.msra.mxu0 0
  %649 = vmatprep.subr.bf16.mxu0 0
  %650 = vmatpush1.bf16.xpose.msra.mxu0 0
  %651 = vmatprep.subr.bf16.mxu0 0
  %652 = vmatpush1.bf16.xpose.msra.mxu0 0
  %653 = vmatprep.subr.bf16.mxu0 0
  %654 = vmatpush1.bf16.xpose.msra.mxu0 0
  %655 = vmatprep.subr.bf16.mxu0 0
  %656 = vmatpush1.bf16.xpose.msra.mxu0 0
  %657 = vmatprep.subr.bf16.mxu0 0
  %658 = vmatpush1.bf16.xpose.msra.mxu0 0
  %659 = vmatprep.subr.bf16.mxu0 0
  %660 = vmatpush1.bf16.xpose.msra.mxu0 0
  %661 = vmatprep.subr.bf16.mxu0 0
  %662 = vmatpush1.bf16.xpose.msra.mxu0 %v645
  %663 = vmatprep.subr.bf16.mxu0 0
  %664 = vmatpush2.bf16.xpose.msra.mxu0 0
  %665 = vmatprep.subr.bf16.mxu0 0
  %666 = vmatpush2.bf16.xpose.msra.mxu0 0
  %667 = vmatprep.subr.bf16.mxu0 0
  %668 = vmatpush2.bf16.xpose.msra.mxu0 0
  %669 = vmatprep.subr.bf16.mxu0 0
  %670 = vmatpush2.bf16.xpose.msra.mxu0 0
  %671 = vmatprep.subr.bf16.mxu0 0
  %672 = vmatpush2.bf16.xpose.msra.mxu0 0
  %673 = vmatprep.subr.bf16.mxu0 0
  %674 = vmatpush2.bf16.xpose.msra.mxu0 0
  %675 = vmatprep.subr.bf16.mxu0 0
  %676 = vmatpush2.bf16.xpose.msra.mxu0 0
  %677 = vmatprep.subr.bf16.mxu0 0
  %678 = vmatpush2.bf16.xpose.msra.mxu0 0
  %679 = vmatprep.mubr.bf16.mxu0 0
  %680 = vmatmul.mubr.bf16.gmra.mxu0 %v642
  %v681 = vpop.f32.mrf.mxu0
  %v682 = vadd.f32 0.0, %v681
  %v683 = vpop.f32.mrf.mxu0
  %v684 = vpop.f32.mrf.mxu0
  %v685 = vadd.f32 0.0, %v684
  %v686 = vpop.f32.mrf.mxu0
  %687 = vdwg.mxu0
  %689 = vrot.lane.b32.xlu0 %v398, 96
  %v690 = vpop.permute.xlu0 %689
  %692 = vrot.lane.b32.xlu0 %v400, 96
  %v693 = vpop.permute.xlu0 %692
  %v695 = vsel %vm403, %v690, 0
  %v698 = vsel %vm403, %v693, 0
  %700 = vmatprep.subr.bf16.mxu0 0
  %701 = vmatpush1.bf16.xpose.msra.mxu0 0
  %702 = vmatprep.subr.bf16.mxu0 0
  %703 = vmatpush1.bf16.xpose.msra.mxu0 0
  %704 = vmatprep.subr.bf16.mxu0 0
  %705 = vmatpush1.bf16.xpose.msra.mxu0 0
  %706 = vmatprep.subr.bf16.mxu0 0
  %707 = vmatpush1.bf16.xpose.msra.mxu0 0
  %708 = vmatprep.subr.bf16.mxu0 0
  %709 = vmatpush1.bf16.xpose.msra.mxu0 0
  %710 = vmatprep.subr.bf16.mxu0 0
  %711 = vmatpush1.bf16.xpose.msra.mxu0 0
  %712 = vmatprep.subr.bf16.mxu0 0
  %713 = vmatpush1.bf16.xpose.msra.mxu0 0
  %714 = vmatprep.subr.bf16.mxu0 0
  %715 = vmatpush1.bf16.xpose.msra.mxu0 %v698
  %716 = vmatprep.subr.bf16.mxu0 0
  %717 = vmatpush2.bf16.xpose.msra.mxu0 0
  %718 = vmatprep.subr.bf16.mxu0 0
  %719 = vmatpush2.bf16.xpose.msra.mxu0 0
  %720 = vmatprep.subr.bf16.mxu0 0
  %721 = vmatpush2.bf16.xpose.msra.mxu0 0
  %722 = vmatprep.subr.bf16.mxu0 0
  %723 = vmatpush2.bf16.xpose.msra.mxu0 0
  %724 = vmatprep.subr.bf16.mxu0 0
  %725 = vmatpush2.bf16.xpose.msra.mxu0 0
  %726 = vmatprep.subr.bf16.mxu0 0
  %727 = vmatpush2.bf16.xpose.msra.mxu0 0
  %728 = vmatprep.subr.bf16.mxu0 0
  %729 = vmatpush2.bf16.xpose.msra.mxu0 0
  %730 = vmatprep.subr.bf16.mxu0 0
  %731 = vmatpush2.bf16.xpose.msra.mxu0 0
  %732 = vmatprep.mubr.bf16.mxu0 0
  %733 = vmatmul.mubr.bf16.gmra.mxu0 %v695
  %v734 = vpop.f32.mrf.mxu0
  %v735 = vadd.f32 0.0, %v734
  %v736 = vpop.f32.mrf.mxu0
  %v737 = vpop.f32.mrf.mxu0
  %v738 = vadd.f32 0.0, %v737
  %v739 = vpop.f32.mrf.mxu0
  %740 = vdwg.mxu0
  %v741 = vsel %vm498, %v682, -inf
  %742 = vmax.xlane.f32.xlu0 %v741
  %v743 = vpop.xlane.xlu0 %742
  %v744 = vsel %vm498, %v685, -inf
  %745 = vmax.xlane.f32.xlu0 %v744
  %v746 = vpop.xlane.xlu0 %745
  %v747 = vsel %vm498, %v735, -inf
  %748 = vmax.xlane.f32.xlu0 %v747
  %v749 = vpop.xlane.xlu0 %748
  %v750 = vsel %vm498, %v738, -inf
  %751 = vmax.xlane.f32.xlu0 %v750
  %v752 = vpop.xlane.xlu0 %751
  %v753 = vsub.f32 %v682, %v743
  %v754 = vsub.f32 %v685, %v746
  %v755 = vsub.f32 %v735, %v749
  %v756 = vsub.f32 %v738, %v752
  %v757 = vmul.f32 %v753, 1.442695
  %v758 = vpow.pop %v757
  %v759 = vmul.f32 %v754, 1.442695
  %v760 = vpow.pop %v759
  %v761 = vmul.f32 %v755, 1.442695
  %v762 = vpow.pop %v761
  %v763 = vmul.f32 %v756, 1.442695
  %v764 = vpow.pop %v763
  %v765 = vsel %vm498, %v758, 0.0
  %766 = vadd.xlane.f32.xlu0 %v765
  %v767 = vpop.xlane.xlu0 %766
  %v768 = vsel %vm498, %v760, 0.0
  %769 = vadd.xlane.f32.xlu0 %v768
  %v770 = vpop.xlane.xlu0 %769
  %v771 = vsel %vm498, %v762, 0.0
  %772 = vadd.xlane.f32.xlu0 %v771
  %v773 = vpop.xlane.xlu0 %772
  %v774 = vsel %vm498, %v764, 0.0
  %775 = vadd.xlane.f32.xlu0 %v774
  %v776 = vpop.xlane.xlu0 %775
  %v777 = vrcp.pop %v767
  %v778 = vrcp.pop %v770
  %v779 = vrcp.pop %v773
  %v780 = vrcp.pop %v776
  %v781 = vmul.f32 %v758, %v777
  %v782 = vmul.f32 %v760, %v778
  %v783 = vmul.f32 %v762, %v779
  %v784 = vmul.f32 %v764, %v780
  %v785 = vpack.c.bf16 %v782, %v781
  %v786 = vpack.c.bf16 %v784, %v783
  %788 = vrot.lane.b32.xlu0 %v401, 96
  %v789 = vpop.permute.xlu0 %788
  %v792 = vsel %vm498, %v785, 0
  %794 = vmatprep.subr.bf16.mxu0 0
  %795 = vmatpush1.bf16.msra.mxu0 0
  %796 = vmatprep.subr.bf16.mxu0 0
  %797 = vmatpush1.bf16.msra.mxu0 0
  %798 = vmatprep.subr.bf16.mxu0 0
  %799 = vmatpush1.bf16.msra.mxu0 0
  %800 = vmatprep.subr.bf16.mxu0 0
  %801 = vmatpush1.bf16.msra.mxu0 0
  %802 = vmatprep.subr.bf16.mxu0 0
  %803 = vmatpush1.bf16.msra.mxu0 0
  %804 = vmatprep.subr.bf16.mxu0 0
  %805 = vmatpush1.bf16.msra.mxu0 0
  %806 = vmatprep.subr.bf16.mxu0 0
  %807 = vmatpush1.bf16.msra.mxu0 0
  %808 = vmatprep.subr.bf16.mxu0 0
  %809 = vmatpush1.bf16.msra.mxu0 %v789
  %810 = vmatprep.subr.bf16.mxu0 0
  %811 = vmatpush2.bf16.msra.mxu0 0
  %812 = vmatprep.subr.bf16.mxu0 0
  %813 = vmatpush2.bf16.msra.mxu0 0
  %814 = vmatprep.subr.bf16.mxu0 0
  %815 = vmatpush2.bf16.msra.mxu0 0
  %816 = vmatprep.subr.bf16.mxu0 0
  %817 = vmatpush2.bf16.msra.mxu0 0
  %818 = vmatprep.subr.bf16.mxu0 0
  %819 = vmatpush2.bf16.msra.mxu0 0
  %820 = vmatprep.subr.bf16.mxu0 0
  %821 = vmatpush2.bf16.msra.mxu0 0
  %822 = vmatprep.subr.bf16.mxu0 0
  %823 = vmatpush2.bf16.msra.mxu0 0
  %824 = vmatprep.subr.bf16.mxu0 0
  %825 = vmatpush2.bf16.msra.mxu0 0
  %826 = vmatprep.mubr.bf16.mxu0 0
  %827 = vmatmul.mubr.bf16.gmra.mxu0 %v792
  %v828 = vpop.f32.mrf.mxu0
  %v829 = vadd.f32 0.0, %v828
  %v830 = vpop.f32.mrf.mxu0
  %v831 = vpop.f32.mrf.mxu0
  %v832 = vadd.f32 0.0, %v831
  %v833 = vpop.f32.mrf.mxu0
  %834 = vdwg.mxu0
  %836 = vrot.lane.b32.xlu0 %v402, 96
  %v837 = vpop.permute.xlu0 %836
  %v840 = vsel %vm498, %v786, 0
  %842 = vmatprep.subr.bf16.mxu0 0
  %843 = vmatpush1.bf16.msra.mxu0 0
  %844 = vmatprep.subr.bf16.mxu0 0
  %845 = vmatpush1.bf16.msra.mxu0 0
  %846 = vmatprep.subr.bf16.mxu0 0
  %847 = vmatpush1.bf16.msra.mxu0 0
  %848 = vmatprep.subr.bf16.mxu0 0
  %849 = vmatpush1.bf16.msra.mxu0 0
  %850 = vmatprep.subr.bf16.mxu0 0
  %851 = vmatpush1.bf16.msra.mxu0 0
  %852 = vmatprep.subr.bf16.mxu0 0
  %853 = vmatpush1.bf16.msra.mxu0 0
  %854 = vmatprep.subr.bf16.mxu0 0
  %855 = vmatpush1.bf16.msra.mxu0 0
  %856 = vmatprep.subr.bf16.mxu0 0
  %857 = vmatpush1.bf16.msra.mxu0 %v837
  %858 = vmatprep.subr.bf16.mxu0 0
  %859 = vmatpush2.bf16.msra.mxu0 0
  %860 = vmatprep.subr.bf16.mxu0 0
  %861 = vmatpush2.bf16.msra.mxu0 0
  %862 = vmatprep.subr.bf16.mxu0 0
  %863 = vmatpush2.bf16.msra.mxu0 0
  %864 = vmatprep.subr.bf16.mxu0 0
  %865 = vmatpush2.bf16.msra.mxu0 0
  %866 = vmatprep.subr.bf16.mxu0 0
  %867 = vmatpush2.bf16.msra.mxu0 0
  %868 = vmatprep.subr.bf16.mxu0 0
  %869 = vmatpush2.bf16.msra.mxu0 0
  %870 = vmatprep.subr.bf16.mxu0 0
  %871 = vmatpush2.bf16.msra.mxu0 0
  %872 = vmatprep.subr.bf16.mxu0 0
  %873 = vmatpush2.bf16.msra.mxu0 0
  %874 = vmatprep.mubr.bf16.mxu0 0
  %875 = vmatmul.mubr.bf16.gmra.mxu0 %v840
  %v876 = vpop.f32.mrf.mxu0
  %v877 = vadd.f32 0.0, %v876
  %v878 = vpop.f32.mrf.mxu0
  %v879 = vpop.f32.mrf.mxu0
  %v880 = vadd.f32 0.0, %v879
  %v881 = vpop.f32.mrf.mxu0
  %882 = vdwg.mxu0
  %v883 = vpack.c.bf16 %v832, %v829
  %v884 = vpack.c.bf16 %v880, %v877
  %885 = vrot.lane.b32.xlu0 %v397, 64
  %v886 = vpop.permute.xlu0 %885
  %887 = vrot.lane.b32.xlu0 %v399, 64
  %v888 = vpop.permute.xlu0 %887
  %v890 = vsel %vm403, %v886, 0
  %v893 = vsel %vm403, %v888, 0
  %895 = vmatprep.subr.bf16.mxu0 0
  %896 = vmatpush1.bf16.xpose.msra.mxu0 0
  %897 = vmatprep.subr.bf16.mxu0 0
  %898 = vmatpush1.bf16.xpose.msra.mxu0 0
  %899 = vmatprep.subr.bf16.mxu0 0
  %900 = vmatpush1.bf16.xpose.msra.mxu0 0
  %901 = vmatprep.subr.bf16.mxu0 0
  %902 = vmatpush1.bf16.xpose.msra.mxu0 0
  %903 = vmatprep.subr.bf16.mxu0 0
  %904 = vmatpush1.bf16.xpose.msra.mxu0 0
  %905 = vmatprep.subr.bf16.mxu0 0
  %906 = vmatpush1.bf16.xpose.msra.mxu0 0
  %907 = vmatprep.subr.bf16.mxu0 0
  %908 = vmatpush1.bf16.xpose.msra.mxu0 0
  %909 = vmatprep.subr.bf16.mxu0 0
  %910 = vmatpush1.bf16.xpose.msra.mxu0 %v893
  %911 = vmatprep.subr.bf16.mxu0 0
  %912 = vmatpush2.bf16.xpose.msra.mxu0 0
  %913 = vmatprep.subr.bf16.mxu0 0
  %914 = vmatpush2.bf16.xpose.msra.mxu0 0
  %915 = vmatprep.subr.bf16.mxu0 0
  %916 = vmatpush2.bf16.xpose.msra.mxu0 0
  %917 = vmatprep.subr.bf16.mxu0 0
  %918 = vmatpush2.bf16.xpose.msra.mxu0 0
  %919 = vmatprep.subr.bf16.mxu0 0
  %920 = vmatpush2.bf16.xpose.msra.mxu0 0
  %921 = vmatprep.subr.bf16.mxu0 0
  %922 = vmatpush2.bf16.xpose.msra.mxu0 0
  %923 = vmatprep.subr.bf16.mxu0 0
  %924 = vmatpush2.bf16.xpose.msra.mxu0 0
  %925 = vmatprep.subr.bf16.mxu0 0
  %926 = vmatpush2.bf16.xpose.msra.mxu0 0
  %927 = vmatprep.mubr.bf16.mxu0 0
  %928 = vmatmul.mubr.bf16.gmra.mxu0 %v890
  %v929 = vpop.f32.mrf.mxu0
  %v930 = vadd.f32 0.0, %v929
  %v931 = vpop.f32.mrf.mxu0
  %v932 = vpop.f32.mrf.mxu0
  %v933 = vadd.f32 0.0, %v932
  %v934 = vpop.f32.mrf.mxu0
  %935 = vdwg.mxu0
  %936 = vrot.lane.b32.xlu0 %v398, 64
  %v937 = vpop.permute.xlu0 %936
  %938 = vrot.lane.b32.xlu0 %v400, 64
  %v939 = vpop.permute.xlu0 %938
  %v941 = vsel %vm403, %v937, 0
  %v944 = vsel %vm403, %v939, 0
  %946 = vmatprep.subr.bf16.mxu0 0
  %947 = vmatpush1.bf16.xpose.msra.mxu0 0
  %948 = vmatprep.subr.bf16.mxu0 0
  %949 = vmatpush1.bf16.xpose.msra.mxu0 0
  %950 = vmatprep.subr.bf16.mxu0 0
  %951 = vmatpush1.bf16.xpose.msra.mxu0 0
  %952 = vmatprep.subr.bf16.mxu0 0
  %953 = vmatpush1.bf16.xpose.msra.mxu0 0
  %954 = vmatprep.subr.bf16.mxu0 0
  %955 = vmatpush1.bf16.xpose.msra.mxu0 0
  %956 = vmatprep.subr.bf16.mxu0 0
  %957 = vmatpush1.bf16.xpose.msra.mxu0 0
  %958 = vmatprep.subr.bf16.mxu0 0
  %959 = vmatpush1.bf16.xpose.msra.mxu0 0
  %960 = vmatprep.subr.bf16.mxu0 0
  %961 = vmatpush1.bf16.xpose.msra.mxu0 %v944
  %962 = vmatprep.subr.bf16.mxu0 0
  %963 = vmatpush2.bf16.xpose.msra.mxu0 0
  %964 = vmatprep.subr.bf16.mxu0 0
  %965 = vmatpush2.bf16.xpose.msra.mxu0 0
  %966 = vmatprep.subr.bf16.mxu0 0
  %967 = vmatpush2.bf16.xpose.msra.mxu0 0
  %968 = vmatprep.subr.bf16.mxu0 0
  %969 = vmatpush2.bf16.xpose.msra.mxu0 0
  %970 = vmatprep.subr.bf16.mxu0 0
  %971 = vmatpush2.bf16.xpose.msra.mxu0 0
  %972 = vmatprep.subr.bf16.mxu0 0
  %973 = vmatpush2.bf16.xpose.msra.mxu0 0
  %974 = vmatprep.subr.bf16.mxu0 0
  %975 = vmatpush2.bf16.xpose.msra.mxu0 0
  %976 = vmatprep.subr.bf16.mxu0 0
  %977 = vmatpush2.bf16.xpose.msra.mxu0 0
  %978 = vmatprep.mubr.bf16.mxu0 0
  %979 = vmatmul.mubr.bf16.gmra.mxu0 %v941
  %v980 = vpop.f32.mrf.mxu0
  %v981 = vadd.f32 0.0, %v980
  %v982 = vpop.f32.mrf.mxu0
  %v983 = vpop.f32.mrf.mxu0
  %v984 = vadd.f32 0.0, %v983
  %v985 = vpop.f32.mrf.mxu0
  %986 = vdwg.mxu0
  %v987 = vsel %vm498, %v930, -inf
  %988 = vmax.xlane.f32.xlu0 %v987
  %v989 = vpop.xlane.xlu0 %988
  %v990 = vsel %vm498, %v933, -inf
  %991 = vmax.xlane.f32.xlu0 %v990
  %v992 = vpop.xlane.xlu0 %991
  %v993 = vsel %vm498, %v981, -inf
  %994 = vmax.xlane.f32.xlu0 %v993
  %v995 = vpop.xlane.xlu0 %994
  %v996 = vsel %vm498, %v984, -inf
  %997 = vmax.xlane.f32.xlu0 %v996
  %v998 = vpop.xlane.xlu0 %997
  %v999 = vsub.f32 %v930, %v989
  %v1000 = vsub.f32 %v933, %v992
  %v1001 = vsub.f32 %v981, %v995
  %v1002 = vsub.f32 %v984, %v998
  %v1003 = vmul.f32 %v999, 1.442695
  %v1004 = vpow.pop %v1003
  %v1005 = vmul.f32 %v1000, 1.442695
  %v1006 = vpow.pop %v1005
  %v1007 = vmul.f32 %v1001, 1.442695
  %v1008 = vpow.pop %v1007
  %v1009 = vmul.f32 %v1002, 1.442695
  %v1010 = vpow.pop %v1009
  %v1011 = vsel %vm498, %v1004, 0.0
  %1012 = vadd.xlane.f32.xlu0 %v1011
  %v1013 = vpop.xlane.xlu0 %1012
  %v1014 = vsel %vm498, %v1006, 0.0
  %1015 = vadd.xlane.f32.xlu0 %v1014
  %v1016 = vpop.xlane.xlu0 %1015
  %v1017 = vsel %vm498, %v1008, 0.0
  %1018 = vadd.xlane.f32.xlu0 %v1017
  %v1019 = vpop.xlane.xlu0 %1018
  %v1020 = vsel %vm498, %v1010, 0.0
  %1021 = vadd.xlane.f32.xlu0 %v1020
  %v1022 = vpop.xlane.xlu0 %1021
  %v1023 = vrcp.pop %v1013
  %v1024 = vrcp.pop %v1016
  %v1025 = vrcp.pop %v1019
  %v1026 = vrcp.pop %v1022
  %v1027 = vmul.f32 %v1004, %v1023
  %v1028 = vmul.f32 %v1006, %v1024
  %v1029 = vmul.f32 %v1008, %v1025
  %v1030 = vmul.f32 %v1010, %v1026
  %v1031 = vpack.c.bf16 %v1028, %v1027
  %v1032 = vpack.c.bf16 %v1030, %v1029
  %1033 = vrot.lane.b32.xlu0 %v401, 64
  %v1034 = vpop.permute.xlu0 %1033
  %v1037 = vsel %vm498, %v1031, 0
  %1039 = vmatprep.subr.bf16.mxu0 0
  %1040 = vmatpush1.bf16.msra.mxu0 0
  %1041 = vmatprep.subr.bf16.mxu0 0
  %1042 = vmatpush1.bf16.msra.mxu0 0
  %1043 = vmatprep.subr.bf16.mxu0 0
  %1044 = vmatpush1.bf16.msra.mxu0 0
  %1045 = vmatprep.subr.bf16.mxu0 0
  %1046 = vmatpush1.bf16.msra.mxu0 0
  %1047 = vmatprep.subr.bf16.mxu0 0
  %1048 = vmatpush1.bf16.msra.mxu0 0
  %1049 = vmatprep.subr.bf16.mxu0 0
  %1050 = vmatpush1.bf16.msra.mxu0 0
  %1051 = vmatprep.subr.bf16.mxu0 0
  %1052 = vmatpush1.bf16.msra.mxu0 0
  %1053 = vmatprep.subr.bf16.mxu0 0
  %1054 = vmatpush1.bf16.msra.mxu0 %v1034
  %1055 = vmatprep.subr.bf16.mxu0 0
  %1056 = vmatpush2.bf16.msra.mxu0 0
  %1057 = vmatprep.subr.bf16.mxu0 0
  %1058 = vmatpush2.bf16.msra.mxu0 0
  %1059 = vmatprep.subr.bf16.mxu0 0
  %1060 = vmatpush2.bf16.msra.mxu0 0
  %1061 = vmatprep.subr.bf16.mxu0 0
  %1062 = vmatpush2.bf16.msra.mxu0 0
  %1063 = vmatprep.subr.bf16.mxu0 0
  %1064 = vmatpush2.bf16.msra.mxu0 0
  %1065 = vmatprep.subr.bf16.mxu0 0
  %1066 = vmatpush2.bf16.msra.mxu0 0
  %1067 = vmatprep.subr.bf16.mxu0 0
  %1068 = vmatpush2.bf16.msra.mxu0 0
  %1069 = vmatprep.subr.bf16.mxu0 0
  %1070 = vmatpush2.bf16.msra.mxu0 0
  %1071 = vmatprep.mubr.bf16.mxu0 0
  %1072 = vmatmul.mubr.bf16.gmra.mxu0 %v1037
  %v1073 = vpop.f32.mrf.mxu0
  %v1074 = vadd.f32 0.0, %v1073
  %v1075 = vpop.f32.mrf.mxu0
  %v1076 = vpop.f32.mrf.mxu0
  %v1077 = vadd.f32 0.0, %v1076
  %v1078 = vpop.f32.mrf.mxu0
  %1079 = vdwg.mxu0
  %1080 = vrot.lane.b32.xlu0 %v402, 64
  %v1081 = vpop.permute.xlu0 %1080
  %v1084 = vsel %vm498, %v1032, 0
  %1086 = vmatprep.subr.bf16.mxu0 0
  %1087 = vmatpush1.bf16.msra.mxu0 0
  %1088 = vmatprep.subr.bf16.mxu0 0
  %1089 = vmatpush1.bf16.msra.mxu0 0
  %1090 = vmatprep.subr.bf16.mxu0 0
  %1091 = vmatpush1.bf16.msra.mxu0 0
  %1092 = vmatprep.subr.bf16.mxu0 0
  %1093 = vmatpush1.bf16.msra.mxu0 0
  %1094 = vmatprep.subr.bf16.mxu0 0
  %1095 = vmatpush1.bf16.msra.mxu0 0
  %1096 = vmatprep.subr.bf16.mxu0 0
  %1097 = vmatpush1.bf16.msra.mxu0 0
  %1098 = vmatprep.subr.bf16.mxu0 0
  %1099 = vmatpush1.bf16.msra.mxu0 0
  %1100 = vmatprep.subr.bf16.mxu0 0
  %1101 = vmatpush1.bf16.msra.mxu0 %v1081
  %1102 = vmatprep.subr.bf16.mxu0 0
  %1103 = vmatpush2.bf16.msra.mxu0 0
  %1104 = vmatprep.subr.bf16.mxu0 0
  %1105 = vmatpush2.bf16.msra.mxu0 0
  %1106 = vmatprep.subr.bf16.mxu0 0
  %1107 = vmatpush2.bf16.msra.mxu0 0
  %1108 = vmatprep.subr.bf16.mxu0 0
  %1109 = vmatpush2.bf16.msra.mxu0 0
  %1110 = vmatprep.subr.bf16.mxu0 0
  %1111 = vmatpush2.bf16.msra.mxu0 0
  %1112 = vmatprep.subr.bf16.mxu0 0
  %1113 = vmatpush2.bf16.msra.mxu0 0
  %1114 = vmatprep.subr.bf16.mxu0 0
  %1115 = vmatpush2.bf16.msra.mxu0 0
  %1116 = vmatprep.subr.bf16.mxu0 0
  %1117 = vmatpush2.bf16.msra.mxu0 0
  %1118 = vmatprep.mubr.bf16.mxu0 0
  %1119 = vmatmul.mubr.bf16.gmra.mxu0 %v1084
  %v1120 = vpop.f32.mrf.mxu0
  %v1121 = vadd.f32 0.0, %v1120
  %v1122 = vpop.f32.mrf.mxu0
  %v1123 = vpop.f32.mrf.mxu0
  %v1124 = vadd.f32 0.0, %v1123
  %v1125 = vpop.f32.mrf.mxu0
  %1126 = vdwg.mxu0
  %v1127 = vpack.c.bf16 %v1077, %v1074
  %v1128 = vpack.c.bf16 %v1124, %v1121
  %1129 = vrot.lane.b32.xlu0 %v397, 32
  %v1130 = vpop.permute.xlu0 %1129
  %1131 = vrot.lane.b32.xlu0 %v399, 32
  %v1132 = vpop.permute.xlu0 %1131
  %v1134 = vsel %vm403, %v1130, 0
  %v1137 = vsel %vm403, %v1132, 0
  %1139 = vmatprep.subr.bf16.mxu0 0
  %1140 = vmatpush1.bf16.xpose.msra.mxu0 0
  %1141 = vmatprep.subr.bf16.mxu0 0
  %1142 = vmatpush1.bf16.xpose.msra.mxu0 0
  %1143 = vmatprep.subr.bf16.mxu0 0
  %1144 = vmatpush1.bf16.xpose.msra.mxu0 0
  %1145 = vmatprep.subr.bf16.mxu0 0
  %1146 = vmatpush1.bf16.xpose.msra.mxu0 0
  %1147 = vmatprep.subr.bf16.mxu0 0
  %1148 = vmatpush1.bf16.xpose.msra.mxu0 0
  %1149 = vmatprep.subr.bf16.mxu0 0
  %1150 = vmatpush1.bf16.xpose.msra.mxu0 0
  %1151 = vmatprep.subr.bf16.mxu0 0
  %1152 = vmatpush1.bf16.xpose.msra.mxu0 0
  %1153 = vmatprep.subr.bf16.mxu0 0
  %1154 = vmatpush1.bf16.xpose.msra.mxu0 %v1137
  %1155 = vmatprep.subr.bf16.mxu0 0
  %1156 = vmatpush2.bf16.xpose.msra.mxu0 0
  %1157 = vmatprep.subr.bf16.mxu0 0
  %1158 = vmatpush2.bf16.xpose.msra.mxu0 0
  %1159 = vmatprep.subr.bf16.mxu0 0
  %1160 = vmatpush2.bf16.xpose.msra.mxu0 0
  %1161 = vmatprep.subr.bf16.mxu0 0
  %1162 = vmatpush2.bf16.xpose.msra.mxu0 0
  %1163 = vmatprep.subr.bf16.mxu0 0
  %1164 = vmatpush2.bf16.xpose.msra.mxu0 0
  %1165 = vmatprep.subr.bf16.mxu0 0
  %1166 = vmatpush2.bf16.xpose.msra.mxu0 0
  %1167 = vmatprep.subr.bf16.mxu0 0
  %1168 = vmatpush2.bf16.xpose.msra.mxu0 0
  %1169 = vmatprep.subr.bf16.mxu0 0
  %1170 = vmatpush2.bf16.xpose.msra.mxu0 0
  %1171 = vmatprep.mubr.bf16.mxu0 0
  %1172 = vmatmul.mubr.bf16.gmra.mxu0 %v1134
  %v1173 = vpop.f32.mrf.mxu0
  %v1174 = vadd.f32 0.0, %v1173
  %v1175 = vpop.f32.mrf.mxu0
  %v1176 = vpop.f32.mrf.mxu0
  %v1177 = vadd.f32 0.0, %v1176
  %v1178 = vpop.f32.mrf.mxu0
  %1179 = vdwg.mxu0
  %1180 = vrot.lane.b32.xlu0 %v398, 32
  %v1181 = vpop.permute.xlu0 %1180
  %1182 = vrot.lane.b32.xlu0 %v400, 32
  %v1183 = vpop.permute.xlu0 %1182
  %v1185 = vsel %vm403, %v1181, 0
  %v1188 = vsel %vm403, %v1183, 0
  %1190 = vmatprep.subr.bf16.mxu0 0
  %1191 = vmatpush1.bf16.xpose.msra.mxu0 0
  %1192 = vmatprep.subr.bf16.mxu0 0
  %1193 = vmatpush1.bf16.xpose.msra.mxu0 0
  %1194 = vmatprep.subr.bf16.mxu0 0
  %1195 = vmatpush1.bf16.xpose.msra.mxu0 0
  %1196 = vmatprep.subr.bf16.mxu0 0
  %1197 = vmatpush1.bf16.xpose.msra.mxu0 0
  %1198 = vmatprep.subr.bf16.mxu0 0
  %1199 = vmatpush1.bf16.xpose.msra.mxu0 0
  %1200 = vmatprep.subr.bf16.mxu0 0
  %1201 = vmatpush1.bf16.xpose.msra.mxu0 0
  %1202 = vmatprep.subr.bf16.mxu0 0
  %1203 = vmatpush1.bf16.xpose.msra.mxu0 0
  %1204 = vmatprep.subr.bf16.mxu0 0
  %1205 = vmatpush1.bf16.xpose.msra.mxu0 %v1188
  %1206 = vmatprep.subr.bf16.mxu0 0
  %1207 = vmatpush2.bf16.xpose.msra.mxu0 0
  %1208 = vmatprep.subr.bf16.mxu0 0
  %1209 = vmatpush2.bf16.xpose.msra.mxu0 0
  %1210 = vmatprep.subr.bf16.mxu0 0
  %1211 = vmatpush2.bf16.xpose.msra.mxu0 0
  %1212 = vmatprep.subr.bf16.mxu0 0
  %1213 = vmatpush2.bf16.xpose.msra.mxu0 0
  %1214 = vmatprep.subr.bf16.mxu0 0
  %1215 = vmatpush2.bf16.xpose.msra.mxu0 0
  %1216 = vmatprep.subr.bf16.mxu0 0
  %1217 = vmatpush2.bf16.xpose.msra.mxu0 0
  %1218 = vmatprep.subr.bf16.mxu0 0
  %1219 = vmatpush2.bf16.xpose.msra.mxu0 0
  %1220 = vmatprep.subr.bf16.mxu0 0
  %1221 = vmatpush2.bf16.xpose.msra.mxu0 0
  %1222 = vmatprep.mubr.bf16.mxu0 0
  %1223 = vmatmul.mubr.bf16.gmra.mxu0 %v1185
  %v1224 = vpop.f32.mrf.mxu0
  %v1225 = vadd.f32 0.0, %v1224
  %v1226 = vpop.f32.mrf.mxu0
  %v1227 = vpop.f32.mrf.mxu0
  %v1228 = vadd.f32 0.0, %v1227
  %v1229 = vpop.f32.mrf.mxu0
  %1230 = vdwg.mxu0
  %v1231 = vsel %vm498, %v1174, -inf
  %1232 = vmax.xlane.f32.xlu0 %v1231
  %v1233 = vpop.xlane.xlu0 %1232
  %v1234 = vsel %vm498, %v1177, -inf
  %1235 = vmax.xlane.f32.xlu0 %v1234
  %v1236 = vpop.xlane.xlu0 %1235
  %v1237 = vsel %vm498, %v1225, -inf
  %1238 = vmax.xlane.f32.xlu0 %v1237
  %v1239 = vpop.xlane.xlu0 %1238
  %v1240 = vsel %vm498, %v1228, -inf
  %1241 = vmax.xlane.f32.xlu0 %v1240
  %v1242 = vpop.xlane.xlu0 %1241
  %v1243 = vsub.f32 %v1174, %v1233
  %v1244 = vsub.f32 %v1177, %v1236
  %v1245 = vsub.f32 %v1225, %v1239
  %v1246 = vsub.f32 %v1228, %v1242
  %v1247 = vmul.f32 %v1243, 1.442695
  %v1248 = vpow.pop %v1247
  %v1249 = vmul.f32 %v1244, 1.442695
  %v1250 = vpow.pop %v1249
  %v1251 = vmul.f32 %v1245, 1.442695
  %v1252 = vpow.pop %v1251
  %v1253 = vmul.f32 %v1246, 1.442695
  %v1254 = vpow.pop %v1253
  %v1255 = vsel %vm498, %v1248, 0.0
  %1256 = vadd.xlane.f32.xlu0 %v1255
  %v1257 = vpop.xlane.xlu0 %1256
  %v1258 = vsel %vm498, %v1250, 0.0
  %1259 = vadd.xlane.f32.xlu0 %v1258
  %v1260 = vpop.xlane.xlu0 %1259
  %v1261 = vsel %vm498, %v1252, 0.0
  %1262 = vadd.xlane.f32.xlu0 %v1261
  %v1263 = vpop.xlane.xlu0 %1262
  %v1264 = vsel %vm498, %v1254, 0.0
  %1265 = vadd.xlane.f32.xlu0 %v1264
  %v1266 = vpop.xlane.xlu0 %1265
  %v1267 = vrcp.pop %v1257
  %v1268 = vrcp.pop %v1260
  %v1269 = vrcp.pop %v1263
  %v1270 = vrcp.pop %v1266
  %v1271 = vmul.f32 %v1248, %v1267
  %v1272 = vmul.f32 %v1250, %v1268
  %v1273 = vmul.f32 %v1252, %v1269
  %v1274 = vmul.f32 %v1254, %v1270
  %v1275 = vpack.c.bf16 %v1272, %v1271
  %v1276 = vpack.c.bf16 %v1274, %v1273
  %1277 = vrot.lane.b32.xlu0 %v401, 32
  %v1278 = vpop.permute.xlu0 %1277
  %v1281 = vsel %vm498, %v1275, 0
  %1283 = vmatprep.subr.bf16.mxu0 0
  %1284 = vmatpush1.bf16.msra.mxu0 0
  %1285 = vmatprep.subr.bf16.mxu0 0
  %1286 = vmatpush1.bf16.msra.mxu0 0
  %1287 = vmatprep.subr.bf16.mxu0 0
  %1288 = vmatpush1.bf16.msra.mxu0 0
  %1289 = vmatprep.subr.bf16.mxu0 0
  %1290 = vmatpush1.bf16.msra.mxu0 0
  %1291 = vmatprep.subr.bf16.mxu0 0
  %1292 = vmatpush1.bf16.msra.mxu0 0
  %1293 = vmatprep.subr.bf16.mxu0 0
  %1294 = vmatpush1.bf16.msra.mxu0 0
  %1295 = vmatprep.subr.bf16.mxu0 0
  %1296 = vmatpush1.bf16.msra.mxu0 0
  %1297 = vmatprep.subr.bf16.mxu0 0
  %1298 = vmatpush1.bf16.msra.mxu0 %v1278
  %1299 = vmatprep.subr.bf16.mxu0 0
  %1300 = vmatpush2.bf16.msra.mxu0 0
  %1301 = vmatprep.subr.bf16.mxu0 0
  %1302 = vmatpush2.bf16.msra.mxu0 0
  %1303 = vmatprep.subr.bf16.mxu0 0
  %1304 = vmatpush2.bf16.msra.mxu0 0
  %1305 = vmatprep.subr.bf16.mxu0 0
  %1306 = vmatpush2.bf16.msra.mxu0 0
  %1307 = vmatprep.subr.bf16.mxu0 0
  %1308 = vmatpush2.bf16.msra.mxu0 0
  %1309 = vmatprep.subr.bf16.mxu0 0
  %1310 = vmatpush2.bf16.msra.mxu0 0
  %1311 = vmatprep.subr.bf16.mxu0 0
  %1312 = vmatpush2.bf16.msra.mxu0 0
  %1313 = vmatprep.subr.bf16.mxu0 0
  %1314 = vmatpush2.bf16.msra.mxu0 0
  %1315 = vmatprep.mubr.bf16.mxu0 0
  %1316 = vmatmul.mubr.bf16.gmra.mxu0 %v1281
  %v1317 = vpop.f32.mrf.mxu0
  %v1318 = vadd.f32 0.0, %v1317
  %v1319 = vpop.f32.mrf.mxu0
  %v1320 = vpop.f32.mrf.mxu0
  %v1321 = vadd.f32 0.0, %v1320
  %v1322 = vpop.f32.mrf.mxu0
  %1323 = vdwg.mxu0
  %1324 = vrot.lane.b32.xlu0 %v402, 32
  %v1325 = vpop.permute.xlu0 %1324
  %v1328 = vsel %vm498, %v1276, 0
  %1330 = vmatprep.subr.bf16.mxu0 0
  %1331 = vmatpush1.bf16.msra.mxu0 0
  %1332 = vmatprep.subr.bf16.mxu0 0
  %1333 = vmatpush1.bf16.msra.mxu0 0
  %1334 = vmatprep.subr.bf16.mxu0 0
  %1335 = vmatpush1.bf16.msra.mxu0 0
  %1336 = vmatprep.subr.bf16.mxu0 0
  %1337 = vmatpush1.bf16.msra.mxu0 0
  %1338 = vmatprep.subr.bf16.mxu0 0
  %1339 = vmatpush1.bf16.msra.mxu0 0
  %1340 = vmatprep.subr.bf16.mxu0 0
  %1341 = vmatpush1.bf16.msra.mxu0 0
  %1342 = vmatprep.subr.bf16.mxu0 0
  %1343 = vmatpush1.bf16.msra.mxu0 0
  %1344 = vmatprep.subr.bf16.mxu0 0
  %1345 = vmatpush1.bf16.msra.mxu0 %v1325
  %1346 = vmatprep.subr.bf16.mxu0 0
  %1347 = vmatpush2.bf16.msra.mxu0 0
  %1348 = vmatprep.subr.bf16.mxu0 0
  %1349 = vmatpush2.bf16.msra.mxu0 0
  %1350 = vmatprep.subr.bf16.mxu0 0
  %1351 = vmatpush2.bf16.msra.mxu0 0
  %1352 = vmatprep.subr.bf16.mxu0 0
  %1353 = vmatpush2.bf16.msra.mxu0 0
  %1354 = vmatprep.subr.bf16.mxu0 0
  %1355 = vmatpush2.bf16.msra.mxu0 0
  %1356 = vmatprep.subr.bf16.mxu0 0
  %1357 = vmatpush2.bf16.msra.mxu0 0
  %1358 = vmatprep.subr.bf16.mxu0 0
  %1359 = vmatpush2.bf16.msra.mxu0 0
  %1360 = vmatprep.subr.bf16.mxu0 0
  %1361 = vmatpush2.bf16.msra.mxu0 0
  %1362 = vmatprep.mubr.bf16.mxu0 0
  %1363 = vmatmul.mubr.bf16.gmra.mxu0 %v1328
  %v1364 = vpop.f32.mrf.mxu0
  %v1365 = vadd.f32 0.0, %v1364
  %v1366 = vpop.f32.mrf.mxu0
  %v1367 = vpop.f32.mrf.mxu0
  %v1368 = vadd.f32 0.0, %v1367
  %v1369 = vpop.f32.mrf.mxu0
  %1370 = vdwg.mxu0
  %v1371 = vpack.c.bf16 %v1321, %v1318
  %v1372 = vpack.c.bf16 %v1368, %v1365
  %1375 = vrot.lane.b32.xlu0 %v883, 32
  %v1376 = vpop.permute.xlu0 %1375
  %1377 = vrot.lane.b32.xlu0 %v884, 32
  %v1378 = vpop.permute.xlu0 %1377
  %1381 = vrot.lane.b32.xlu0 %v1127, 64
  %v1382 = vpop.permute.xlu0 %1381
  %1383 = vrot.lane.b32.xlu0 %v1128, 64
  %v1384 = vpop.permute.xlu0 %1383
  %1387 = vrot.lane.b32.xlu0 %v1371, 96
  %v1388 = vpop.permute.xlu0 %1387
  %1389 = vrot.lane.b32.xlu0 %v1372, 96
  %v1390 = vpop.permute.xlu0 %1389
  %v1393 = vsel %vm403, %v633, %v1376
  %v1396 = vsel %vm403, %v634, %v1378
  %vm1397 = vcmask 523264
  %v1399 = vsel %vm1397, %v1393, %v1382
  %v1401 = vsel %vm1397, %v1396, %v1384
  %vm1402 = vcmask 785408
  %v1404 = vsel %vm1402, %v1399, %v1388
  %v1407 = vsel %vm1402, %v1401, %v1390
  %v1409 = vld [vmem:[%s5] sm:$0xf]
  %v1410 = vld [vmem:[%s5 + $0x4] sm:$0xf]
  %v1411 = vld [vmem:[%s5 + $0x8] sm:$0xf]
  %v1412 = vld [vmem:[%s5 + $0xc] sm:$0xf]
  %v1413 = vld [vmem:[%s5 + $0x10] sm:$0xf]
  %v1414 = vld [vmem:[%s5 + $0x14] sm:$0xf]
  %v1415 = vld [vmem:[%s5 + $0x18] sm:$0xf]
  %v1416 = vld [vmem:[%s5 + $0x1c] sm:$0xf]
  %v1417 = vld [vmem:[%s5 + $0x20] sm:$0xf]
  %v1418 = vld [vmem:[%s5 + $0x24] sm:$0xf]
  %v1419 = vld [vmem:[%s5 + $0x28] sm:$0xf]
  %v1420 = vld [vmem:[%s5 + $0x2c] sm:$0xf]
  %v1421 = vld [vmem:[%s5 + $0x30] sm:$0xf]
  %v1422 = vld [vmem:[%s5 + $0x34] sm:$0xf]
  %v1423 = vld [vmem:[%s5 + $0x38] sm:$0xf]
  %v1424 = vld [vmem:[%s5 + $0x3c] sm:$0xf]
  %v1425 = vld [vmem:[%s6] sm:$0x1]
  %v1427 = vlaneseq
  %v1428 = vshrl.u32 %v1427, 7
  %v1429 = vsub.s32 0, %v1428
  %v1430 = vrot.slane %v1425, %v1429
  %v1448 = vunpack.c.l.b16 %v1409
  %v1449 = vunpack.c.l.b16 %v1410
  %v1450 = vunpack.c.l.b16 %v1411
  %v1451 = vunpack.c.l.b16 %v1412
  %v1452 = vunpack.c.l.b16 %v1413
  %v1453 = vunpack.c.l.b16 %v1414
  %v1454 = vunpack.c.l.b16 %v1415
  %v1455 = vunpack.c.l.b16 %v1416
  %v1456 = vunpack.c.l.b16 %v1417
  %v1457 = vunpack.c.l.b16 %v1418
  %v1458 = vunpack.c.l.b16 %v1419
  %v1459 = vunpack.c.l.b16 %v1420
  %v1460 = vunpack.c.l.b16 %v1421
  %v1461 = vunpack.c.l.b16 %v1422
  %v1462 = vunpack.c.l.b16 %v1423
  %v1463 = vunpack.c.l.b16 %v1424
  %v1464 = vpack.c.b16 %v1449, %v1448
  %v1465 = vpack.c.b16 %v1451, %v1450
  %v1466 = vpack.c.b16 %v1453, %v1452
  %v1467 = vpack.c.b16 %v1455, %v1454
  %v1468 = vpack.c.b16 %v1457, %v1456
  %v1469 = vpack.c.b16 %v1459, %v1458
  %v1470 = vpack.c.b16 %v1461, %v1460
  %v1471 = vpack.c.b16 %v1463, %v1462
  %1480 = vmatprep.subr.bf16.mxu0 0
  %1481 = vmatpush1.bf16.msra.mxu0 %v1471
  %1482 = vmatprep.subr.bf16.mxu0 0
  %1483 = vmatpush1.bf16.msra.mxu0 %v1470
  %1484 = vmatprep.subr.bf16.mxu0 0
  %1485 = vmatpush1.bf16.msra.mxu0 %v1469
  %1486 = vmatprep.subr.bf16.mxu0 0
  %1487 = vmatpush1.bf16.msra.mxu0 %v1468
  %1488 = vmatprep.subr.bf16.mxu0 0
  %1489 = vmatpush1.bf16.msra.mxu0 %v1467
  %1490 = vmatprep.subr.bf16.mxu0 0
  %1491 = vmatpush1.bf16.msra.mxu0 %v1466
  %1492 = vmatprep.subr.bf16.mxu0 0
  %1493 = vmatpush1.bf16.msra.mxu0 %v1465
  %1494 = vmatprep.subr.bf16.mxu0 0
  %1495 = vmatpush1.bf16.msra.mxu0 %v1464
  %1496 = vmatprep.subr.bf16.mxu0 0
  %1497 = vmatpush2.bf16.msra.mxu0 0
  %1498 = vmatprep.subr.bf16.mxu0 0
  %1499 = vmatpush2.bf16.msra.mxu0 0
  %1500 = vmatprep.subr.bf16.mxu0 0
  %1501 = vmatpush2.bf16.msra.mxu0 0
  %1502 = vmatprep.subr.bf16.mxu0 0
  %1503 = vmatpush2.bf16.msra.mxu0 0
  %1504 = vmatprep.subr.bf16.mxu0 0
  %1505 = vmatpush2.bf16.msra.mxu0 0
  %1506 = vmatprep.subr.bf16.mxu0 0
  %1507 = vmatpush2.bf16.msra.mxu0 0
  %1508 = vmatprep.subr.bf16.mxu0 0
  %1509 = vmatpush2.bf16.msra.mxu0 0
  %1510 = vmatprep.subr.bf16.mxu0 0
  %1511 = vmatpush2.bf16.msra.mxu0 0
  %1512 = vmatprep.mubr.bf16.mxu0 0
  %1513 = vmatmul.mubr.bf16.gmra.mxu0 %v1404
  %v1514 = vpop.f32.mrf.mxu0
  %v1515 = vadd.f32 %v1430, %v1514
  %v1516 = vpop.f32.mrf.mxu0
  %v1517 = vpop.f32.mrf.mxu0
  %v1518 = vadd.f32 %v1430, %v1517
  %v1519 = vpop.f32.mrf.mxu0
  %1520 = vmatprep.mubr.bf16.mxu0 0
  %1521 = vmatmul.mubr.bf16.gmra.mxu0 %v1407
  %v1522 = vpop.f32.mrf.mxu0
  %v1523 = vadd.f32 %v1430, %v1522
  %v1524 = vpop.f32.mrf.mxu0
  %v1525 = vpop.f32.mrf.mxu0
  %v1526 = vadd.f32 %v1430, %v1525
  %v1527 = vpop.f32.mrf.mxu0
  %1528 = vdwg.mxu0
  %v1529 = vadd.f32 %v45, %v1515
  %v1530 = vadd.f32 %v46, %v1518
  %v1531 = vadd.f32 %v47, %v1523
  %v1532 = vadd.f32 %v48, %v1526
  %v1533 = vld [vmem:[%s7] sm:$0x1]
  %v1534 = vld [vmem:[%s8] sm:$0x1]
  %1535 = vadd.xlane.f32.xlu0 %v1529
  %v1536 = vpop.xlane.xlu0 %1535
  %1537 = vadd.xlane.f32.xlu0 %v1530
  %v1538 = vpop.xlane.xlu0 %1537
  %1539 = vadd.xlane.f32.xlu0 %v1531
  %v1540 = vpop.xlane.xlu0 %1539
  %1541 = vadd.xlane.f32.xlu0 %v1532
  %v1542 = vpop.xlane.xlu0 %1541
  %v1543 = vmul.f32 %v1536, %v59
  %v1544 = vmul.f32 %v1538, %v59
  %v1545 = vmul.f32 %v1540, %v59
  %v1546 = vmul.f32 %v1542, %v59
  %v1547 = vsub.f32 %v1529, %v1543
  %v1548 = vsub.f32 %v1530, %v1544
  %v1549 = vsub.f32 %v1531, %v1545
  %v1550 = vsub.f32 %v1532, %v1546
  %v1551 = vmul.f32 %v1547, %v1547
  %v1552 = vmul.f32 %v1548, %v1548
  %v1553 = vmul.f32 %v1549, %v1549
  %v1554 = vmul.f32 %v1550, %v1550
  %1555 = vadd.xlane.f32.xlu0 %v1551
  %v1556 = vpop.xlane.xlu0 %1555
  %1557 = vadd.xlane.f32.xlu0 %v1552
  %v1558 = vpop.xlane.xlu0 %1557
  %1559 = vadd.xlane.f32.xlu0 %v1553
  %v1560 = vpop.xlane.xlu0 %1559
  %1561 = vadd.xlane.f32.xlu0 %v1554
  %v1562 = vpop.xlane.xlu0 %1561
  %v1563 = vmul.f32 %v1556, %v59
  %v1564 = vmul.f32 %v1558, %v59
  %v1565 = vmul.f32 %v1560, %v59
  %v1566 = vmul.f32 %v1562, %v59
  %v1567 = vadd.f32 %v1563, 1e-05
  %v1568 = vadd.f32 %v1564, 1e-05
  %v1569 = vadd.f32 %v1565, 1e-05
  %v1570 = vadd.f32 %v1566, 1e-05
  %v1571 = vrsqrt.pop %v1567
  %v1572 = vrsqrt.pop %v1568
  %v1573 = vrsqrt.pop %v1569
  %v1574 = vrsqrt.pop %v1570
  %v1575 = vmul.f32 %v1547, %v1571
  %v1576 = vmul.f32 %v1548, %v1572
  %v1577 = vmul.f32 %v1549, %v1573
  %v1578 = vmul.f32 %v1550, %v1574
  %v1580 = vlaneseq
  %v1581 = vshrl.u32 %v1580, 7
  %v1582 = vsub.s32 0, %v1581
  %v1583 = vrot.slane %v1533, %v1582
  %v1585 = vmul.f32 %v1575, %v1583
  %v1586 = vmul.f32 %v1576, %v1583
  %v1587 = vmul.f32 %v1577, %v1583
  %v1588 = vmul.f32 %v1578, %v1583
  %v1590 = vlaneseq
  %v1591 = vshrl.u32 %v1590, 7
  %v1592 = vsub.s32 0, %v1591
  %v1593 = vrot.slane %v1534, %v1592
  %v1595 = vadd.f32 %v1585, %v1593
  %v1596 = vadd.f32 %v1586, %v1593
  %v1597 = vadd.f32 %v1587, %v1593
  %v1598 = vadd.f32 %v1588, %v1593
  %v1599 = vpack.c.bf16 %v1596, %v1595
  %v1600 = vpack.c.bf16 %v1598, %v1597
  %v1601 = vld [vmem:[%s9] sm:$0xff]
  %v1602 = vld [vmem:[%s9 + $0x8] sm:$0xff]
  %v1603 = vld [vmem:[%s9 + $0x10] sm:$0xff]
  %v1604 = vld [vmem:[%s9 + $0x18] sm:$0xff]
  %v1605 = vld [vmem:[%s9 + $0x20] sm:$0xff]
  %v1606 = vld [vmem:[%s9 + $0x28] sm:$0xff]
  %v1607 = vld [vmem:[%s9 + $0x30] sm:$0xff]
  %v1608 = vld [vmem:[%s9 + $0x38] sm:$0xff]
  %v1609 = vld [vmem:[%s9 + $0x40] sm:$0xff]
  %v1610 = vld [vmem:[%s9 + $0x48] sm:$0xff]
  %v1611 = vld [vmem:[%s9 + $0x50] sm:$0xff]
  %v1612 = vld [vmem:[%s9 + $0x58] sm:$0xff]
  %v1613 = vld [vmem:[%s9 + $0x60] sm:$0xff]
  %v1614 = vld [vmem:[%s9 + $0x68] sm:$0xff]
  %v1615 = vld [vmem:[%s9 + $0x70] sm:$0xff]
  %v1616 = vld [vmem:[%s9 + $0x78] sm:$0xff]
  %v1617 = vld [vmem:[%s9 + $0x80] sm:$0xff]
  %v1618 = vld [vmem:[%s9 + $0x88] sm:$0xff]
  %v1619 = vld [vmem:[%s9 + $0x90] sm:$0xff]
  %v1620 = vld [vmem:[%s9 + $0x98] sm:$0xff]
  %v1621 = vld [vmem:[%s9 + $0xa0] sm:$0xff]
  %v1622 = vld [vmem:[%s9 + $0xa8] sm:$0xff]
  %v1623 = vld [vmem:[%s9 + $0xb0] sm:$0xff]
  %v1624 = vld [vmem:[%s9 + $0xb8] sm:$0xff]
  %v1625 = vld [vmem:[%s9 + $0xc0] sm:$0xff]
  %v1626 = vld [vmem:[%s9 + $0xc8] sm:$0xff]
  %v1627 = vld [vmem:[%s9 + $0xd0] sm:$0xff]
  %v1628 = vld [vmem:[%s9 + $0xd8] sm:$0xff]
  %v1629 = vld [vmem:[%s9 + $0xe0] sm:$0xff]
  %v1630 = vld [vmem:[%s9 + $0xe8] sm:$0xff]
  %v1631 = vld [vmem:[%s9 + $0xf0] sm:$0xff]
  %v1632 = vld [vmem:[%s9 + $0xf8] sm:$0xff]
  %v1633 = vld [vmem:[%s10] sm:$0xf]
  %v1635 = vlaneseq
  %v1636 = vshrl.u32 %v1635, 7
  %v1637 = vsub.s32 0, %v1636
  %v1638 = vrot.slane %v1633, %v1637
  %v1639 = vlaneseq
  %v1640 = vshrl.u32 %v1639, 7
  %v1641 = vsub.s32 1, %v1640
  %v1642 = vrot.slane %v1633, %v1641
  %v1643 = vlaneseq
  %v1644 = vshrl.u32 %v1643, 7
  %v1645 = vsub.s32 2, %v1644
  %v1646 = vrot.slane %v1633, %v1645
  %v1647 = vlaneseq
  %v1648 = vshrl.u32 %v1647, 7
  %v1649 = vsub.s32 3, %v1648
  %v1650 = vrot.slane %v1633, %v1649
  %v1687 = vunpack.c.l.b16 %v1601
  %v1688 = vunpack.c.h.b16 %v1601
  %v1689 = vunpack.c.l.b16 %v1602
  %v1690 = vunpack.c.h.b16 %v1602
  %v1691 = vunpack.c.l.b16 %v1603
  %v1692 = vunpack.c.h.b16 %v1603
  %v1693 = vunpack.c.l.b16 %v1604
  %v1694 = vunpack.c.h.b16 %v1604
  %v1695 = vunpack.c.l.b16 %v1605
  %v1696 = vunpack.c.h.b16 %v1605
  %v1697 = vunpack.c.l.b16 %v1606
  %v1698 = vunpack.c.h.b16 %v1606
  %v1699 = vunpack.c.l.b16 %v1607
  %v1700 = vunpack.c.h.b16 %v1607
  %v1701 = vunpack.c.l.b16 %v1608
  %v1702 = vunpack.c.h.b16 %v1608
  %v1703 = vunpack.c.l.b16 %v1609
  %v1704 = vunpack.c.h.b16 %v1609
  %v1705 = vunpack.c.l.b16 %v1610
  %v1706 = vunpack.c.h.b16 %v1610
  %v1707 = vunpack.c.l.b16 %v1611
  %v1708 = vunpack.c.h.b16 %v1611
  %v1709 = vunpack.c.l.b16 %v1612
  %v1710 = vunpack.c.h.b16 %v1612
  %v1711 = vunpack.c.l.b16 %v1613
  %v1712 = vunpack.c.h.b16 %v1613
  %v1713 = vunpack.c.l.b16 %v1614
  %v1714 = vunpack.c.h.b16 %v1614
  %v1715 = vunpack.c.l.b16 %v1615
  %v1716 = vunpack.c.h.b16 %v1615
  %v1717 = vunpack.c.l.b16 %v1616
  %v1718 = vunpack.c.h.b16 %v1616
  %v1719 = vunpack.c.l.b16 %v1617
  %v1720 = vunpack.c.h.b16 %v1617
  %v1721 = vunpack.c.l.b16 %v1618
  %v1722 = vunpack.c.h.b16 %v1618
  %v1723 = vunpack.c.l.b16 %v1619
  %v1724 = vunpack.c.h.b16 %v1619
  %v1725 = vunpack.c.l.b16 %v1620
  %v1726 = vunpack.c.h.b16 %v1620
  %v1727 = vunpack.c.l.b16 %v1621
  %v1728 = vunpack.c.h.b16 %v1621
  %v1729 = vunpack.c.l.b16 %v1622
  %v1730 = vunpack.c.h.b16 %v1622
  %v1731 = vunpack.c.l.b16 %v1623
  %v1732 = vunpack.c.h.b16 %v1623
  %v1733 = vunpack.c.l.b16 %v1624
  %v1734 = vunpack.c.h.b16 %v1624
  %v1735 = vunpack.c.l.b16 %v1625
  %v1736 = vunpack.c.h.b16 %v1625
  %v1737 = vunpack.c.l.b16 %v1626
  %v1738 = vunpack.c.h.b16 %v1626
  %v1739 = vunpack.c.l.b16 %v1627
  %v1740 = vunpack.c.h.b16 %v1627
  %v1741 = vunpack.c.l.b16 %v1628
  %v1742 = vunpack.c.h.b16 %v1628
  %v1743 = vunpack.c.l.b16 %v1629
  %v1744 = vunpack.c.h.b16 %v1629
  %v1745 = vunpack.c.l.b16 %v1630
  %v1746 = vunpack.c.h.b16 %v1630
  %v1747 = vunpack.c.l.b16 %v1631
  %v1748 = vunpack.c.h.b16 %v1631
  %v1749 = vunpack.c.l.b16 %v1632
  %v1750 = vunpack.c.h.b16 %v1632
  %v1751 = vpack.c.b16 %v1691, %v1687
  %v1752 = vpack.c.b16 %v1692, %v1688
  %v1753 = vpack.c.b16 %v1693, %v1689
  %v1754 = vpack.c.b16 %v1694, %v1690
  %v1755 = vpack.c.b16 %v1699, %v1695
  %v1756 = vpack.c.b16 %v1700, %v1696
  %v1757 = vpack.c.b16 %v1701, %v1697
  %v1758 = vpack.c.b16 %v1702, %v1698
  %v1759 = vpack.c.b16 %v1707, %v1703
  %v1760 = vpack.c.b16 %v1708, %v1704
  %v1761 = vpack.c.b16 %v1709, %v1705
  %v1762 = vpack.c.b16 %v1710, %v1706
  %v1763 = vpack.c.b16 %v1715, %v1711
  %v1764 = vpack.c.b16 %v1716, %v1712
  %v1765 = vpack.c.b16 %v1717, %v1713
  %v1766 = vpack.c.b16 %v1718, %v1714
  %v1767 = vpack.c.b16 %v1723, %v1719
  %v1768 = vpack.c.b16 %v1724, %v1720
  %v1769 = vpack.c.b16 %v1725, %v1721
  %v1770 = vpack.c.b16 %v1726, %v1722
  %v1771 = vpack.c.b16 %v1731, %v1727
  %v1772 = vpack.c.b16 %v1732, %v1728
  %v1773 = vpack.c.b16 %v1733, %v1729
  %v1774 = vpack.c.b16 %v1734, %v1730
  %v1775 = vpack.c.b16 %v1739, %v1735
  %v1776 = vpack.c.b16 %v1740, %v1736
  %v1777 = vpack.c.b16 %v1741, %v1737
  %v1778 = vpack.c.b16 %v1742, %v1738
  %v1779 = vpack.c.b16 %v1747, %v1743
  %v1780 = vpack.c.b16 %v1748, %v1744
  %v1781 = vpack.c.b16 %v1749, %v1745
  %v1782 = vpack.c.b16 %v1750, %v1746
  %1815 = vmatprep.subr.bf16.mxu0 %v1780
  %1816 = vmatpush1.bf16.msra.mxu0 %v1779
  %1817 = vmatprep.subr.bf16.mxu0 %v1776
  %1818 = vmatpush1.bf16.msra.mxu0 %v1775
  %1819 = vmatprep.subr.bf16.mxu0 %v1772
  %1820 = vmatpush1.bf16.msra.mxu0 %v1771
  %1821 = vmatprep.subr.bf16.mxu0 %v1768
  %1822 = vmatpush1.bf16.msra.mxu0 %v1767
  %1823 = vmatprep.subr.bf16.mxu0 %v1764
  %1824 = vmatpush1.bf16.msra.mxu0 %v1763
  %1825 = vmatprep.subr.bf16.mxu0 %v1760
  %1826 = vmatpush1.bf16.msra.mxu0 %v1759
  %1827 = vmatprep.subr.bf16.mxu0 %v1756
  %1828 = vmatpush1.bf16.msra.mxu0 %v1755
  %1829 = vmatprep.subr.bf16.mxu0 %v1752
  %1830 = vmatpush1.bf16.msra.mxu0 %v1751
  %1831 = vmatprep.subr.bf16.mxu0 0
  %1832 = vmatpush2.bf16.msra.mxu0 0
  %1833 = vmatprep.subr.bf16.mxu0 0
  %1834 = vmatpush2.bf16.msra.mxu0 0
  %1835 = vmatprep.subr.bf16.mxu0 0
  %1836 = vmatpush2.bf16.msra.mxu0 0
  %1837 = vmatprep.subr.bf16.mxu0 0
  %1838 = vmatpush2.bf16.msra.mxu0 0
  %1839 = vmatprep.subr.bf16.mxu0 0
  %1840 = vmatpush2.bf16.msra.mxu0 0
  %1841 = vmatprep.subr.bf16.mxu0 0
  %1842 = vmatpush2.bf16.msra.mxu0 0
  %1843 = vmatprep.subr.bf16.mxu0 0
  %1844 = vmatpush2.bf16.msra.mxu0 0
  %1845 = vmatprep.subr.bf16.mxu0 0
  %1846 = vmatpush2.bf16.msra.mxu0 0
  %1847 = vmatprep.mubr.bf16.mxu0 0
  %1848 = vmatmul.mubr.bf16.gmra.mxu0 %v1599
  %v1849 = vpop.f32.mrf.mxu0
  %v1850 = vadd.f32 %v1638, %v1849
  %v1851 = vpop.f32.mrf.mxu0
  %v1852 = vadd.f32 %v1642, %v1851
  %v1853 = vpop.f32.mrf.mxu0
  %v1854 = vadd.f32 %v1638, %v1853
  %v1855 = vpop.f32.mrf.mxu0
  %v1856 = vadd.f32 %v1642, %v1855
  %1857 = vmatprep.mubr.bf16.mxu0 0
  %1858 = vmatmul.mubr.bf16.gmra.mxu0 %v1600
  %v1859 = vpop.f32.mrf.mxu0
  %v1860 = vadd.f32 %v1638, %v1859
  %v1861 = vpop.f32.mrf.mxu0
  %v1862 = vadd.f32 %v1642, %v1861
  %v1863 = vpop.f32.mrf.mxu0
  %v1864 = vadd.f32 %v1638, %v1863
  %v1865 = vpop.f32.mrf.mxu0
  %v1866 = vadd.f32 %v1642, %v1865
  %1867 = vdwg.mxu0
  %1868 = vmatprep.subr.bf16.mxu0 %v1782
  %1869 = vmatpush1.bf16.msra.mxu0 %v1781
  %1870 = vmatprep.subr.bf16.mxu0 %v1778
  %1871 = vmatpush1.bf16.msra.mxu0 %v1777
  %1872 = vmatprep.subr.bf16.mxu0 %v1774
  %1873 = vmatpush1.bf16.msra.mxu0 %v1773
  %1874 = vmatprep.subr.bf16.mxu0 %v1770
  %1875 = vmatpush1.bf16.msra.mxu0 %v1769
  %1876 = vmatprep.subr.bf16.mxu0 %v1766
  %1877 = vmatpush1.bf16.msra.mxu0 %v1765
  %1878 = vmatprep.subr.bf16.mxu0 %v1762
  %1879 = vmatpush1.bf16.msra.mxu0 %v1761
  %1880 = vmatprep.subr.bf16.mxu0 %v1758
  %1881 = vmatpush1.bf16.msra.mxu0 %v1757
  %1882 = vmatprep.subr.bf16.mxu0 %v1754
  %1883 = vmatpush1.bf16.msra.mxu0 %v1753
  %1884 = vmatprep.subr.bf16.mxu0 0
  %1885 = vmatpush2.bf16.msra.mxu0 0
  %1886 = vmatprep.subr.bf16.mxu0 0
  %1887 = vmatpush2.bf16.msra.mxu0 0
  %1888 = vmatprep.subr.bf16.mxu0 0
  %1889 = vmatpush2.bf16.msra.mxu0 0
  %1890 = vmatprep.subr.bf16.mxu0 0
  %1891 = vmatpush2.bf16.msra.mxu0 0
  %1892 = vmatprep.subr.bf16.mxu0 0
  %1893 = vmatpush2.bf16.msra.mxu0 0
  %1894 = vmatprep.subr.bf16.mxu0 0
  %1895 = vmatpush2.bf16.msra.mxu0 0
  %1896 = vmatprep.subr.bf16.mxu0 0
  %1897 = vmatpush2.bf16.msra.mxu0 0
  %1898 = vmatprep.subr.bf16.mxu0 0
  %1899 = vmatpush2.bf16.msra.mxu0 0
  %1900 = vmatprep.mubr.bf16.mxu0 0
  %1901 = vmatmul.mubr.bf16.gmra.mxu0 %v1599
  %v1902 = vpop.f32.mrf.mxu0
  %v1903 = vadd.f32 %v1646, %v1902
  %v1904 = vpop.f32.mrf.mxu0
  %v1905 = vadd.f32 %v1650, %v1904
  %v1906 = vpop.f32.mrf.mxu0
  %v1907 = vadd.f32 %v1646, %v1906
  %v1908 = vpop.f32.mrf.mxu0
  %v1909 = vadd.f32 %v1650, %v1908
  %1910 = vmatprep.mubr.bf16.mxu0 0
  %1911 = vmatmul.mubr.bf16.gmra.mxu0 %v1600
  %v1912 = vpop.f32.mrf.mxu0
  %v1913 = vadd.f32 %v1646, %v1912
  %v1914 = vpop.f32.mrf.mxu0
  %v1915 = vadd.f32 %v1650, %v1914
  %v1916 = vpop.f32.mrf.mxu0
  %v1917 = vadd.f32 %v1646, %v1916
  %v1918 = vpop.f32.mrf.mxu0
  %v1919 = vadd.f32 %v1650, %v1918
  %1920 = vdwg.mxu0
  %v1921 = vmul.f32 %v1850, 0.5
  %v1922 = vmul.f32 %v1852, 0.5
  %v1923 = vmul.f32 %v1903, 0.5
  %v1924 = vmul.f32 %v1905, 0.5
  %v1925 = vmul.f32 %v1854, 0.5
  %v1926 = vmul.f32 %v1856, 0.5
  %v1927 = vmul.f32 %v1907, 0.5
  %v1928 = vmul.f32 %v1909, 0.5
  %v1929 = vmul.f32 %v1860, 0.5
  %v1930 = vmul.f32 %v1862, 0.5
  %v1931 = vmul.f32 %v1913, 0.5
  %v1932 = vmul.f32 %v1915, 0.5
  %v1933 = vmul.f32 %v1864, 0.5
  %v1934 = vmul.f32 %v1866, 0.5
  %v1935 = vmul.f32 %v1917, 0.5
  %v1936 = vmul.f32 %v1919, 0.5
  %v1937 = vmul.f32 %v1850, 0.044715
  %v1938 = vmul.f32 %v1852, 0.044715
  %v1939 = vmul.f32 %v1903, 0.044715
  %v1940 = vmul.f32 %v1905, 0.044715
  %v1941 = vmul.f32 %v1854, 0.044715
  %v1942 = vmul.f32 %v1856, 0.044715
  %v1943 = vmul.f32 %v1907, 0.044715
  %v1944 = vmul.f32 %v1909, 0.044715
  %v1945 = vmul.f32 %v1860, 0.044715
  %v1946 = vmul.f32 %v1862, 0.044715
  %v1947 = vmul.f32 %v1913, 0.044715
  %v1948 = vmul.f32 %v1915, 0.044715
  %v1949 = vmul.f32 %v1864, 0.044715
  %v1950 = vmul.f32 %v1866, 0.044715
  %v1951 = vmul.f32 %v1917, 0.044715
  %v1952 = vmul.f32 %v1919, 0.044715
  %v1953 = vmul.f32 %v1937, %v1850
  %v1954 = vmul.f32 %v1938, %v1852
  %v1955 = vmul.f32 %v1939, %v1903
  %v1956 = vmul.f32 %v1940, %v1905
  %v1957 = vmul.f32 %v1941, %v1854
  %v1958 = vmul.f32 %v1942, %v1856
  %v1959 = vmul.f32 %v1943, %v1907
  %v1960 = vmul.f32 %v1944, %v1909
  %v1961 = vmul.f32 %v1945, %v1860
  %v1962 = vmul.f32 %v1946, %v1862
  %v1963 = vmul.f32 %v1947, %v1913
  %v1964 = vmul.f32 %v1948, %v1915
  %v1965 = vmul.f32 %v1949, %v1864
  %v1966 = vmul.f32 %v1950, %v1866
  %v1967 = vmul.f32 %v1951, %v1917
  %v1968 = vmul.f32 %v1952, %v1919
  %v1969 = vmul.f32 %v1953, %v1850
  %v1970 = vmul.f32 %v1954, %v1852
  %v1971 = vmul.f32 %v1955, %v1903
  %v1972 = vmul.f32 %v1956, %v1905
  %v1973 = vmul.f32 %v1957, %v1854
  %v1974 = vmul.f32 %v1958, %v1856
  %v1975 = vmul.f32 %v1959, %v1907
  %v1976 = vmul.f32 %v1960, %v1909
  %v1977 = vmul.f32 %v1961, %v1860
  %v1978 = vmul.f32 %v1962, %v1862
  %v1979 = vmul.f32 %v1963, %v1913
  %v1980 = vmul.f32 %v1964, %v1915
  %v1981 = vmul.f32 %v1965, %v1864
  %v1982 = vmul.f32 %v1966, %v1866
  %v1983 = vmul.f32 %v1967, %v1917
  %v1984 = vmul.f32 %v1968, %v1919
  %v1985 = vadd.f32 %v1850, %v1969
  %v1986 = vadd.f32 %v1852, %v1970
  %v1987 = vadd.f32 %v1903, %v1971
  %v1988 = vadd.f32 %v1905, %v1972
  %v1989 = vadd.f32 %v1854, %v1973
  %v1990 = vadd.f32 %v1856, %v1974
  %v1991 = vadd.f32 %v1907, %v1975
  %v1992 = vadd.f32 %v1909, %v1976
  %v1993 = vadd.f32 %v1860, %v1977
  %v1994 = vadd.f32 %v1862, %v1978
  %v1995 = vadd.f32 %v1913, %v1979
  %v1996 = vadd.f32 %v1915, %v1980
  %v1997 = vadd.f32 %v1864, %v1981
  %v1998 = vadd.f32 %v1866, %v1982
  %v1999 = vadd.f32 %v1917, %v1983
  %v2000 = vadd.f32 %v1919, %v1984
  %v2001 = vmul.f32 %v1985, 0.7978846
  %v2002 = vmul.f32 %v1986, 0.7978846
  %v2003 = vmul.f32 %v1987, 0.7978846
  %v2004 = vmul.f32 %v1988, 0.7978846
  %v2005 = vmul.f32 %v1989, 0.7978846
  %v2006 = vmul.f32 %v1990, 0.7978846
  %v2007 = vmul.f32 %v1991, 0.7978846
  %v2008 = vmul.f32 %v1992, 0.7978846
  %v2009 = vmul.f32 %v1993, 0.7978846
  %v2010 = vmul.f32 %v1994, 0.7978846
  %v2011 = vmul.f32 %v1995, 0.7978846
  %v2012 = vmul.f32 %v1996, 0.7978846
  %v2013 = vmul.f32 %v1997, 0.7978846
  %v2014 = vmul.f32 %v1998, 0.7978846
  %v2015 = vmul.f32 %v1999, 0.7978846
  %v2016 = vmul.f32 %v2000, 0.7978846
  %v2017 = vtanh.pop %v2001
  %v2018 = vtanh.pop %v2002
  %v2019 = vtanh.pop %v2003
  %v2020 = vtanh.pop %v2004
  %v2021 = vtanh.pop %v2005
  %v2022 = vtanh.pop %v2006
  %v2023 = vtanh.pop %v2007
  %v2024 = vtanh.pop %v2008
  %v2025 = vtanh.pop %v2009
  %v2026 = vtanh.pop %v2010
  %v2027 = vtanh.pop %v2011
  %v2028 = vtanh.pop %v2012
  %v2029 = vtanh.pop %v2013
  %v2030 = vtanh.pop %v2014
  %v2031 = vtanh.pop %v2015
  %v2032 = vtanh.pop %v2016
  %v2033 = vadd.f32 %v2017, 1.0
  %v2034 = vadd.f32 %v2018, 1.0
  %v2035 = vadd.f32 %v2019, 1.0
  %v2036 = vadd.f32 %v2020, 1.0
  %v2037 = vadd.f32 %v2021, 1.0
  %v2038 = vadd.f32 %v2022, 1.0
  %v2039 = vadd.f32 %v2023, 1.0
  %v2040 = vadd.f32 %v2024, 1.0
  %v2041 = vadd.f32 %v2025, 1.0
  %v2042 = vadd.f32 %v2026, 1.0
  %v2043 = vadd.f32 %v2027, 1.0
  %v2044 = vadd.f32 %v2028, 1.0
  %v2045 = vadd.f32 %v2029, 1.0
  %v2046 = vadd.f32 %v2030, 1.0
  %v2047 = vadd.f32 %v2031, 1.0
  %v2048 = vadd.f32 %v2032, 1.0
  %v2049 = vmul.f32 %v1921, %v2033
  %v2050 = vmul.f32 %v1922, %v2034
  %v2051 = vmul.f32 %v1923, %v2035
  %v2052 = vmul.f32 %v1924, %v2036
  %v2053 = vmul.f32 %v1925, %v2037
  %v2054 = vmul.f32 %v1926, %v2038
  %v2055 = vmul.f32 %v1927, %v2039
  %v2056 = vmul.f32 %v1928, %v2040
  %v2057 = vmul.f32 %v1929, %v2041
  %v2058 = vmul.f32 %v1930, %v2042
  %v2059 = vmul.f32 %v1931, %v2043
  %v2060 = vmul.f32 %v1932, %v2044
  %v2061 = vmul.f32 %v1933, %v2045
  %v2062 = vmul.f32 %v1934, %v2046
  %v2063 = vmul.f32 %v1935, %v2047
  %v2064 = vmul.f32 %v1936, %v2048
  %v2065 = vpack.c.bf16 %v2053, %v2049
  %v2066 = vpack.c.bf16 %v2054, %v2050
  %v2067 = vpack.c.bf16 %v2055, %v2051
  %v2068 = vpack.c.bf16 %v2056, %v2052
  %v2069 = vpack.c.bf16 %v2061, %v2057
  %v2070 = vpack.c.bf16 %v2062, %v2058
  %v2071 = vpack.c.bf16 %v2063, %v2059
  %v2072 = vpack.c.bf16 %v2064, %v2060
  %v2073 = vld [vmem:[%s11] sm:$0xf]
  %v2074 = vld [vmem:[%s11 + $0x4] sm:$0xf]
  %v2075 = vld [vmem:[%s11 + $0x8] sm:$0xf]
  %v2076 = vld [vmem:[%s11 + $0xc] sm:$0xf]
  %v2077 = vld [vmem:[%s11 + $0x10] sm:$0xf]
  %v2078 = vld [vmem:[%s11 + $0x14] sm:$0xf]
  %v2079 = vld [vmem:[%s11 + $0x18] sm:$0xf]
  %v2080 = vld [vmem:[%s11 + $0x1c] sm:$0xf]
  %v2081 = vld [vmem:[%s11 + $0x20] sm:$0xf]
  %v2082 = vld [vmem:[%s11 + $0x24] sm:$0xf]
  %v2083 = vld [vmem:[%s11 + $0x28] sm:$0xf]
  %v2084 = vld [vmem:[%s11 + $0x2c] sm:$0xf]
  %v2085 = vld [vmem:[%s11 + $0x30] sm:$0xf]
  %v2086 = vld [vmem:[%s11 + $0x34] sm:$0xf]
  %v2087 = vld [vmem:[%s11 + $0x38] sm:$0xf]
  %v2088 = vld [vmem:[%s11 + $0x3c] sm:$0xf]
  %v2089 = vld [vmem:[%s11 + $0x40] sm:$0xf]
  %v2090 = vld [vmem:[%s11 + $0x44] sm:$0xf]
  %v2091 = vld [vmem:[%s11 + $0x48] sm:$0xf]
  %v2092 = vld [vmem:[%s11 + $0x4c] sm:$0xf]
  %v2093 = vld [vmem:[%s11 + $0x50] sm:$0xf]
  %v2094 = vld [vmem:[%s11 + $0x54] sm:$0xf]
  %v2095 = vld [vmem:[%s11 + $0x58] sm:$0xf]
  %v2096 = vld [vmem:[%s11 + $0x5c] sm:$0xf]
  %v2097 = vld [vmem:[%s11 + $0x60] sm:$0xf]
  %v2098 = vld [vmem:[%s11 + $0x64] sm:$0xf]
  %v2099 = vld [vmem:[%s11 + $0x68] sm:$0xf]
  %v2100 = vld [vmem:[%s11 + $0x6c] sm:$0xf]
  %v2101 = vld [vmem:[%s11 + $0x70] sm:$0xf]
  %v2102 = vld [vmem:[%s11 + $0x74] sm:$0xf]
  %v2103 = vld [vmem:[%s11 + $0x78] sm:$0xf]
  %v2104 = vld [vmem:[%s11 + $0x7c] sm:$0xf]
  %v2105 = vld [vmem:[%s11 + $0x80] sm:$0xf]
  %v2106 = vld [vmem:[%s11 + $0x84] sm:$0xf]
  %v2107 = vld [vmem:[%s11 + $0x88] sm:$0xf]
  %v2108 = vld [vmem:[%s11 + $0x8c] sm:$0xf]
  %v2109 = vld [vmem:[%s11 + $0x90] sm:$0xf]
  %v2110 = vld [vmem:[%s11 + $0x94] sm:$0xf]
  %v2111 = vld [vmem:[%s11 + $0x98] sm:$0xf]
  %v2112 = vld [vmem:[%s11 + $0x9c] sm:$0xf]
  %v2113 = vld [vmem:[%s11 + $0xa0] sm:$0xf]
  %v2114 = vld [vmem:[%s11 + $0xa4] sm:$0xf]
  %v2115 = vld [vmem:[%s11 + $0xa8] sm:$0xf]
  %v2116 = vld [vmem:[%s11 + $0xac] sm:$0xf]
  %v2117 = vld [vmem:[%s11 + $0xb0] sm:$0xf]
  %v2118 = vld [vmem:[%s11 + $0xb4] sm:$0xf]
  %v2119 = vld [vmem:[%s11 + $0xb8] sm:$0xf]
  %v2120 = vld [vmem:[%s11 + $0xbc] sm:$0xf]
  %v2121 = vld [vmem:[%s11 + $0xc0] sm:$0xf]
  %v2122 = vld [vmem:[%s11 + $0xc4] sm:$0xf]
  %v2123 = vld [vmem:[%s11 + $0xc8] sm:$0xf]
  %v2124 = vld [vmem:[%s11 + $0xcc] sm:$0xf]
  %v2125 = vld [vmem:[%s11 + $0xd0] sm:$0xf]
  %v2126 = vld [vmem:[%s11 + $0xd4] sm:$0xf]
  %v2127 = vld [vmem:[%s11 + $0xd8] sm:$0xf]
  %v2128 = vld [vmem:[%s11 + $0xdc] sm:$0xf]
  %v2129 = vld [vmem:[%s11 + $0xe0] sm:$0xf]
  %v2130 = vld [vmem:[%s11 + $0xe4] sm:$0xf]
  %v2131 = vld [vmem:[%s11 + $0xe8] sm:$0xf]
  %v2132 = vld [vmem:[%s11 + $0xec] sm:$0xf]
  %v2133 = vld [vmem:[%s11 + $0xf0] sm:$0xf]
  %v2134 = vld [vmem:[%s11 + $0xf4] sm:$0xf]
  %v2135 = vld [vmem:[%s11 + $0xf8] sm:$0xf]
  %v2136 = vld [vmem:[%s11 + $0xfc] sm:$0xf]
  %v2137 = vld [vmem:[%s12] sm:$0x1]
  %v2139 = vlaneseq
  %v2140 = vshrl.u32 %v2139, 7
  %v2141 = vsub.s32 0, %v2140
  %v2142 = vrot.slane %v2137, %v2141
  %v2208 = vunpack.c.l.b16 %v2073
  %v2209 = vunpack.c.l.b16 %v2074
  %v2210 = vunpack.c.l.b16 %v2075
  %v2211 = vunpack.c.l.b16 %v2076
  %v2212 = vunpack.c.l.b16 %v2077
  %v2213 = vunpack.c.l.b16 %v2078
  %v2214 = vunpack.c.l.b16 %v2079
  %v2215 = vunpack.c.l.b16 %v2080
  %v2216 = vunpack.c.l.b16 %v2081
  %v2217 = vunpack.c.l.b16 %v2082
  %v2218 = vunpack.c.l.b16 %v2083
  %v2219 = vunpack.c.l.b16 %v2084
  %v2220 = vunpack.c.l.b16 %v2085
  %v2221 = vunpack.c.l.b16 %v2086
  %v2222 = vunpack.c.l.b16 %v2087
  %v2223 = vunpack.c.l.b16 %v2088
  %v2224 = vunpack.c.l.b16 %v2089
  %v2225 = vunpack.c.l.b16 %v2090
  %v2226 = vunpack.c.l.b16 %v2091
  %v2227 = vunpack.c.l.b16 %v2092
  %v2228 = vunpack.c.l.b16 %v2093
  %v2229 = vunpack.c.l.b16 %v2094
  %v2230 = vunpack.c.l.b16 %v2095
  %v2231 = vunpack.c.l.b16 %v2096
  %v2232 = vunpack.c.l.b16 %v2097
  %v2233 = vunpack.c.l.b16 %v2098
  %v2234 = vunpack.c.l.b16 %v2099
  %v2235 = vunpack.c.l.b16 %v2100
  %v2236 = vunpack.c.l.b16 %v2101
  %v2237 = vunpack.c.l.b16 %v2102
  %v2238 = vunpack.c.l.b16 %v2103
  %v2239 = vunpack.c.l.b16 %v2104
  %v2240 = vunpack.c.l.b16 %v2105
  %v2241 = vunpack.c.l.b16 %v2106
  %v2242 = vunpack.c.l.b16 %v2107
  %v2243 = vunpack.c.l.b16 %v2108
  %v2244 = vunpack.c.l.b16 %v2109
  %v2245 = vunpack.c.l.b16 %v2110
  %v2246 = vunpack.c.l.b16 %v2111
  %v2247 = vunpack.c.l.b16 %v2112
  %v2248 = vunpack.c.l.b16 %v2113
  %v2249 = vunpack.c.l.b16 %v2114
  %v2250 = vunpack.c.l.b16 %v2115
  %v2251 = vunpack.c.l.b16 %v2116
  %v2252 = vunpack.c.l.b16 %v2117
  %v2253 = vunpack.c.l.b16 %v2118
  %v2254 = vunpack.c.l.b16 %v2119
  %v2255 = vunpack.c.l.b16 %v2120
  %v2256 = vunpack.c.l.b16 %v2121
  %v2257 = vunpack.c.l.b16 %v2122
  %v2258 = vunpack.c.l.b16 %v2123
  %v2259 = vunpack.c.l.b16 %v2124
  %v2260 = vunpack.c.l.b16 %v2125
  %v2261 = vunpack.c.l.b16 %v2126
  %v2262 = vunpack.c.l.b16 %v2127
  %v2263 = vunpack.c.l.b16 %v2128
  %v2264 = vunpack.c.l.b16 %v2129
  %v2265 = vunpack.c.l.b16 %v2130
  %v2266 = vunpack.c.l.b16 %v2131
  %v2267 = vunpack.c.l.b16 %v2132
  %v2268 = vunpack.c.l.b16 %v2133
  %v2269 = vunpack.c.l.b16 %v2134
  %v2270 = vunpack.c.l.b16 %v2135
  %v2271 = vunpack.c.l.b16 %v2136
  %v2272 = vpack.c.b16 %v2209, %v2208
  %v2273 = vpack.c.b16 %v2211, %v2210
  %v2274 = vpack.c.b16 %v2213, %v2212
  %v2275 = vpack.c.b16 %v2215, %v2214
  %v2276 = vpack.c.b16 %v2217, %v2216
  %v2277 = vpack.c.b16 %v2219, %v2218
  %v2278 = vpack.c.b16 %v2221, %v2220
  %v2279 = vpack.c.b16 %v2223, %v2222
  %v2280 = vpack.c.b16 %v2225, %v2224
  %v2281 = vpack.c.b16 %v2227, %v2226
  %v2282 = vpack.c.b16 %v2229, %v2228
  %v2283 = vpack.c.b16 %v2231, %v2230
  %v2284 = vpack.c.b16 %v2233, %v2232
  %v2285 = vpack.c.b16 %v2235, %v2234
  %v2286 = vpack.c.b16 %v2237, %v2236
  %v2287 = vpack.c.b16 %v2239, %v2238
  %v2288 = vpack.c.b16 %v2241, %v2240
  %v2289 = vpack.c.b16 %v2243, %v2242
  %v2290 = vpack.c.b16 %v2245, %v2244
  %v2291 = vpack.c.b16 %v2247, %v2246
  %v2292 = vpack.c.b16 %v2249, %v2248
  %v2293 = vpack.c.b16 %v2251, %v2250
  %v2294 = vpack.c.b16 %v2253, %v2252
  %v2295 = vpack.c.b16 %v2255, %v2254
  %v2296 = vpack.c.b16 %v2257, %v2256
  %v2297 = vpack.c.b16 %v2259, %v2258
  %v2298 = vpack.c.b16 %v2261, %v2260
  %v2299 = vpack.c.b16 %v2263, %v2262
  %v2300 = vpack.c.b16 %v2265, %v2264
  %v2301 = vpack.c.b16 %v2267, %v2266
  %v2302 = vpack.c.b16 %v2269, %v2268
  %v2303 = vpack.c.b16 %v2271, %v2270
  %2336 = vmatprep.subr.bf16.mxu0 0
  %2337 = vmatpush1.bf16.msra.mxu0 %v2279
  %2338 = vmatprep.subr.bf16.mxu0 0
  %2339 = vmatpush1.bf16.msra.mxu0 %v2278
  %2340 = vmatprep.subr.bf16.mxu0 0
  %2341 = vmatpush1.bf16.msra.mxu0 %v2277
  %2342 = vmatprep.subr.bf16.mxu0 0
  %2343 = vmatpush1.bf16.msra.mxu0 %v2276
  %2344 = vmatprep.subr.bf16.mxu0 0
  %2345 = vmatpush1.bf16.msra.mxu0 %v2275
  %2346 = vmatprep.subr.bf16.mxu0 0
  %2347 = vmatpush1.bf16.msra.mxu0 %v2274
  %2348 = vmatprep.subr.bf16.mxu0 0
  %2349 = vmatpush1.bf16.msra.mxu0 %v2273
  %2350 = vmatprep.subr.bf16.mxu0 0
  %2351 = vmatpush1.bf16.msra.mxu0 %v2272
  %2352 = vmatprep.subr.bf16.mxu0 0
  %2353 = vmatpush2.bf16.msra.mxu0 %v2287
  %2354 = vmatprep.subr.bf16.mxu0 0
  %2355 = vmatpush2.bf16.msra.mxu0 %v2286
  %2356 = vmatprep.subr.bf16.mxu0 0
  %2357 = vmatpush2.bf16.msra.mxu0 %v2285
  %2358 = vmatprep.subr.bf16.mxu0 0
  %2359 = vmatpush2.bf16.msra.mxu0 %v2284
  %2360 = vmatprep.subr.bf16.mxu0 0
  %2361 = vmatpush2.bf16.msra.mxu0 %v2283
  %2362 = vmatprep.subr.bf16.mxu0 0
  %2363 = vmatpush2.bf16.msra.mxu0 %v2282
  %2364 = vmatprep.subr.bf16.mxu0 0
  %2365 = vmatpush2.bf16.msra.mxu0 %v2281
  %2366 = vmatprep.subr.bf16.mxu0 0
  %2367 = vmatpush2.bf16.msra.mxu0 %v2280
  %2368 = vmatprep.mubr.bf16.mxu0 %v2066
  %2369 = vmatmul.mubr.bf16.gmra.mxu0 %v2065
  %v2370 = vpop.f32.mrf.mxu0
  %v2371 = vadd.f32 %v2142, %v2370
  %v2372 = vpop.f32.mrf.mxu0
  %v2373 = vpop.f32.mrf.mxu0
  %v2374 = vadd.f32 %v2142, %v2373
  %v2375 = vpop.f32.mrf.mxu0
  %2376 = vmatprep.mubr.bf16.mxu0 %v2070
  %2377 = vmatmul.mubr.bf16.gmra.mxu0 %v2069
  %v2378 = vpop.f32.mrf.mxu0
  %v2379 = vadd.f32 %v2142, %v2378
  %v2380 = vpop.f32.mrf.mxu0
  %v2381 = vpop.f32.mrf.mxu0
  %v2382 = vadd.f32 %v2142, %v2381
  %v2383 = vpop.f32.mrf.mxu0
  %2384 = vdwg.mxu0
  %2385 = vmatprep.subr.bf16.mxu0 0
  %2386 = vmatpush1.bf16.msra.mxu0 %v2295
  %2387 = vmatprep.subr.bf16.mxu0 0
  %2388 = vmatpush1.bf16.msra.mxu0 %v2294
  %2389 = vmatprep.subr.bf16.mxu0 0
  %2390 = vmatpush1.bf16.msra.mxu0 %v2293
  %2391 = vmatprep.subr.bf16.mxu0 0
  %2392 = vmatpush1.bf16.msra.mxu0 %v2292
  %2393 = vmatprep.subr.bf16.mxu0 0
  %2394 = vmatpush1.bf16.msra.mxu0 %v2291
  %2395 = vmatprep.subr.bf16.mxu0 0
  %2396 = vmatpush1.bf16.msra.mxu0 %v2290
  %2397 = vmatprep.subr.bf16.mxu0 0
  %2398 = vmatpush1.bf16.msra.mxu0 %v2289
  %2399 = vmatprep.subr.bf16.mxu0 0
  %2400 = vmatpush1.bf16.msra.mxu0 %v2288
  %2401 = vmatprep.subr.bf16.mxu0 0
  %2402 = vmatpush2.bf16.msra.mxu0 %v2303
  %2403 = vmatprep.subr.bf16.mxu0 0
  %2404 = vmatpush2.bf16.msra.mxu0 %v2302
  %2405 = vmatprep.subr.bf16.mxu0 0
  %2406 = vmatpush2.bf16.msra.mxu0 %v2301
  %2407 = vmatprep.subr.bf16.mxu0 0
  %2408 = vmatpush2.bf16.msra.mxu0 %v2300
  %2409 = vmatprep.subr.bf16.mxu0 0
  %2410 = vmatpush2.bf16.msra.mxu0 %v2299
  %2411 = vmatprep.subr.bf16.mxu0 0
  %2412 = vmatpush2.bf16.msra.mxu0 %v2298
  %2413 = vmatprep.subr.bf16.mxu0 0
  %2414 = vmatpush2.bf16.msra.mxu0 %v2297
  %2415 = vmatprep.subr.bf16.mxu0 0
  %2416 = vmatpush2.bf16.msra.mxu0 %v2296
  %2417 = vmatprep.mubr.bf16.mxu0 %v2068
  %2418 = vmatmul.mubr.bf16.gmra.mxu0 %v2067
  %v2419 = vpop.f32.mrf.mxu0
  %v2420 = vadd.f32 %v2371, %v2419
  %v2421 = vpop.f32.mrf.mxu0
  %v2422 = vpop.f32.mrf.mxu0
  %v2423 = vadd.f32 %v2374, %v2422
  %v2424 = vpop.f32.mrf.mxu0
  %2425 = vmatprep.mubr.bf16.mxu0 %v2072
  %2426 = vmatmul.mubr.bf16.gmra.mxu0 %v2071
  %v2427 = vpop.f32.mrf.mxu0
  %v2428 = vadd.f32 %v2379, %v2427
  %v2429 = vpop.f32.mrf.mxu0
  %v2430 = vpop.f32.mrf.mxu0
  %v2431 = vadd.f32 %v2382, %v2430
  %v2432 = vpop.f32.mrf.mxu0
  %2433 = vdwg.mxu0
  %v2434 = vadd.f32 %v1529, %v2420
  %v2435 = vadd.f32 %v1530, %v2423
  %v2436 = vadd.f32 %v1531, %v2428
  %v2437 = vadd.f32 %v1532, %v2431
  %2438 = vst [vmem:[%s13] sm:$0xff] %v2434
  %2439 = vst [vmem:[%s13 + $0x8] sm:$0xff] %v2435
  %2440 = vst [vmem:[%s13 + $0x10] sm:$0xff] %v2436
  %2441 = vst [vmem:[%s13 + $0x18] sm:$0xff] %v2437
  // Predicated region
  $region54: #{_lambda_.11} parent=0 // pred_check
    _
  $region55: #{_lambda_.11} parent=0 // pred_check_branch
    %2443 = sbr.rel (0) target = $region57
  $region56: #{_lambda_.11} parent=0 // pred_region
    _
  $region57: #{_lambda_.11} parent=0 // pred_fallthru
    _
  // Predicated region
  $region58: #{_lambda_.11} parent=0 // pred_check
    _
  $region59: #{_lambda_.11} parent=0 // pred_check_branch
    %2445 = sbr.rel (0) target = $region61
  $region60: #{_lambda_.11} parent=0 // pred_region
    _
  $region61: #{_lambda_.11} parent=0 // pred_fallthru
    _

</llo_original>
